<compile_context>
chip_gen: v5e
topology: v5e:2x2
jax: 0.10.0
libtpu: 0.0.40
codegen_flags: <defaults>
</compile_context>

<pallas_src>
import functools

import jax
import jax.numpy as jnp
from jax.experimental import pallas as pl
from jax.experimental.pallas import tpu as pltpu

# ---- model constants (from the PyTorch module) ------------------------------
H = 43          # GatedGraphConv out_channels
NUM_MP = 5      # GatedGraphConv num_layers
FF = 392        # ff1/ff2/ff3 width
OUT = 138       # pred_layer width

# ---- padded (TPU-friendly) sizes --------------------------------------------
HP = 128        # padded hidden dim (lane-aligned)
FP = 512        # padded FF dim
OP = 256        # padded output dim


def _round_up(n, m):
    return ((n + m - 1) // m) * m


# -----------------------------------------------------------------------------
# Pallas kernel: 5x (linear msg -> adjacency scatter-add -> fused-GRU update),
# then global_add_pool (pool matmul), 3x (Linear+ReLU), Linear+Sigmoid.
# Dropout (p=0.12) is inference-mode (training=False) => identity.
# -----------------------------------------------------------------------------
def _gnn_kernel(x_ref, adj_ref, wmsg_ref, wgru_ref, bgru_ref,
                pool_ref, w1_ref, b1_ref, w2_ref, b2_ref, w3_ref, b3_ref,
                wp_ref, bp_ref, out_ref):
    x = x_ref[...]            # [Np, HP]     f32 GRU state (padded lanes are 0)
    adj = adj_ref[...]        # [Np, Np]     bf16, adj[dst, src] = #edges src->dst
    wgru = wgru_ref[...]      # [2*HP, 4*HP] bf16 fused GRU weights
    bgru = bgru_ref[...]      # [1, 4*HP]    f32 fused GRU bias

    # ---- GatedGraphConv: 5 rounds of message passing + GRU update ----
    for layer in range(NUM_MP):
        xb = x.astype(jnp.bfloat16)
        # message: per-layer linear, then aggr='add' via dense adjacency matmul
        m = jnp.dot(xb, wmsg_ref[layer], preferred_element_type=jnp.float32)
        m = jnp.dot(adj, m.astype(jnp.bfloat16),
                    preferred_element_type=jnp.float32)
        # fused GRU gates: one [Np, 2*HP] @ [2*HP, 4*HP] MXU matmul producing
        # column blocks [r_sum | z_sum | gi_n | gh_n]  (128-aligned slices).
        cat = jnp.concatenate([m.astype(jnp.bfloat16), xb], axis=-1)
        g = jnp.dot(cat, wgru, preferred_element_type=jnp.float32) + bgru
        r = jax.nn.sigmoid(g[:, 0:HP])
        z = jax.nn.sigmoid(g[:, HP:2 * HP])
        n = jnp.tanh(g[:, 2 * HP:3 * HP] + r * g[:, 3 * HP:4 * HP])
        x = (1.0 - z) * n + z * x              # f32 recurrence

    # ---- global_add_pool: [Gp, Np] @ [Np, HP] -> [Gp, HP] ----
    pooled = jnp.dot(pool_ref[...], x.astype(jnp.bfloat16),
                     preferred_element_type=jnp.float32)

    # ---- dense head (bf16 weights, f32 accumulate / activations) ----
    h = jnp.maximum(
        jnp.dot(pooled.astype(jnp.bfloat16), w1_ref[...],
                preferred_element_type=jnp.float32) + b1_ref[...], 0.0)
    # TODO(synk): F.dropout(p=0.12) is identity at inference (training=False).
    h = jnp.maximum(
        jnp.dot(h.astype(jnp.bfloat16), w2_ref[...],
                preferred_element_type=jnp.float32) + b2_ref[...], 0.0)
    h = jnp.maximum(
        jnp.dot(h.astype(jnp.bfloat16), w3_ref[...],
                preferred_element_type=jnp.float32) + b3_ref[...], 0.0)
    logits = (jnp.dot(h.astype(jnp.bfloat16), wp_ref[...],
                      preferred_element_type=jnp.float32) + bp_ref[...])
    out_ref[...] = jax.nn.sigmoid(logits)


# -----------------------------------------------------------------------------
# Parameter construction (deterministic, synthetic) + padding helpers
# -----------------------------------------------------------------------------
def _pad_to(a, shape, dtype=jnp.float32):
    out = jnp.zeros(shape, jnp.float32)
    out = out.at[tuple(slice(0, s) for s in a.shape)].set(a.astype(jnp.float32))
    return out.astype(dtype)


def _fuse_gru(w_ih, w_hh, b_ih, b_hh):
    """Fuse torch GRUCell weights into one [2*HP, 4*HP] matrix + [1, 4*HP] bias.

    torch GRUCell: weight_{ih,hh} are [3*H, H] with gate order [r, z, n].
    Column blocks of the fused matrix: [r_sum | z_sum | gi_n | gh_n].
    Row blocks: rows 0:HP multiply m (message), rows HP:2*HP multiply x (state).
    """
    wih_t = w_ih.T          # [H, 3*H]
    whh_t = w_hh.T          # [H, 3*H]
    w = jnp.zeros((2 * HP, 4 * HP), jnp.float32)
    # r gate (summed contributions)
    w = w.at[:H, 0:H].set(wih_t[:, 0:H])
    w = w.at[HP:HP + H, 0:H].set(whh_t[:, 0:H])
    # z gate (summed contributions)
    w = w.at[:H, HP:HP + H].set(wih_t[:, H:2 * H])
    w = w.at[HP:HP + H, HP:HP + H].set(whh_t[:, H:2 * H])
    # n gate: gi_n (from m only) and gh_n (from x only) kept separate
    w = w.at[:H, 2 * HP:2 * HP + H].set(wih_t[:, 2 * H:3 * H])
    w = w.at[HP:HP + H, 3 * HP:3 * HP + H].set(whh_t[:, 2 * H:3 * H])

    b = jnp.zeros((1, 4 * HP), jnp.float32)
    b = b.at[0, 0:H].set(b_ih[0:H] + b_hh[0:H])
    b = b.at[0, HP:HP + H].set(b_ih[H:2 * H] + b_hh[H:2 * H])
    b = b.at[0, 2 * HP:2 * HP + H].set(b_ih[2 * H:3 * H])
    b = b.at[0, 3 * HP:3 * HP + H].set(b_hh[2 * H:3 * H])
    return w.astype(jnp.bfloat16), b            # weights bf16, bias f32


def init_params(key):
    ks = jax.random.split(key, 12)
    s = 0.1
    # GatedGraphConv
    w_msg = jax.random.normal(ks[0], (NUM_MP, H, H)) * s          # (L, 43, 43)
    w_ih = jax.random.normal(ks[1], (3 * H, H)) * s                # GRUCell
    w_hh = jax.random.normal(ks[2], (3 * H, H)) * s
    b_ih = jax.random.normal(ks[3], (3 * H,)) * s
    b_hh = jax.random.normal(ks[4], (3 * H,)) * s
    # dense head (torch nn.Linear weight: [out, in])
    w1 = jax.random.normal(ks[5], (FF, H)) * s
    b1 = jax.random.normal(ks[6], (FF,)) * s
    w2 = jax.random.normal(ks[7], (FF, FF)) * s
    b2 = jax.random.normal(ks[8], (FF,)) * s
    w3 = jax.random.normal(ks[9], (FF, FF)) * s
    b3 = jax.random.normal(ks[10], (FF,)) * s
    wp = jax.random.normal(ks[11], (OUT, FF)) * s
    bp = jnp.zeros((OUT,), jnp.float32)

    wgru, bgru = _fuse_gru(w_ih, w_hh, b_ih, b_hh)
    bf16 = jnp.bfloat16
    return dict(
        wmsg=_pad_to(w_msg, (NUM_MP, HP, HP), bf16),
        wgru=wgru, bgru=bgru,
        w1=_pad_to(w1.T, (HP, FP), bf16), b1=_pad_to(b1[None, :], (1, FP)),
        w2=_pad_to(w2.T, (FP, FP), bf16), b2=_pad_to(b2[None, :], (1, FP)),
        w3=_pad_to(w3.T, (FP, FP), bf16), b3=_pad_to(b3[None, :], (1, FP)),
        wp=_pad_to(wp.T, (FP, OP), bf16), bp=_pad_to(bp[None, :], (1, OP)),
    )


# -----------------------------------------------------------------------------
# Wrapper: graph -> dense operands -> pallas_call
# -----------------------------------------------------------------------------
@functools.partial(jax.jit, static_argnames=("num_graphs",))
def gnn_scent_classifier(x, edge_index, batch, params, num_graphs):
    n_nodes, _ = x.shape
    np_ = _round_up(max(n_nodes, 16), 16)       # 16-row align (bf16 packing)
    gp = _round_up(max(num_graphs, 16), 16)

    # node features: cast to float, zero-pad feature dim (<=43) to HP; f32 state.
    x_p = _pad_to(x.astype(jnp.float32), (np_, HP))
    # dense adjacency for aggr='add', emitted directly in bf16:
    #   adj[dst, src] += 1  (edge multiplicities <= 256 are exact in bf16)
    adj = jnp.zeros((np_, np_), jnp.bfloat16).at[
        edge_index[1], edge_index[0]].add(jnp.bfloat16(1.0))
    # pooling matrix for global_add_pool: pool[g, n] = (batch[n] == g), bf16
    pool = jnp.zeros((gp, np_), jnp.bfloat16).at[
        batch, jnp.arange(n_nodes)].add(jnp.bfloat16(1.0))
    # TODO(synk): for graphs with more than a few thousand nodes, stream adj in
    # tiles from HBM (gridded BlockSpec / emit_pipeline over src blocks) instead
    # of keeping the dense O(N^2) matrix VMEM-resident; and add a 'parallel'
    # leading grid axis over graph mini-batches to use both v7x TensorCores.

    vmem = pl.BlockSpec(memory_space=pltpu.MemorySpace.VMEM)
    operands = (x_p, adj, params["wmsg"], params["wgru"], params["bgru"], pool,
                params["w1"], params["b1"], params["w2"], params["b2"],
                params["w3"], params["b3"], params["wp"], params["bp"])

    out_p = pl.pallas_call(
        _gnn_kernel,
        out_shape=jax.ShapeDtypeStruct((gp, OP), jnp.float32),
        in_specs=[vmem] * len(operands),
        out_specs=vmem,
    )(*operands)

    return out_p[:num_graphs, :OUT]


# -----------------------------------------------------------------------------
if __name__ == "__main__":
    key = jax.random.PRNGKey(0)
    k_par, k_feat, k_edge = jax.random.split(key, 3)

    # small synthetic molecular-graph batch: 4 graphs, 28 nodes, 16-d atom feats
    n_nodes, feat_dim, n_edges, num_graphs = 28, 16, 64, 4
    x = jax.random.normal(k_feat, (n_nodes, feat_dim), dtype=jnp.float32)
    src = jax.random.randint(k_edge, (n_edges,), 0, n_nodes)
    dst = jnp.roll(src, 7) % n_nodes
    edge_index = jnp.stack([src, dst], axis=0).astype(jnp.int32)   # [2, E]
    batch = jnp.array([0] * 6 + [1] * 8 + [2] * 7 + [3] * 7,
                      dtype=jnp.int32)                              # node -> graph

    params = init_params(k_par)

    out = gnn_scent_classifier(x, edge_index, batch, params, num_graphs)
    jax.block_until_ready(out)

    assert out.shape == (num_graphs, OUT)
    assert bool(jnp.all(jnp.isfinite(out)))
    assert bool(jnp.all((out >= 0.0) & (out <= 1.0)))
    print("KERNEL_OK")
</pallas_src>

<mosaic_0001>
module attributes {stable_mosaic.version = 11 : i64} {
  func.func @_gnn_kernel(%arg0: memref<32x128xf32, #tpu.memory_space<vmem>>, %arg1: memref<32x32xbf16, #tpu.memory_space<vmem>>, %arg2: memref<5x128x128xbf16, #tpu.memory_space<vmem>>, %arg3: memref<256x512xbf16, #tpu.memory_space<vmem>>, %arg4: memref<1x512xf32, #tpu.memory_space<vmem>>, %arg5: memref<16x32xbf16, #tpu.memory_space<vmem>>, %arg6: memref<128x512xbf16, #tpu.memory_space<vmem>>, %arg7: memref<1x512xf32, #tpu.memory_space<vmem>>, %arg8: memref<512x512xbf16, #tpu.memory_space<vmem>>, %arg9: memref<1x512xf32, #tpu.memory_space<vmem>>, %arg10: memref<512x512xbf16, #tpu.memory_space<vmem>>, %arg11: memref<1x512xf32, #tpu.memory_space<vmem>>, %arg12: memref<512x256xbf16, #tpu.memory_space<vmem>>, %arg13: memref<1x256xf32, #tpu.memory_space<vmem>>, %arg14: memref<16x256xf32, #tpu.memory_space<vmem>>) attributes {dimension_semantics = [], scalar_prefetch = 0 : i64, scratch_operands = 0 : i64, tpu.core_type = #tpu.core_type<tc>} {
    %c0 = arith.constant 0 : index
    %c0_0 = arith.constant 0 : index
    %0 = vector.load %arg0[%c0, %c0_0] : memref<32x128xf32, #tpu.memory_space<vmem>>, vector<32x128xf32>
    %c0_1 = arith.constant 0 : index
    %c0_2 = arith.constant 0 : index
    %1 = vector.load %arg1[%c0_1, %c0_2] : memref<32x32xbf16, #tpu.memory_space<vmem>>, vector<32x32xbf16>
    %c0_3 = arith.constant 0 : index
    %c0_4 = arith.constant 0 : index
    %2 = vector.load %arg3[%c0_3, %c0_4] : memref<256x512xbf16, #tpu.memory_space<vmem>>, vector<256x512xbf16>
    %c0_5 = arith.constant 0 : index
    %c0_6 = arith.constant 0 : index
    %3 = vector.load %arg4[%c0_5, %c0_6] : memref<1x512xf32, #tpu.memory_space<vmem>>, vector<1x512xf32>
    %4 = arith.truncf %0 : vector<32x128xf32> to vector<32x128xbf16>
    %c0_7 = arith.constant 0 : index
    %c0_8 = arith.constant 0 : index
    %c0_9 = arith.constant 0 : index
    %5 = vector.load %arg2[%c0_7, %c0_8, %c0_9] : memref<5x128x128xbf16, #tpu.memory_space<vmem>>, vector<1x128x128xbf16>
    %6 = vector.shape_cast %5 : vector<1x128x128xbf16> to vector<128x128xbf16>
    %cst = arith.constant dense<0.000000e+00> : vector<32x128xf32>
    %7 = tpu.matmul %4, %6, %cst {dimension_numbers = #tpu.dot_dimension_numbers<[1], [0], [0], [1], [0, 0, 1, 1], [], []>} : vector<32x128xbf16>, vector<128x128xbf16>, vector<32x128xf32> -> vector<32x128xf32>
    %8 = arith.truncf %7 : vector<32x128xf32> to vector<32x128xbf16>
    %cst_10 = arith.constant dense<0.000000e+00> : vector<32x128xf32>
    %9 = tpu.matmul %1, %8, %cst_10 {dimension_numbers = #tpu.dot_dimension_numbers<[1], [0], [0], [1], [0, 0, 1, 1], [], []>} : vector<32x32xbf16>, vector<32x128xbf16>, vector<32x128xf32> -> vector<32x128xf32>
    %10 = arith.truncf %9 : vector<32x128xf32> to vector<32x128xbf16>
    %11 = tpu.concatenate %10, %4 in 1 : vector<32x128xbf16>, vector<32x128xbf16> -> vector<32x256xbf16>
    %cst_11 = arith.constant dense<0.000000e+00> : vector<32x512xf32>
    %12 = tpu.matmul %11, %2, %cst_11 {dimension_numbers = #tpu.dot_dimension_numbers<[1], [0], [0], [1], [0, 0, 1, 1], [], []>} : vector<32x256xbf16>, vector<256x512xbf16>, vector<32x512xf32> -> vector<32x512xf32>
    %13 = vector.broadcast %3 : vector<1x512xf32> to vector<32x512xf32>
    %14 = arith.addf %12, %13 : vector<32x512xf32>
    %15 = vector.extract_strided_slice %14 {offsets = [0, 0], sizes = [32, 128], strides = [1, 1]} : vector<32x512xf32> to vector<32x128xf32>
    %16 = arith.negf %15 : vector<32x128xf32>
    %17 = math.exp %16 : vector<32x128xf32>
    %cst_12 = arith.constant 1.000000e+00 : f32
    %18 = vector.broadcast %cst_12 : f32 to vector<32x128xf32>
    %19 = arith.addf %18, %17 : vector<32x128xf32>
    %20 = arith.divf %18, %19 : vector<32x128xf32>
    %21 = vector.extract_strided_slice %14 {offsets = [0, 128], sizes = [32, 128], strides = [1, 1]} : vector<32x512xf32> to vector<32x128xf32>
    %22 = arith.negf %21 : vector<32x128xf32>
    %23 = math.exp %22 : vector<32x128xf32>
    %cst_13 = arith.constant 1.000000e+00 : f32
    %24 = vector.broadcast %cst_13 : f32 to vector<32x128xf32>
    %25 = arith.addf %24, %23 : vector<32x128xf32>
    %26 = arith.divf %24, %25 : vector<32x128xf32>
    %27 = vector.extract_strided_slice %14 {offsets = [0, 256], sizes = [32, 128], strides = [1, 1]} : vector<32x512xf32> to vector<32x128xf32>
    %28 = vector.extract_strided_slice %14 {offsets = [0, 384], sizes = [32, 128], strides = [1, 1]} : vector<32x512xf32> to vector<32x128xf32>
    %29 = arith.mulf %20, %28 : vector<32x128xf32>
    %30 = arith.addf %27, %29 : vector<32x128xf32>
    %31 = math.tanh %30 : vector<32x128xf32>
    %cst_14 = arith.constant 1.000000e+00 : f32
    %32 = vector.broadcast %cst_14 : f32 to vector<32x128xf32>
    %33 = arith.subf %32, %26 : vector<32x128xf32>
    %34 = arith.mulf %33, %31 : vector<32x128xf32>
    %35 = arith.mulf %26, %0 : vector<32x128xf32>
    %36 = arith.addf %34, %35 : vector<32x128xf32>
    %37 = arith.truncf %36 : vector<32x128xf32> to vector<32x128xbf16>
    %c1 = arith.constant 1 : index
    %c0_15 = arith.constant 0 : index
    %c0_16 = arith.constant 0 : index
    %38 = vector.load %arg2[%c1, %c0_15, %c0_16] : memref<5x128x128xbf16, #tpu.memory_space<vmem>>, vector<1x128x128xbf16>
    %39 = vector.shape_cast %38 : vector<1x128x128xbf16> to vector<128x128xbf16>
    %cst_17 = arith.constant dense<0.000000e+00> : vector<32x128xf32>
    %40 = tpu.matmul %37, %39, %cst_17 {dimension_numbers = #tpu.dot_dimension_numbers<[1], [0], [0], [1], [0, 0, 1, 1], [], []>} : vector<32x128xbf16>, vector<128x128xbf16>, vector<32x128xf32> -> vector<32x128xf32>
    %41 = arith.truncf %40 : vector<32x128xf32> to vector<32x128xbf16>
    %cst_18 = arith.constant dense<0.000000e+00> : vector<32x128xf32>
    %42 = tpu.matmul %1, %41, %cst_18 {dimension_numbers = #tpu.dot_dimension_numbers<[1], [0], [0], [1], [0, 0, 1, 1], [], []>} : vector<32x32xbf16>, vector<32x128xbf16>, vector<32x128xf32> -> vector<32x128xf32>
    %43 = arith.truncf %42 : vector<32x128xf32> to vector<32x128xbf16>
    %44 = tpu.concatenate %43, %37 in 1 : vector<32x128xbf16>, vector<32x128xbf16> -> vector<32x256xbf16>
    %cst_19 = arith.constant dense<0.000000e+00> : vector<32x512xf32>
    %45 = tpu.matmul %44, %2, %cst_19 {dimension_numbers = #tpu.dot_dimension_numbers<[1], [0], [0], [1], [0, 0, 1, 1], [], []>} : vector<32x256xbf16>, vector<256x512xbf16>, vector<32x512xf32> -> vector<32x512xf32>
    %46 = vector.broadcast %3 : vector<1x512xf32> to vector<32x512xf32>
    %47 = arith.addf %45, %46 : vector<32x512xf32>
    %48 = vector.extract_strided_slice %47 {offsets = [0, 0], sizes = [32, 128], strides = [1, 1]} : vector<32x512xf32> to vector<32x128xf32>
    %49 = arith.negf %48 : vector<32x128xf32>
    %50 = math.exp %49 : vector<32x128xf32>
    %cst_20 = arith.constant 1.000000e+00 : f32
    %51 = vector.broadcast %cst_20 : f32 to vector<32x128xf32>
    %52 = arith.addf %51, %50 : vector<32x128xf32>
    %53 = arith.divf %51, %52 : vector<32x128xf32>
    %54 = vector.extract_strided_slice %47 {offsets = [0, 128], sizes = [32, 128], strides = [1, 1]} : vector<32x512xf32> to vector<32x128xf32>
    %55 = arith.negf %54 : vector<32x128xf32>
    %56 = math.exp %55 : vector<32x128xf32>
    %cst_21 = arith.constant 1.000000e+00 : f32
    %57 = vector.broadcast %cst_21 : f32 to vector<32x128xf32>
    %58 = arith.addf %57, %56 : vector<32x128xf32>
    %59 = arith.divf %57, %58 : vector<32x128xf32>
    %60 = vector.extract_strided_slice %47 {offsets = [0, 256], sizes = [32, 128], strides = [1, 1]} : vector<32x512xf32> to vector<32x128xf32>
    %61 = vector.extract_strided_slice %47 {offsets = [0, 384], sizes = [32, 128], strides = [1, 1]} : vector<32x512xf32> to vector<32x128xf32>
    %62 = arith.mulf %53, %61 : vector<32x128xf32>
    %63 = arith.addf %60, %62 : vector<32x128xf32>
    %64 = math.tanh %63 : vector<32x128xf32>
    %cst_22 = arith.constant 1.000000e+00 : f32
    %65 = vector.broadcast %cst_22 : f32 to vector<32x128xf32>
    %66 = arith.subf %65, %59 : vector<32x128xf32>
    %67 = arith.mulf %66, %64 : vector<32x128xf32>
    %68 = arith.mulf %59, %36 : vector<32x128xf32>
    %69 = arith.addf %67, %68 : vector<32x128xf32>
    %70 = arith.truncf %69 : vector<32x128xf32> to vector<32x128xbf16>
    %c2 = arith.constant 2 : index
    %c0_23 = arith.constant 0 : index
    %c0_24 = arith.constant 0 : index
    %71 = vector.load %arg2[%c2, %c0_23, %c0_24] : memref<5x128x128xbf16, #tpu.memory_space<vmem>>, vector<1x128x128xbf16>
    %72 = vector.shape_cast %71 : vector<1x128x128xbf16> to vector<128x128xbf16>
    %cst_25 = arith.constant dense<0.000000e+00> : vector<32x128xf32>
    %73 = tpu.matmul %70, %72, %cst_25 {dimension_numbers = #tpu.dot_dimension_numbers<[1], [0], [0], [1], [0, 0, 1, 1], [], []>} : vector<32x128xbf16>, vector<128x128xbf16>, vector<32x128xf32> -> vector<32x128xf32>
    %74 = arith.truncf %73 : vector<32x128xf32> to vector<32x128xbf16>
    %cst_26 = arith.constant dense<0.000000e+00> : vector<32x128xf32>
    %75 = tpu.matmul %1, %74, %cst_26 {dimension_numbers = #tpu.dot_dimension_numbers<[1], [0], [0], [1], [0, 0, 1, 1], [], []>} : vector<32x32xbf16>, vector<32x128xbf16>, vector<32x128xf32> -> vector<32x128xf32>
    %76 = arith.truncf %75 : vector<32x128xf32> to vector<32x128xbf16>
    %77 = tpu.concatenate %76, %70 in 1 : vector<32x128xbf16>, vector<32x128xbf16> -> vector<32x256xbf16>
    %cst_27 = arith.constant dense<0.000000e+00> : vector<32x512xf32>
    %78 = tpu.matmul %77, %2, %cst_27 {dimension_numbers = #tpu.dot_dimension_numbers<[1], [0], [0], [1], [0, 0, 1, 1], [], []>} : vector<32x256xbf16>, vector<256x512xbf16>, vector<32x512xf32> -> vector<32x512xf32>
    %79 = vector.broadcast %3 : vector<1x512xf32> to vector<32x512xf32>
    %80 = arith.addf %78, %79 : vector<32x512xf32>
    %81 = vector.extract_strided_slice %80 {offsets = [0, 0], sizes = [32, 128], strides = [1, 1]} : vector<32x512xf32> to vector<32x128xf32>
    %82 = arith.negf %81 : vector<32x128xf32>
    %83 = math.exp %82 : vector<32x128xf32>
    %cst_28 = arith.constant 1.000000e+00 : f32
    %84 = vector.broadcast %cst_28 : f32 to vector<32x128xf32>
    %85 = arith.addf %84, %83 : vector<32x128xf32>
    %86 = arith.divf %84, %85 : vector<32x128xf32>
    %87 = vector.extract_strided_slice %80 {offsets = [0, 128], sizes = [32, 128], strides = [1, 1]} : vector<32x512xf32> to vector<32x128xf32>
    %88 = arith.negf %87 : vector<32x128xf32>
    %89 = math.exp %88 : vector<32x128xf32>
    %cst_29 = arith.constant 1.000000e+00 : f32
    %90 = vector.broadcast %cst_29 : f32 to vector<32x128xf32>
    %91 = arith.addf %90, %89 : vector<32x128xf32>
    %92 = arith.divf %90, %91 : vector<32x128xf32>
    %93 = vector.extract_strided_slice %80 {offsets = [0, 256], sizes = [32, 128], strides = [1, 1]} : vector<32x512xf32> to vector<32x128xf32>
    %94 = vector.extract_strided_slice %80 {offsets = [0, 384], sizes = [32, 128], strides = [1, 1]} : vector<32x512xf32> to vector<32x128xf32>
    %95 = arith.mulf %86, %94 : vector<32x128xf32>
    %96 = arith.addf %93, %95 : vector<32x128xf32>
    %97 = math.tanh %96 : vector<32x128xf32>
    %cst_30 = arith.constant 1.000000e+00 : f32
    %98 = vector.broadcast %cst_30 : f32 to vector<32x128xf32>
    %99 = arith.subf %98, %92 : vector<32x128xf32>
    %100 = arith.mulf %99, %97 : vector<32x128xf32>
    %101 = arith.mulf %92, %69 : vector<32x128xf32>
    %102 = arith.addf %100, %101 : vector<32x128xf32>
    %103 = arith.truncf %102 : vector<32x128xf32> to vector<32x128xbf16>
    %c3 = arith.constant 3 : index
    %c0_31 = arith.constant 0 : index
    %c0_32 = arith.constant 0 : index
    %104 = vector.load %arg2[%c3, %c0_31, %c0_32] : memref<5x128x128xbf16, #tpu.memory_space<vmem>>, vector<1x128x128xbf16>
    %105 = vector.shape_cast %104 : vector<1x128x128xbf16> to vector<128x128xbf16>
    %cst_33 = arith.constant dense<0.000000e+00> : vector<32x128xf32>
    %106 = tpu.matmul %103, %105, %cst_33 {dimension_numbers = #tpu.dot_dimension_numbers<[1], [0], [0], [1], [0, 0, 1, 1], [], []>} : vector<32x128xbf16>, vector<128x128xbf16>, vector<32x128xf32> -> vector<32x128xf32>
    %107 = arith.truncf %106 : vector<32x128xf32> to vector<32x128xbf16>
    %cst_34 = arith.constant dense<0.000000e+00> : vector<32x128xf32>
    %108 = tpu.matmul %1, %107, %cst_34 {dimension_numbers = #tpu.dot_dimension_numbers<[1], [0], [0], [1], [0, 0, 1, 1], [], []>} : vector<32x32xbf16>, vector<32x128xbf16>, vector<32x128xf32> -> vector<32x128xf32>
    %109 = arith.truncf %108 : vector<32x128xf32> to vector<32x128xbf16>
    %110 = tpu.concatenate %109, %103 in 1 : vector<32x128xbf16>, vector<32x128xbf16> -> vector<32x256xbf16>
    %cst_35 = arith.constant dense<0.000000e+00> : vector<32x512xf32>
    %111 = tpu.matmul %110, %2, %cst_35 {dimension_numbers = #tpu.dot_dimension_numbers<[1], [0], [0], [1], [0, 0, 1, 1], [], []>} : vector<32x256xbf16>, vector<256x512xbf16>, vector<32x512xf32> -> vector<32x512xf32>
    %112 = vector.broadcast %3 : vector<1x512xf32> to vector<32x512xf32>
    %113 = arith.addf %111, %112 : vector<32x512xf32>
    %114 = vector.extract_strided_slice %113 {offsets = [0, 0], sizes = [32, 128], strides = [1, 1]} : vector<32x512xf32> to vector<32x128xf32>
    %115 = arith.negf %114 : vector<32x128xf32>
    %116 = math.exp %115 : vector<32x128xf32>
    %cst_36 = arith.constant 1.000000e+00 : f32
    %117 = vector.broadcast %cst_36 : f32 to vector<32x128xf32>
    %118 = arith.addf %117, %116 : vector<32x128xf32>
    %119 = arith.divf %117, %118 : vector<32x128xf32>
    %120 = vector.extract_strided_slice %113 {offsets = [0, 128], sizes = [32, 128], strides = [1, 1]} : vector<32x512xf32> to vector<32x128xf32>
    %121 = arith.negf %120 : vector<32x128xf32>
    %122 = math.exp %121 : vector<32x128xf32>
    %cst_37 = arith.constant 1.000000e+00 : f32
    %123 = vector.broadcast %cst_37 : f32 to vector<32x128xf32>
    %124 = arith.addf %123, %122 : vector<32x128xf32>
    %125 = arith.divf %123, %124 : vector<32x128xf32>
    %126 = vector.extract_strided_slice %113 {offsets = [0, 256], sizes = [32, 128], strides = [1, 1]} : vector<32x512xf32> to vector<32x128xf32>
    %127 = vector.extract_strided_slice %113 {offsets = [0, 384], sizes = [32, 128], strides = [1, 1]} : vector<32x512xf32> to vector<32x128xf32>
    %128 = arith.mulf %119, %127 : vector<32x128xf32>
    %129 = arith.addf %126, %128 : vector<32x128xf32>
    %130 = math.tanh %129 : vector<32x128xf32>
    %cst_38 = arith.constant 1.000000e+00 : f32
    %131 = vector.broadcast %cst_38 : f32 to vector<32x128xf32>
    %132 = arith.subf %131, %125 : vector<32x128xf32>
    %133 = arith.mulf %132, %130 : vector<32x128xf32>
    %134 = arith.mulf %125, %102 : vector<32x128xf32>
    %135 = arith.addf %133, %134 : vector<32x128xf32>
    %136 = arith.truncf %135 : vector<32x128xf32> to vector<32x128xbf16>
    %c4 = arith.constant 4 : index
    %c0_39 = arith.constant 0 : index
    %c0_40 = arith.constant 0 : index
    %137 = vector.load %arg2[%c4, %c0_39, %c0_40] : memref<5x128x128xbf16, #tpu.memory_space<vmem>>, vector<1x128x128xbf16>
    %138 = vector.shape_cast %137 : vector<1x128x128xbf16> to vector<128x128xbf16>
    %cst_41 = arith.constant dense<0.000000e+00> : vector<32x128xf32>
    %139 = tpu.matmul %136, %138, %cst_41 {dimension_numbers = #tpu.dot_dimension_numbers<[1], [0], [0], [1], [0, 0, 1, 1], [], []>} : vector<32x128xbf16>, vector<128x128xbf16>, vector<32x128xf32> -> vector<32x128xf32>
    %140 = arith.truncf %139 : vector<32x128xf32> to vector<32x128xbf16>
    %cst_42 = arith.constant dense<0.000000e+00> : vector<32x128xf32>
    %141 = tpu.matmul %1, %140, %cst_42 {dimension_numbers = #tpu.dot_dimension_numbers<[1], [0], [0], [1], [0, 0, 1, 1], [], []>} : vector<32x32xbf16>, vector<32x128xbf16>, vector<32x128xf32> -> vector<32x128xf32>
    %142 = arith.truncf %141 : vector<32x128xf32> to vector<32x128xbf16>
    %143 = tpu.concatenate %142, %136 in 1 : vector<32x128xbf16>, vector<32x128xbf16> -> vector<32x256xbf16>
    %cst_43 = arith.constant dense<0.000000e+00> : vector<32x512xf32>
    %144 = tpu.matmul %143, %2, %cst_43 {dimension_numbers = #tpu.dot_dimension_numbers<[1], [0], [0], [1], [0, 0, 1, 1], [], []>} : vector<32x256xbf16>, vector<256x512xbf16>, vector<32x512xf32> -> vector<32x512xf32>
    %145 = vector.broadcast %3 : vector<1x512xf32> to vector<32x512xf32>
    %146 = arith.addf %144, %145 : vector<32x512xf32>
    %147 = vector.extract_strided_slice %146 {offsets = [0, 0], sizes = [32, 128], strides = [1, 1]} : vector<32x512xf32> to vector<32x128xf32>
    %148 = arith.negf %147 : vector<32x128xf32>
    %149 = math.exp %148 : vector<32x128xf32>
    %cst_44 = arith.constant 1.000000e+00 : f32
    %150 = vector.broadcast %cst_44 : f32 to vector<32x128xf32>
    %151 = arith.addf %150, %149 : vector<32x128xf32>
    %152 = arith.divf %150, %151 : vector<32x128xf32>
    %153 = vector.extract_strided_slice %146 {offsets = [0, 128], sizes = [32, 128], strides = [1, 1]} : vector<32x512xf32> to vector<32x128xf32>
    %154 = arith.negf %153 : vector<32x128xf32>
    %155 = math.exp %154 : vector<32x128xf32>
    %cst_45 = arith.constant 1.000000e+00 : f32
    %156 = vector.broadcast %cst_45 : f32 to vector<32x128xf32>
    %157 = arith.addf %156, %155 : vector<32x128xf32>
    %158 = arith.divf %156, %157 : vector<32x128xf32>
    %159 = vector.extract_strided_slice %146 {offsets = [0, 256], sizes = [32, 128], strides = [1, 1]} : vector<32x512xf32> to vector<32x128xf32>
    %160 = vector.extract_strided_slice %146 {offsets = [0, 384], sizes = [32, 128], strides = [1, 1]} : vector<32x512xf32> to vector<32x128xf32>
    %161 = arith.mulf %152, %160 : vector<32x128xf32>
    %162 = arith.addf %159, %161 : vector<32x128xf32>
    %163 = math.tanh %162 : vector<32x128xf32>
    %cst_46 = arith.constant 1.000000e+00 : f32
    %164 = vector.broadcast %cst_46 : f32 to vector<32x128xf32>
    %165 = arith.subf %164, %158 : vector<32x128xf32>
    %166 = arith.mulf %165, %163 : vector<32x128xf32>
    %167 = arith.mulf %158, %135 : vector<32x128xf32>
    %168 = arith.addf %166, %167 : vector<32x128xf32>
    %c0_47 = arith.constant 0 : index
    %c0_48 = arith.constant 0 : index
    %169 = vector.load %arg5[%c0_47, %c0_48] : memref<16x32xbf16, #tpu.memory_space<vmem>>, vector<16x32xbf16>
    %170 = arith.truncf %168 : vector<32x128xf32> to vector<32x128xbf16>
    %cst_49 = arith.constant dense<0.000000e+00> : vector<16x128xf32>
    %171 = tpu.matmul %169, %170, %cst_49 {dimension_numbers = #tpu.dot_dimension_numbers<[1], [0], [0], [1], [0, 0, 1, 1], [], []>} : vector<16x32xbf16>, vector<32x128xbf16>, vector<16x128xf32> -> vector<16x128xf32>
    %172 = arith.truncf %171 : vector<16x128xf32> to vector<16x128xbf16>
    %c0_50 = arith.constant 0 : index
    %c0_51 = arith.constant 0 : index
    %173 = vector.load %arg6[%c0_50, %c0_51] : memref<128x512xbf16, #tpu.memory_space<vmem>>, vector<128x512xbf16>
    %cst_52 = arith.constant dense<0.000000e+00> : vector<16x512xf32>
    %174 = tpu.matmul %172, %173, %cst_52 {dimension_numbers = #tpu.dot_dimension_numbers<[1], [0], [0], [1], [0, 0, 1, 1], [], []>} : vector<16x128xbf16>, vector<128x512xbf16>, vector<16x512xf32> -> vector<16x512xf32>
    %c0_53 = arith.constant 0 : index
    %c0_54 = arith.constant 0 : index
    %175 = vector.load %arg7[%c0_53, %c0_54] : memref<1x512xf32, #tpu.memory_space<vmem>>, vector<1x512xf32>
    %176 = vector.broadcast %175 : vector<1x512xf32> to vector<16x512xf32>
    %177 = arith.addf %174, %176 : vector<16x512xf32>
    %cst_55 = arith.constant 0.000000e+00 : f32
    %178 = vector.broadcast %cst_55 : f32 to vector<16x512xf32>
    %179 = arith.maximumf %177, %178 : vector<16x512xf32>
    %180 = arith.truncf %179 : vector<16x512xf32> to vector<16x512xbf16>
    %c0_56 = arith.constant 0 : index
    %c0_57 = arith.constant 0 : index
    %181 = vector.load %arg8[%c0_56, %c0_57] : memref<512x512xbf16, #tpu.memory_space<vmem>>, vector<512x512xbf16>
    %cst_58 = arith.constant dense<0.000000e+00> : vector<16x512xf32>
    %182 = tpu.matmul %180, %181, %cst_58 {dimension_numbers = #tpu.dot_dimension_numbers<[1], [0], [0], [1], [0, 0, 1, 1], [], []>} : vector<16x512xbf16>, vector<512x512xbf16>, vector<16x512xf32> -> vector<16x512xf32>
    %c0_59 = arith.constant 0 : index
    %c0_60 = arith.constant 0 : index
    %183 = vector.load %arg9[%c0_59, %c0_60] : memref<1x512xf32, #tpu.memory_space<vmem>>, vector<1x512xf32>
    %184 = vector.broadcast %183 : vector<1x512xf32> to vector<16x512xf32>
    %185 = arith.addf %182, %184 : vector<16x512xf32>
    %cst_61 = arith.constant 0.000000e+00 : f32
    %186 = vector.broadcast %cst_61 : f32 to vector<16x512xf32>
    %187 = arith.maximumf %185, %186 : vector<16x512xf32>
    %188 = arith.truncf %187 : vector<16x512xf32> to vector<16x512xbf16>
    %c0_62 = arith.constant 0 : index
    %c0_63 = arith.constant 0 : index
    %189 = vector.load %arg10[%c0_62, %c0_63] : memref<512x512xbf16, #tpu.memory_space<vmem>>, vector<512x512xbf16>
    %cst_64 = arith.constant dense<0.000000e+00> : vector<16x512xf32>
    %190 = tpu.matmul %188, %189, %cst_64 {dimension_numbers = #tpu.dot_dimension_numbers<[1], [0], [0], [1], [0, 0, 1, 1], [], []>} : vector<16x512xbf16>, vector<512x512xbf16>, vector<16x512xf32> -> vector<16x512xf32>
    %c0_65 = arith.constant 0 : index
    %c0_66 = arith.constant 0 : index
    %191 = vector.load %arg11[%c0_65, %c0_66] : memref<1x512xf32, #tpu.memory_space<vmem>>, vector<1x512xf32>
    %192 = vector.broadcast %191 : vector<1x512xf32> to vector<16x512xf32>
    %193 = arith.addf %190, %192 : vector<16x512xf32>
    %cst_67 = arith.constant 0.000000e+00 : f32
    %194 = vector.broadcast %cst_67 : f32 to vector<16x512xf32>
    %195 = arith.maximumf %193, %194 : vector<16x512xf32>
    %196 = arith.truncf %195 : vector<16x512xf32> to vector<16x512xbf16>
    %c0_68 = arith.constant 0 : index
    %c0_69 = arith.constant 0 : index
    %197 = vector.load %arg12[%c0_68, %c0_69] : memref<512x256xbf16, #tpu.memory_space<vmem>>, vector<512x256xbf16>
    %cst_70 = arith.constant dense<0.000000e+00> : vector<16x256xf32>
    %198 = tpu.matmul %196, %197, %cst_70 {dimension_numbers = #tpu.dot_dimension_numbers<[1], [0], [0], [1], [0, 0, 1, 1], [], []>} : vector<16x512xbf16>, vector<512x256xbf16>, vector<16x256xf32> -> vector<16x256xf32>
    %c0_71 = arith.constant 0 : index
    %c0_72 = arith.constant 0 : index
    %199 = vector.load %arg13[%c0_71, %c0_72] : memref<1x256xf32, #tpu.memory_space<vmem>>, vector<1x256xf32>
    %200 = vector.broadcast %199 : vector<1x256xf32> to vector<16x256xf32>
    %201 = arith.addf %198, %200 : vector<16x256xf32>
    %202 = arith.negf %201 : vector<16x256xf32>
    %203 = math.exp %202 : vector<16x256xf32>
    %cst_73 = arith.constant 1.000000e+00 : f32
    %204 = vector.broadcast %cst_73 : f32 to vector<16x256xf32>
    %205 = arith.addf %204, %203 : vector<16x256xf32>
    %206 = arith.divf %204, %205 : vector<16x256xf32>
    %c0_74 = arith.constant 0 : index
    %c0_75 = arith.constant 0 : index
    %207 = vector.load %arg14[%c0_74, %c0_75] : memref<16x256xf32, #tpu.memory_space<vmem>>, vector<16x256xf32>
    tpu.vector_store %arg14[%c0_74, %c0_75], %206 {strides = array<i32>} : memref<16x256xf32, #tpu.memory_space<vmem>>, vector<16x256xf32>,
    return
  }
}

</mosaic_0001>

<llo_original>
// kernel: gnn_scent_classifier.1
$region0: #{gnn_scent_classifier.1}
  #allocation0 [shape = 'u32[]', space=smem, size = 0x4, offset = 0x4, fixed_abs, tag = 'smem constant byte address 0x4 - core index']
  #allocation1 [shape = 'u32[72,128]{1,0:T(1,128)}', space=vmem, size = 0x9000, scoped, tag = 'internal scratch']
  %s0 = inlined_call_operand.vmem [shape: f32[32,128], index: 0, kind: input, shape index: {}]
  %s1 = inlined_call_operand.vmem [shape: bf16[32,32], index: 1, kind: input, shape index: {}]
  %s2 = inlined_call_operand.vmem [shape: bf16[5,128,128], index: 2, kind: input, shape index: {}]
  %s3 = inlined_call_operand.vmem [shape: bf16[256,512], index: 3, kind: input, shape index: {}]
  %s4 = inlined_call_operand.vmem [shape: f32[1,512], index: 4, kind: input, shape index: {}]
  %s5 = inlined_call_operand.vmem [shape: bf16[16,32], index: 5, kind: input, shape index: {}]
  %s6 = inlined_call_operand.vmem [shape: bf16[128,512], index: 6, kind: input, shape index: {}]
  %s7 = inlined_call_operand.vmem [shape: f32[1,512], index: 7, kind: input, shape index: {}]
  %s8 = inlined_call_operand.vmem [shape: bf16[512,512], index: 8, kind: input, shape index: {}]
  %s9 = inlined_call_operand.vmem [shape: f32[1,512], index: 9, kind: input, shape index: {}]
  %s10 = inlined_call_operand.vmem [shape: bf16[512,512], index: 10, kind: input, shape index: {}]
  %s11 = inlined_call_operand.vmem [shape: f32[1,512], index: 11, kind: input, shape index: {}]
  %s12 = inlined_call_operand.vmem [shape: bf16[512,256], index: 12, kind: input, shape index: {}]
  %s13 = inlined_call_operand.vmem [shape: f32[1,256], index: 13, kind: input, shape index: {}]
  %s14 = inlined_call_operand.vmem [shape: f32[16,256], index: 14, kind: output, shape index: {}]
  %s15 = sld [smem:[#allocation0]]
  $region66: #{gnn_scent_classifier.1} parent=0
    _
  %s17 = ssub.s32 1, %s15
  %s18 = scalar_select 0, %s17, %s15
  // Predicated region
  $region2: #{gnn_scent_classifier.1} parent=0 // pred_check
    _
  $region3: #{gnn_scent_classifier.1} parent=0 // pred_check_branch
    %20 = sbr.rel (0) target = $region5
  $region4: #{gnn_scent_classifier.1} parent=0 // pred_region
    _
  $region5: #{gnn_scent_classifier.1} parent=0 // pred_fallthru
    _
  // Predicated region
  $region6: #{gnn_scent_classifier.1} parent=0 // pred_check
    _
  $region7: #{gnn_scent_classifier.1} parent=0 // pred_check_branch
    %22 = sbr.rel (0) target = $region9
  $region8: #{gnn_scent_classifier.1} parent=0 // pred_region
    _
  $region9: #{gnn_scent_classifier.1} parent=0 // pred_fallthru
    _
  // Predicated region
  $region10: #{gnn_scent_classifier.1} parent=0 // pred_check
    _
  $region11: #{gnn_scent_classifier.1} parent=0 // pred_check_branch
    %24 = sbr.rel (0) target = $region13
  $region12: #{gnn_scent_classifier.1} parent=0 // pred_region
    _
  $region13: #{gnn_scent_classifier.1} parent=0 // pred_fallthru
    _
  // Predicated region
  $region14: #{gnn_scent_classifier.1} parent=0 // pred_check
    _
  $region15: #{gnn_scent_classifier.1} parent=0 // pred_check_branch
    %26 = sbr.rel (0) target = $region17
  $region16: #{gnn_scent_classifier.1} parent=0 // pred_region
    _
  $region17: #{gnn_scent_classifier.1} parent=0 // pred_fallthru
    _
  // Predicated region
  $region18: #{gnn_scent_classifier.1} parent=0 // pred_check
    _
  $region19: #{gnn_scent_classifier.1} parent=0 // pred_check_branch
    %28 = sbr.rel (0) target = $region21
  $region20: #{gnn_scent_classifier.1} parent=0 // pred_region
    _
  $region21: #{gnn_scent_classifier.1} parent=0 // pred_fallthru
    _
  // Predicated region
  $region22: #{gnn_scent_classifier.1} parent=0 // pred_check
    _
  $region23: #{gnn_scent_classifier.1} parent=0 // pred_check_branch
    %30 = sbr.rel (0) target = $region25
  $region24: #{gnn_scent_classifier.1} parent=0 // pred_region
    _
  $region25: #{gnn_scent_classifier.1} parent=0 // pred_fallthru
    _
  // Predicated region
  $region26: #{gnn_scent_classifier.1} parent=0 // pred_check
    _
  $region27: #{gnn_scent_classifier.1} parent=0 // pred_check_branch
    %32 = sbr.rel (0) target = $region29
  $region28: #{gnn_scent_classifier.1} parent=0 // pred_region
    _
  $region29: #{gnn_scent_classifier.1} parent=0 // pred_fallthru
    _
  // Predicated region
  $region30: #{gnn_scent_classifier.1} parent=0 // pred_check
    _
  $region31: #{gnn_scent_classifier.1} parent=0 // pred_check_branch
    %34 = sbr.rel (0) target = $region33
  $region32: #{gnn_scent_classifier.1} parent=0 // pred_region
    _
  $region33: #{gnn_scent_classifier.1} parent=0 // pred_fallthru
    _
  // Predicated region
  $region34: #{gnn_scent_classifier.1} parent=0 // pred_check
    _
  $region35: #{gnn_scent_classifier.1} parent=0 // pred_check_branch
    %36 = sbr.rel (0) target = $region37
  $region36: #{gnn_scent_classifier.1} parent=0 // pred_region
    _
  $region37: #{gnn_scent_classifier.1} parent=0 // pred_fallthru
    _
  // Predicated region
  $region38: #{gnn_scent_classifier.1} parent=0 // pred_check
    _
  $region39: #{gnn_scent_classifier.1} parent=0 // pred_check_branch
    %38 = sbr.rel (0) target = $region41
  $region40: #{gnn_scent_classifier.1} parent=0 // pred_region
    _
  $region41: #{gnn_scent_classifier.1} parent=0 // pred_fallthru
    _
  // Predicated region
  $region42: #{gnn_scent_classifier.1} parent=0 // pred_check
    _
  $region43: #{gnn_scent_classifier.1} parent=0 // pred_check_branch
    %40 = sbr.rel (0) target = $region45
  $region44: #{gnn_scent_classifier.1} parent=0 // pred_region
    _
  $region45: #{gnn_scent_classifier.1} parent=0 // pred_fallthru
    _
  // Predicated region
  $region46: #{gnn_scent_classifier.1} parent=0 // pred_check
    _
  $region47: #{gnn_scent_classifier.1} parent=0 // pred_check_branch
    %42 = sbr.rel (0) target = $region49
  $region48: #{gnn_scent_classifier.1} parent=0 // pred_region
    _
  $region49: #{gnn_scent_classifier.1} parent=0 // pred_fallthru
    _
  // Predicated region
  $region50: #{gnn_scent_classifier.1} parent=0 // pred_check
    _
  $region51: #{gnn_scent_classifier.1} parent=0 // pred_check_branch
    %44 = sbr.rel (0) target = $region53
  $region52: #{gnn_scent_classifier.1} parent=0 // pred_region
    _
  $region53: #{gnn_scent_classifier.1} parent=0 // pred_fallthru
    _
  // Predicated region
  $region54: #{gnn_scent_classifier.1} parent=0 // pred_check
    _
  $region55: #{gnn_scent_classifier.1} parent=0 // pred_check_branch
    %46 = sbr.rel (0) target = $region57
  $region56: #{gnn_scent_classifier.1} parent=0 // pred_region
    _
  $region57: #{gnn_scent_classifier.1} parent=0 // pred_fallthru
    _
  %v48 = vld [vmem:[%s0] sm:$0xff]
  %v49 = vld [vmem:[%s0 + $0x8] sm:$0xff]
  %v50 = vld [vmem:[%s0 + $0x10] sm:$0xff]
  %v51 = vld [vmem:[%s0 + $0x18] sm:$0xff]
  %v52 = vld [vmem:[%s1] sm:$0xf]
  %v53 = vld [vmem:[%s1 + $0x4] sm:$0xf]
  %v54 = vld [vmem:[%s1 + $0x8] sm:$0xf]
  %v55 = vld [vmem:[%s1 + $0xc] sm:$0xf]
  %v56 = vld [vmem:[%s3] sm:$0xff]
  %v57 = vld [vmem:[%s3 + $0x8] sm:$0xff]
  %v58 = vld [vmem:[%s3 + $0x10] sm:$0xff]
  %v59 = vld [vmem:[%s3 + $0x18] sm:$0xff]
  %v60 = vld [vmem:[%s3 + $0x20] sm:$0xff]
  %v61 = vld [vmem:[%s3 + $0x28] sm:$0xff]
  %v62 = vld [vmem:[%s3 + $0x30] sm:$0xff]
  %v63 = vld [vmem:[%s3 + $0x38] sm:$0xff]
  %v64 = vld [vmem:[%s3 + $0x40] sm:$0xff]
  %v65 = vld [vmem:[%s3 + $0x48] sm:$0xff]
  %v66 = vld [vmem:[%s3 + $0x50] sm:$0xff]
  %v67 = vld [vmem:[%s3 + $0x58] sm:$0xff]
  %v68 = vld [vmem:[%s3 + $0x60] sm:$0xff]
  %v69 = vld [vmem:[%s3 + $0x68] sm:$0xff]
  %v70 = vld [vmem:[%s3 + $0x70] sm:$0xff]
  %v71 = vld [vmem:[%s3 + $0x78] sm:$0xff]
  %v72 = vld [vmem:[%s3 + $0x80] sm:$0xff]
  %v73 = vld [vmem:[%s3 + $0x88] sm:$0xff]
  %v74 = vld [vmem:[%s3 + $0x90] sm:$0xff]
  %v75 = vld [vmem:[%s3 + $0x98] sm:$0xff]
  %v76 = vld [vmem:[%s3 + $0xa0] sm:$0xff]
  %v77 = vld [vmem:[%s3 + $0xa8] sm:$0xff]
  %v78 = vld [vmem:[%s3 + $0xb0] sm:$0xff]
  %v79 = vld [vmem:[%s3 + $0xb8] sm:$0xff]
  %v80 = vld [vmem:[%s3 + $0xc0] sm:$0xff]
  %v81 = vld [vmem:[%s3 + $0xc8] sm:$0xff]
  %v82 = vld [vmem:[%s3 + $0xd0] sm:$0xff]
  %v83 = vld [vmem:[%s3 + $0xd8] sm:$0xff]
  %v84 = vld [vmem:[%s3 + $0xe0] sm:$0xff]
  %v85 = vld [vmem:[%s3 + $0xe8] sm:$0xff]
  %v86 = vld [vmem:[%s3 + $0xf0] sm:$0xff]
  %v87 = vld [vmem:[%s3 + $0xf8] sm:$0xff]
  %v88 = vld [vmem:[%s3 + $0x100] sm:$0xff]
  %v89 = vld [vmem:[%s3 + $0x108] sm:$0xff]
  %v90 = vld [vmem:[%s3 + $0x110] sm:$0xff]
  %v91 = vld [vmem:[%s3 + $0x118] sm:$0xff]
  %v92 = vld [vmem:[%s3 + $0x120] sm:$0xff]
  %v93 = vld [vmem:[%s3 + $0x128] sm:$0xff]
  %v94 = vld [vmem:[%s3 + $0x130] sm:$0xff]
  %v95 = vld [vmem:[%s3 + $0x138] sm:$0xff]
  %v96 = vld [vmem:[%s3 + $0x140] sm:$0xff]
  %v97 = vld [vmem:[%s3 + $0x148] sm:$0xff]
  %v98 = vld [vmem:[%s3 + $0x150] sm:$0xff]
  %v99 = vld [vmem:[%s3 + $0x158] sm:$0xff]
  %v100 = vld [vmem:[%s3 + $0x160] sm:$0xff]
  %v101 = vld [vmem:[%s3 + $0x168] sm:$0xff]
  %v102 = vld [vmem:[%s3 + $0x170] sm:$0xff]
  %v103 = vld [vmem:[%s3 + $0x178] sm:$0xff]
  %v104 = vld [vmem:[%s3 + $0x180] sm:$0xff]
  %v105 = vld [vmem:[%s3 + $0x188] sm:$0xff]
  %v106 = vld [vmem:[%s3 + $0x190] sm:$0xff]
  %v107 = vld [vmem:[%s3 + $0x198] sm:$0xff]
  %v108 = vld [vmem:[%s3 + $0x1a0] sm:$0xff]
  %v109 = vld [vmem:[%s3 + $0x1a8] sm:$0xff]
  %v110 = vld [vmem:[%s3 + $0x1b0] sm:$0xff]
  %v111 = vld [vmem:[%s3 + $0x1b8] sm:$0xff]
  %v112 = vld [vmem:[%s3 + $0x1c0] sm:$0xff]
  %v113 = vld [vmem:[%s3 + $0x1c8] sm:$0xff]
  %v114 = vld [vmem:[%s3 + $0x1d0] sm:$0xff]
  %v115 = vld [vmem:[%s3 + $0x1d8] sm:$0xff]
  %v116 = vld [vmem:[%s3 + $0x1e0] sm:$0xff]
  %v117 = vld [vmem:[%s3 + $0x1e8] sm:$0xff]
  %v118 = vld [vmem:[%s3 + $0x1f0] sm:$0xff]
  %v119 = vld [vmem:[%s3 + $0x1f8] sm:$0xff]
  %v120 = vld [vmem:[%s4] sm:$0xf]
  %v121 = vpack.c.bf16 %v48, %v48
  %v122 = vpack.c.bf16 %v49, %v49
  %v123 = vpack.c.bf16 %v50, %v50
  %v124 = vpack.c.bf16 %v51, %v51
  %v125 = vld [vmem:[%s2] sm:$0xf]
  %v126 = vld [vmem:[%s2 + $0x4] sm:$0xf]
  %v127 = vld [vmem:[%s2 + $0x8] sm:$0xf]
  %v128 = vld [vmem:[%s2 + $0xc] sm:$0xf]
  %v129 = vld [vmem:[%s2 + $0x10] sm:$0xf]
  %v130 = vld [vmem:[%s2 + $0x14] sm:$0xf]
  %v131 = vld [vmem:[%s2 + $0x18] sm:$0xf]
  %v132 = vld [vmem:[%s2 + $0x1c] sm:$0xf]
  %v133 = vld [vmem:[%s2 + $0x20] sm:$0xf]
  %v134 = vld [vmem:[%s2 + $0x24] sm:$0xf]
  %v135 = vld [vmem:[%s2 + $0x28] sm:$0xf]
  %v136 = vld [vmem:[%s2 + $0x2c] sm:$0xf]
  %v137 = vld [vmem:[%s2 + $0x30] sm:$0xf]
  %v138 = vld [vmem:[%s2 + $0x34] sm:$0xf]
  %v139 = vld [vmem:[%s2 + $0x38] sm:$0xf]
  %v140 = vld [vmem:[%s2 + $0x3c] sm:$0xf]
  %v145 = vunpack.c.l.b16 %v121
  %v146 = vunpack.c.l.b16 %v122
  %v147 = vunpack.c.l.b16 %v123
  %v148 = vunpack.c.l.b16 %v124
  %v149 = vpack.c.b16 %v146, %v145
  %v150 = vpack.c.b16 %v148, %v147
  %v169 = vunpack.c.l.b16 %v125
  %v170 = vunpack.c.l.b16 %v126
  %v171 = vunpack.c.l.b16 %v127
  %v172 = vunpack.c.l.b16 %v128
  %v173 = vunpack.c.l.b16 %v129
  %v174 = vunpack.c.l.b16 %v130
  %v175 = vunpack.c.l.b16 %v131
  %v176 = vunpack.c.l.b16 %v132
  %v177 = vunpack.c.l.b16 %v133
  %v178 = vunpack.c.l.b16 %v134
  %v179 = vunpack.c.l.b16 %v135
  %v180 = vunpack.c.l.b16 %v136
  %v181 = vunpack.c.l.b16 %v137
  %v182 = vunpack.c.l.b16 %v138
  %v183 = vunpack.c.l.b16 %v139
  %v184 = vunpack.c.l.b16 %v140
  %v185 = vpack.c.b16 %v170, %v169
  %v186 = vpack.c.b16 %v172, %v171
  %v187 = vpack.c.b16 %v174, %v173
  %v188 = vpack.c.b16 %v176, %v175
  %v189 = vpack.c.b16 %v178, %v177
  %v190 = vpack.c.b16 %v180, %v179
  %v191 = vpack.c.b16 %v182, %v181
  %v192 = vpack.c.b16 %v184, %v183
  %201 = vmatpush.bf16.msra.mxu0 %v192
  %202 = vmatpush.bf16.msra.mxu0 %v191
  %203 = vmatpush.bf16.msra.mxu0 %v190
  %204 = vmatpush.bf16.msra.mxu0 %v189
  %205 = vmatpush.bf16.msra.mxu0 %v188
  %206 = vmatpush.bf16.msra.mxu0 %v187
  %207 = vmatpush.bf16.msra.mxu0 %v186
  %208 = vmatpush.bf16.msra.mxu0 %v185
  %209 = vmatmul.bf16.gmra.mxu0 %v149
  %v210 = vpop.f32.mrf.mxu0
  %v211 = vadd.f32 0.0, %v210
  %v212 = vpop.f32.mrf.mxu0
  %v213 = vadd.f32 0.0, %v212
  %214 = vmatmul.bf16.gmra.mxu0 %v150
  %v215 = vpop.f32.mrf.mxu0
  %v216 = vadd.f32 0.0, %v215
  %v217 = vpop.f32.mrf.mxu0
  %v218 = vadd.f32 0.0, %v217
  %219 = vdwg.mxu0
  %v220 = vpack.c.bf16 %v213, %v211
  %v221 = vpack.c.bf16 %v218, %v216
  %v226 = vunpack.c.l.b16 %v52
  %v227 = vunpack.c.l.b16 %v53
  %v228 = vunpack.c.l.b16 %v54
  %v229 = vunpack.c.l.b16 %v55
  %v230 = vpack.c.b16 %v227, %v226
  %v231 = vpack.c.b16 %v229, %v228
  %vm232 = vcmask 261120
  %v234 = vsel %vm232, %v230, 0
  %v237 = vsel %vm232, %v231, 0
  %239 = vmatpush.bf16.msra.mxu0 0
  %240 = vmatpush.bf16.msra.mxu0 0
  %241 = vmatpush.bf16.msra.mxu0 0
  %242 = vmatpush.bf16.msra.mxu0 0
  %243 = vmatpush.bf16.msra.mxu0 0
  %244 = vmatpush.bf16.msra.mxu0 0
  %245 = vmatpush.bf16.msra.mxu0 %v221
  %246 = vmatpush.bf16.msra.mxu0 %v220
  %247 = vmatmul.bf16.gmra.mxu0 %v234
  %v248 = vpop.f32.mrf.mxu0
  %v249 = vadd.f32 0.0, %v248
  %v250 = vpop.f32.mrf.mxu0
  %v251 = vadd.f32 0.0, %v250
  %252 = vmatmul.bf16.gmra.mxu0 %v237
  %v253 = vpop.f32.mrf.mxu0
  %v254 = vadd.f32 0.0, %v253
  %v255 = vpop.f32.mrf.mxu0
  %v256 = vadd.f32 0.0, %v255
  %257 = vdwg.mxu0
  %v258 = vpack.c.bf16 %v249, %v249
  %v259 = vpack.c.bf16 %v251, %v251
  %v260 = vpack.c.bf16 %v254, %v254
  %v261 = vpack.c.bf16 %v256, %v256
  %v266 = vunpack.c.l.b16 %v258
  %v267 = vunpack.c.l.b16 %v259
  %v268 = vunpack.c.l.b16 %v260
  %v269 = vunpack.c.l.b16 %v261
  %v270 = vpack.c.b16 %v267, %v266
  %v271 = vpack.c.b16 %v269, %v268
  %v275 = vperm.slane %v120, 0
  %v276 = vperm.slane %v120, 1
  %v277 = vperm.slane %v120, 2
  %v278 = vperm.slane %v120, 3
  %v347 = vunpack.c.l.b16 %v56
  %v348 = vunpack.c.h.b16 %v56
  %v349 = vunpack.c.l.b16 %v57
  %v350 = vunpack.c.h.b16 %v57
  %v351 = vunpack.c.l.b16 %v58
  %v352 = vunpack.c.h.b16 %v58
  %v353 = vunpack.c.l.b16 %v59
  %v354 = vunpack.c.h.b16 %v59
  %v355 = vunpack.c.l.b16 %v60
  %v356 = vunpack.c.h.b16 %v60
  %v357 = vunpack.c.l.b16 %v61
  %v358 = vunpack.c.h.b16 %v61
  %v359 = vunpack.c.l.b16 %v62
  %v360 = vunpack.c.h.b16 %v62
  %v361 = vunpack.c.l.b16 %v63
  %v362 = vunpack.c.h.b16 %v63
  %v363 = vunpack.c.l.b16 %v64
  %v364 = vunpack.c.h.b16 %v64
  %v365 = vunpack.c.l.b16 %v65
  %v366 = vunpack.c.h.b16 %v65
  %v367 = vunpack.c.l.b16 %v66
  %v368 = vunpack.c.h.b16 %v66
  %v369 = vunpack.c.l.b16 %v67
  %v370 = vunpack.c.h.b16 %v67
  %v371 = vunpack.c.l.b16 %v68
  %v372 = vunpack.c.h.b16 %v68
  %v373 = vunpack.c.l.b16 %v69
  %v374 = vunpack.c.h.b16 %v69
  %v375 = vunpack.c.l.b16 %v70
  %v376 = vunpack.c.h.b16 %v70
  %v377 = vunpack.c.l.b16 %v71
  %v378 = vunpack.c.h.b16 %v71
  %v379 = vunpack.c.l.b16 %v72
  %v380 = vunpack.c.h.b16 %v72
  %v381 = vunpack.c.l.b16 %v73
  %v382 = vunpack.c.h.b16 %v73
  %v383 = vunpack.c.l.b16 %v74
  %v384 = vunpack.c.h.b16 %v74
  %v385 = vunpack.c.l.b16 %v75
  %v386 = vunpack.c.h.b16 %v75
  %v387 = vunpack.c.l.b16 %v76
  %v388 = vunpack.c.h.b16 %v76
  %v389 = vunpack.c.l.b16 %v77
  %v390 = vunpack.c.h.b16 %v77
  %v391 = vunpack.c.l.b16 %v78
  %v392 = vunpack.c.h.b16 %v78
  %v393 = vunpack.c.l.b16 %v79
  %v394 = vunpack.c.h.b16 %v79
  %v395 = vunpack.c.l.b16 %v80
  %v396 = vunpack.c.h.b16 %v80
  %v397 = vunpack.c.l.b16 %v81
  %v398 = vunpack.c.h.b16 %v81
  %v399 = vunpack.c.l.b16 %v82
  %v400 = vunpack.c.h.b16 %v82
  %v401 = vunpack.c.l.b16 %v83
  %v402 = vunpack.c.h.b16 %v83
  %v403 = vunpack.c.l.b16 %v84
  %v404 = vunpack.c.h.b16 %v84
  %v405 = vunpack.c.l.b16 %v85
  %v406 = vunpack.c.h.b16 %v85
  %v407 = vunpack.c.l.b16 %v86
  %v408 = vunpack.c.h.b16 %v86
  %v409 = vunpack.c.l.b16 %v87
  %v410 = vunpack.c.h.b16 %v87
  %v411 = vunpack.c.l.b16 %v88
  %v412 = vunpack.c.h.b16 %v88
  %v413 = vunpack.c.l.b16 %v89
  %v414 = vunpack.c.h.b16 %v89
  %v415 = vunpack.c.l.b16 %v90
  %v416 = vunpack.c.h.b16 %v90
  %v417 = vunpack.c.l.b16 %v91
  %v418 = vunpack.c.h.b16 %v91
  %v419 = vunpack.c.l.b16 %v92
  %v420 = vunpack.c.h.b16 %v92
  %v421 = vunpack.c.l.b16 %v93
  %v422 = vunpack.c.h.b16 %v93
  %v423 = vunpack.c.l.b16 %v94
  %v424 = vunpack.c.h.b16 %v94
  %v425 = vunpack.c.l.b16 %v95
  %v426 = vunpack.c.h.b16 %v95
  %v427 = vunpack.c.l.b16 %v96
  %v428 = vunpack.c.h.b16 %v96
  %v429 = vunpack.c.l.b16 %v97
  %v430 = vunpack.c.h.b16 %v97
  %v431 = vunpack.c.l.b16 %v98
  %v432 = vunpack.c.h.b16 %v98
  %v433 = vunpack.c.l.b16 %v99
  %v434 = vunpack.c.h.b16 %v99
  %v435 = vunpack.c.l.b16 %v100
  %v436 = vunpack.c.h.b16 %v100
  %v437 = vunpack.c.l.b16 %v101
  %v438 = vunpack.c.h.b16 %v101
  %v439 = vunpack.c.l.b16 %v102
  %v440 = vunpack.c.h.b16 %v102
  %v441 = vunpack.c.l.b16 %v103
  %v442 = vunpack.c.h.b16 %v103
  %v443 = vunpack.c.l.b16 %v104
  %v444 = vunpack.c.h.b16 %v104
  %v445 = vunpack.c.l.b16 %v105
  %v446 = vunpack.c.h.b16 %v105
  %v447 = vunpack.c.l.b16 %v106
  %v448 = vunpack.c.h.b16 %v106
  %v449 = vunpack.c.l.b16 %v107
  %v450 = vunpack.c.h.b16 %v107
  %v451 = vunpack.c.l.b16 %v108
  %v452 = vunpack.c.h.b16 %v108
  %v453 = vunpack.c.l.b16 %v109
  %v454 = vunpack.c.h.b16 %v109
  %v455 = vunpack.c.l.b16 %v110
  %v456 = vunpack.c.h.b16 %v110
  %v457 = vunpack.c.l.b16 %v111
  %v458 = vunpack.c.h.b16 %v111
  %v459 = vunpack.c.l.b16 %v112
  %v460 = vunpack.c.h.b16 %v112
  %v461 = vunpack.c.l.b16 %v113
  %v462 = vunpack.c.h.b16 %v113
  %v463 = vunpack.c.l.b16 %v114
  %v464 = vunpack.c.h.b16 %v114
  %v465 = vunpack.c.l.b16 %v115
  %v466 = vunpack.c.h.b16 %v115
  %v467 = vunpack.c.l.b16 %v116
  %v468 = vunpack.c.h.b16 %v116
  %v469 = vunpack.c.l.b16 %v117
  %v470 = vunpack.c.h.b16 %v117
  %v471 = vunpack.c.l.b16 %v118
  %v472 = vunpack.c.h.b16 %v118
  %v473 = vunpack.c.l.b16 %v119
  %v474 = vunpack.c.h.b16 %v119
  %v475 = vpack.c.b16 %v351, %v347
  %v476 = vpack.c.b16 %v352, %v348
  %v477 = vpack.c.b16 %v353, %v349
  %v478 = vpack.c.b16 %v354, %v350
  %v479 = vpack.c.b16 %v359, %v355
  %v480 = vpack.c.b16 %v360, %v356
  %v481 = vpack.c.b16 %v361, %v357
  %v482 = vpack.c.b16 %v362, %v358
  %v483 = vpack.c.b16 %v367, %v363
  %v484 = vpack.c.b16 %v368, %v364
  %v485 = vpack.c.b16 %v369, %v365
  %v486 = vpack.c.b16 %v370, %v366
  %v487 = vpack.c.b16 %v375, %v371
  %v488 = vpack.c.b16 %v376, %v372
  %v489 = vpack.c.b16 %v377, %v373
  %v490 = vpack.c.b16 %v378, %v374
  %v491 = vpack.c.b16 %v383, %v379
  %v492 = vpack.c.b16 %v384, %v380
  %v493 = vpack.c.b16 %v385, %v381
  %v494 = vpack.c.b16 %v386, %v382
  %v495 = vpack.c.b16 %v391, %v387
  %v496 = vpack.c.b16 %v392, %v388
  %v497 = vpack.c.b16 %v393, %v389
  %v498 = vpack.c.b16 %v394, %v390
  %v499 = vpack.c.b16 %v399, %v395
  %v500 = vpack.c.b16 %v400, %v396
  %v501 = vpack.c.b16 %v401, %v397
  %v502 = vpack.c.b16 %v402, %v398
  %v503 = vpack.c.b16 %v407, %v403
  %v504 = vpack.c.b16 %v408, %v404
  %v505 = vpack.c.b16 %v409, %v405
  %v506 = vpack.c.b16 %v410, %v406
  %v507 = vpack.c.b16 %v415, %v411
  %v508 = vpack.c.b16 %v416, %v412
  %v509 = vpack.c.b16 %v417, %v413
  %v510 = vpack.c.b16 %v418, %v414
  %v511 = vpack.c.b16 %v423, %v419
  %v512 = vpack.c.b16 %v424, %v420
  %v513 = vpack.c.b16 %v425, %v421
  %v514 = vpack.c.b16 %v426, %v422
  %v515 = vpack.c.b16 %v431, %v427
  %v516 = vpack.c.b16 %v432, %v428
  %v517 = vpack.c.b16 %v433, %v429
  %v518 = vpack.c.b16 %v434, %v430
  %v519 = vpack.c.b16 %v439, %v435
  %v520 = vpack.c.b16 %v440, %v436
  %v521 = vpack.c.b16 %v441, %v437
  %v522 = vpack.c.b16 %v442, %v438
  %v523 = vpack.c.b16 %v447, %v443
  %v524 = vpack.c.b16 %v448, %v444
  %v525 = vpack.c.b16 %v449, %v445
  %v526 = vpack.c.b16 %v450, %v446
  %v527 = vpack.c.b16 %v455, %v451
  %v528 = vpack.c.b16 %v456, %v452
  %v529 = vpack.c.b16 %v457, %v453
  %v530 = vpack.c.b16 %v458, %v454
  %v531 = vpack.c.b16 %v463, %v459
  %v532 = vpack.c.b16 %v464, %v460
  %v533 = vpack.c.b16 %v465, %v461
  %v534 = vpack.c.b16 %v466, %v462
  %v535 = vpack.c.b16 %v471, %v467
  %v536 = vpack.c.b16 %v472, %v468
  %v537 = vpack.c.b16 %v473, %v469
  %v538 = vpack.c.b16 %v474, %v470
  %603 = vmatpush.bf16.msra.mxu0 %v503
  %604 = vmatpush.bf16.msra.mxu0 %v499
  %605 = vmatpush.bf16.msra.mxu0 %v495
  %606 = vmatpush.bf16.msra.mxu0 %v491
  %607 = vmatpush.bf16.msra.mxu0 %v487
  %608 = vmatpush.bf16.msra.mxu0 %v483
  %609 = vmatpush.bf16.msra.mxu0 %v479
  %610 = vmatpush.bf16.msra.mxu0 %v475
  %611 = vmatmul.bf16.gmra.mxu0 %v270
  %v612 = vpop.f32.mrf.mxu0
  %v613 = vadd.f32 %v275, %v612
  %v614 = vpop.f32.mrf.mxu0
  %v615 = vadd.f32 %v275, %v614
  %616 = vmatmul.bf16.gmra.mxu0 %v271
  %v617 = vpop.f32.mrf.mxu0
  %v618 = vadd.f32 %v275, %v617
  %v619 = vpop.f32.mrf.mxu0
  %v620 = vadd.f32 %v275, %v619
  %621 = vdwg.mxu0
  %622 = vmatpush.bf16.msra.mxu0 %v535
  %623 = vmatpush.bf16.msra.mxu0 %v531
  %624 = vmatpush.bf16.msra.mxu0 %v527
  %625 = vmatpush.bf16.msra.mxu0 %v523
  %626 = vmatpush.bf16.msra.mxu0 %v519
  %627 = vmatpush.bf16.msra.mxu0 %v515
  %628 = vmatpush.bf16.msra.mxu0 %v511
  %629 = vmatpush.bf16.msra.mxu0 %v507
  %630 = vmatmul.bf16.gmra.mxu0 %v149
  %v631 = vpop.f32.mrf.mxu0
  %v632 = vadd.f32 %v613, %v631
  %v633 = vpop.f32.mrf.mxu0
  %v634 = vadd.f32 %v615, %v633
  %635 = vmatmul.bf16.gmra.mxu0 %v150
  %v636 = vpop.f32.mrf.mxu0
  %v637 = vadd.f32 %v618, %v636
  %v638 = vpop.f32.mrf.mxu0
  %v639 = vadd.f32 %v620, %v638
  %640 = vdwg.mxu0
  %641 = vmatpush.bf16.msra.mxu0 %v504
  %642 = vmatpush.bf16.msra.mxu0 %v500
  %643 = vmatpush.bf16.msra.mxu0 %v496
  %644 = vmatpush.bf16.msra.mxu0 %v492
  %645 = vmatpush.bf16.msra.mxu0 %v488
  %646 = vmatpush.bf16.msra.mxu0 %v484
  %647 = vmatpush.bf16.msra.mxu0 %v480
  %648 = vmatpush.bf16.msra.mxu0 %v476
  %649 = vmatmul.bf16.gmra.mxu0 %v270
  %v650 = vpop.f32.mrf.mxu0
  %v651 = vadd.f32 %v276, %v650
  %v652 = vpop.f32.mrf.mxu0
  %v653 = vadd.f32 %v276, %v652
  %654 = vmatmul.bf16.gmra.mxu0 %v271
  %v655 = vpop.f32.mrf.mxu0
  %v656 = vadd.f32 %v276, %v655
  %v657 = vpop.f32.mrf.mxu0
  %v658 = vadd.f32 %v276, %v657
  %659 = vdwg.mxu0
  %660 = vmatpush.bf16.msra.mxu0 %v536
  %661 = vmatpush.bf16.msra.mxu0 %v532
  %662 = vmatpush.bf16.msra.mxu0 %v528
  %663 = vmatpush.bf16.msra.mxu0 %v524
  %664 = vmatpush.bf16.msra.mxu0 %v520
  %665 = vmatpush.bf16.msra.mxu0 %v516
  %666 = vmatpush.bf16.msra.mxu0 %v512
  %667 = vmatpush.bf16.msra.mxu0 %v508
  %668 = vmatmul.bf16.gmra.mxu0 %v149
  %v669 = vpop.f32.mrf.mxu0
  %v670 = vadd.f32 %v651, %v669
  %v671 = vpop.f32.mrf.mxu0
  %v672 = vadd.f32 %v653, %v671
  %673 = vmatmul.bf16.gmra.mxu0 %v150
  %v674 = vpop.f32.mrf.mxu0
  %v675 = vadd.f32 %v656, %v674
  %v676 = vpop.f32.mrf.mxu0
  %v677 = vadd.f32 %v658, %v676
  %678 = vdwg.mxu0
  %679 = vmatpush.bf16.msra.mxu0 %v505
  %680 = vmatpush.bf16.msra.mxu0 %v501
  %681 = vmatpush.bf16.msra.mxu0 %v497
  %682 = vmatpush.bf16.msra.mxu0 %v493
  %683 = vmatpush.bf16.msra.mxu0 %v489
  %684 = vmatpush.bf16.msra.mxu0 %v485
  %685 = vmatpush.bf16.msra.mxu0 %v481
  %686 = vmatpush.bf16.msra.mxu0 %v477
  %687 = vmatmul.bf16.gmra.mxu0 %v270
  %v688 = vpop.f32.mrf.mxu0
  %v689 = vadd.f32 %v277, %v688
  %v690 = vpop.f32.mrf.mxu0
  %v691 = vadd.f32 %v277, %v690
  %692 = vmatmul.bf16.gmra.mxu0 %v271
  %v693 = vpop.f32.mrf.mxu0
  %v694 = vadd.f32 %v277, %v693
  %v695 = vpop.f32.mrf.mxu0
  %v696 = vadd.f32 %v277, %v695
  %697 = vdwg.mxu0
  %698 = vmatpush.bf16.msra.mxu0 %v537
  %699 = vmatpush.bf16.msra.mxu0 %v533
  %700 = vmatpush.bf16.msra.mxu0 %v529
  %701 = vmatpush.bf16.msra.mxu0 %v525
  %702 = vmatpush.bf16.msra.mxu0 %v521
  %703 = vmatpush.bf16.msra.mxu0 %v517
  %704 = vmatpush.bf16.msra.mxu0 %v513
  %705 = vmatpush.bf16.msra.mxu0 %v509
  %706 = vmatmul.bf16.gmra.mxu0 %v149
  %v707 = vpop.f32.mrf.mxu0
  %v708 = vadd.f32 %v689, %v707
  %v709 = vpop.f32.mrf.mxu0
  %v710 = vadd.f32 %v691, %v709
  %711 = vmatmul.bf16.gmra.mxu0 %v150
  %v712 = vpop.f32.mrf.mxu0
  %v713 = vadd.f32 %v694, %v712
  %v714 = vpop.f32.mrf.mxu0
  %v715 = vadd.f32 %v696, %v714
  %716 = vdwg.mxu0
  %717 = vmatpush.bf16.msra.mxu0 %v506
  %718 = vmatpush.bf16.msra.mxu0 %v502
  %719 = vmatpush.bf16.msra.mxu0 %v498
  %720 = vmatpush.bf16.msra.mxu0 %v494
  %721 = vmatpush.bf16.msra.mxu0 %v490
  %722 = vmatpush.bf16.msra.mxu0 %v486
  %723 = vmatpush.bf16.msra.mxu0 %v482
  %724 = vmatpush.bf16.msra.mxu0 %v478
  %725 = vmatmul.bf16.gmra.mxu0 %v270
  %v726 = vpop.f32.mrf.mxu0
  %v727 = vadd.f32 %v278, %v726
  %v728 = vpop.f32.mrf.mxu0
  %v729 = vadd.f32 %v278, %v728
  %730 = vmatmul.bf16.gmra.mxu0 %v271
  %v731 = vpop.f32.mrf.mxu0
  %v732 = vadd.f32 %v278, %v731
  %v733 = vpop.f32.mrf.mxu0
  %v734 = vadd.f32 %v278, %v733
  %735 = vdwg.mxu0
  %736 = vmatpush.bf16.msra.mxu0 %v538
  %737 = vmatpush.bf16.msra.mxu0 %v534
  %738 = vmatpush.bf16.msra.mxu0 %v530
  %739 = vmatpush.bf16.msra.mxu0 %v526
  %740 = vmatpush.bf16.msra.mxu0 %v522
  %741 = vmatpush.bf16.msra.mxu0 %v518
  %742 = vmatpush.bf16.msra.mxu0 %v514
  %743 = vmatpush.bf16.msra.mxu0 %v510
  %744 = vmatmul.bf16.gmra.mxu0 %v149
  %v745 = vpop.f32.mrf.mxu0
  %v746 = vadd.f32 %v727, %v745
  %v747 = vpop.f32.mrf.mxu0
  %v748 = vadd.f32 %v729, %v747
  %749 = vmatmul.bf16.gmra.mxu0 %v150
  %v750 = vpop.f32.mrf.mxu0
  %v751 = vadd.f32 %v732, %v750
  %v752 = vpop.f32.mrf.mxu0
  %v753 = vadd.f32 %v734, %v752
  %754 = vdwg.mxu0
  %v755 = vxor.u32 %v632, 2147483648
  %v756 = vxor.u32 %v634, 2147483648
  %v757 = vxor.u32 %v637, 2147483648
  %v758 = vxor.u32 %v639, 2147483648
  %v759 = vmul.f32 %v755, 1.442695
  %v760 = vpow.pop %v759
  %v761 = vmul.f32 %v756, 1.442695
  %v762 = vpow.pop %v761
  %v763 = vmul.f32 %v757, 1.442695
  %v764 = vpow.pop %v763
  %v765 = vmul.f32 %v758, 1.442695
  %v766 = vpow.pop %v765
  %v767 = vadd.f32 %v760, 1.0
  %v768 = vadd.f32 %v762, 1.0
  %v769 = vadd.f32 %v764, 1.0
  %v770 = vadd.f32 %v766, 1.0
  %v771 = vrcp.pop %v767
  %v772 = vmul.f32 %v767, %v771
  %v773 = vsub.f32 1.0, %v772
  %v774 = vmul.f32 %v771, %v773
  %v775 = vadd.f32 %v771, %v774
  %vm776 = vweird.f32 %v767
  %vm777 = vweird.f32 %v771
  %vm778 = vmor %vm776, %vm777
  %v779 = vsel %vm778, %v771, %v775
  %v780 = vand.u32 2147483647, %v767
  %vm781 = vcmp.eq.f32.partialorder %v780, 8.507059e+37
  %v782 = vand.u32 %v767, 2147483648
  %v783 = vor.u32 1.1754944e-38, %v782
  %v784 = vsel %vm781, %v783, %v779
  %v785 = vmul.f32 1.0, %v784
  %v786 = vrcp.pop %v768
  %v787 = vmul.f32 %v768, %v786
  %v788 = vsub.f32 1.0, %v787
  %v789 = vmul.f32 %v786, %v788
  %v790 = vadd.f32 %v786, %v789
  %vm791 = vweird.f32 %v768
  %vm792 = vweird.f32 %v786
  %vm793 = vmor %vm791, %vm792
  %v794 = vsel %vm793, %v786, %v790
  %v795 = vand.u32 2147483647, %v768
  %vm796 = vcmp.eq.f32.partialorder %v795, 8.507059e+37
  %v797 = vand.u32 %v768, 2147483648
  %v798 = vor.u32 1.1754944e-38, %v797
  %v799 = vsel %vm796, %v798, %v794
  %v800 = vmul.f32 1.0, %v799
  %v801 = vrcp.pop %v769
  %v802 = vmul.f32 %v769, %v801
  %v803 = vsub.f32 1.0, %v802
  %v804 = vmul.f32 %v801, %v803
  %v805 = vadd.f32 %v801, %v804
  %vm806 = vweird.f32 %v769
  %vm807 = vweird.f32 %v801
  %vm808 = vmor %vm806, %vm807
  %v809 = vsel %vm808, %v801, %v805
  %v810 = vand.u32 2147483647, %v769
  %vm811 = vcmp.eq.f32.partialorder %v810, 8.507059e+37
  %v812 = vand.u32 %v769, 2147483648
  %v813 = vor.u32 1.1754944e-38, %v812
  %v814 = vsel %vm811, %v813, %v809
  %v815 = vmul.f32 1.0, %v814
  %v816 = vrcp.pop %v770
  %v817 = vmul.f32 %v770, %v816
  %v818 = vsub.f32 1.0, %v817
  %v819 = vmul.f32 %v816, %v818
  %v820 = vadd.f32 %v816, %v819
  %vm821 = vweird.f32 %v770
  %vm822 = vweird.f32 %v816
  %vm823 = vmor %vm821, %vm822
  %v824 = vsel %vm823, %v816, %v820
  %v825 = vand.u32 2147483647, %v770
  %vm826 = vcmp.eq.f32.partialorder %v825, 8.507059e+37
  %v827 = vand.u32 %v770, 2147483648
  %v828 = vor.u32 1.1754944e-38, %v827
  %v829 = vsel %vm826, %v828, %v824
  %v830 = vmul.f32 1.0, %v829
  %v831 = vxor.u32 %v670, 2147483648
  %v832 = vxor.u32 %v672, 2147483648
  %v833 = vxor.u32 %v675, 2147483648
  %v834 = vxor.u32 %v677, 2147483648
  %v835 = vmul.f32 %v831, 1.442695
  %v836 = vpow.pop %v835
  %v837 = vmul.f32 %v832, 1.442695
  %v838 = vpow.pop %v837
  %v839 = vmul.f32 %v833, 1.442695
  %v840 = vpow.pop %v839
  %v841 = vmul.f32 %v834, 1.442695
  %v842 = vpow.pop %v841
  %v843 = vadd.f32 %v836, 1.0
  %v844 = vadd.f32 %v838, 1.0
  %v845 = vadd.f32 %v840, 1.0
  %v846 = vadd.f32 %v842, 1.0
  %v847 = vrcp.pop %v843
  %v848 = vmul.f32 %v843, %v847
  %v849 = vsub.f32 1.0, %v848
  %v850 = vmul.f32 %v847, %v849
  %v851 = vadd.f32 %v847, %v850
  %vm852 = vweird.f32 %v843
  %vm853 = vweird.f32 %v847
  %vm854 = vmor %vm852, %vm853
  %v855 = vsel %vm854, %v847, %v851
  %v856 = vand.u32 2147483647, %v843
  %vm857 = vcmp.eq.f32.partialorder %v856, 8.507059e+37
  %v858 = vand.u32 %v843, 2147483648
  %v859 = vor.u32 1.1754944e-38, %v858
  %v860 = vsel %vm857, %v859, %v855
  %v861 = vmul.f32 1.0, %v860
  %v862 = vrcp.pop %v844
  %v863 = vmul.f32 %v844, %v862
  %v864 = vsub.f32 1.0, %v863
  %v865 = vmul.f32 %v862, %v864
  %v866 = vadd.f32 %v862, %v865
  %vm867 = vweird.f32 %v844
  %vm868 = vweird.f32 %v862
  %vm869 = vmor %vm867, %vm868
  %v870 = vsel %vm869, %v862, %v866
  %v871 = vand.u32 2147483647, %v844
  %vm872 = vcmp.eq.f32.partialorder %v871, 8.507059e+37
  %v873 = vand.u32 %v844, 2147483648
  %v874 = vor.u32 1.1754944e-38, %v873
  %v875 = vsel %vm872, %v874, %v870
  %v876 = vmul.f32 1.0, %v875
  %v877 = vrcp.pop %v845
  %v878 = vmul.f32 %v845, %v877
  %v879 = vsub.f32 1.0, %v878
  %v880 = vmul.f32 %v877, %v879
  %v881 = vadd.f32 %v877, %v880
  %vm882 = vweird.f32 %v845
  %vm883 = vweird.f32 %v877
  %vm884 = vmor %vm882, %vm883
  %v885 = vsel %vm884, %v877, %v881
  %v886 = vand.u32 2147483647, %v845
  %vm887 = vcmp.eq.f32.partialorder %v886, 8.507059e+37
  %v888 = vand.u32 %v845, 2147483648
  %v889 = vor.u32 1.1754944e-38, %v888
  %v890 = vsel %vm887, %v889, %v885
  %v891 = vmul.f32 1.0, %v890
  %v892 = vrcp.pop %v846
  %v893 = vmul.f32 %v846, %v892
  %v894 = vsub.f32 1.0, %v893
  %v895 = vmul.f32 %v892, %v894
  %v896 = vadd.f32 %v892, %v895
  %vm897 = vweird.f32 %v846
  %vm898 = vweird.f32 %v892
  %vm899 = vmor %vm897, %vm898
  %v900 = vsel %vm899, %v892, %v896
  %v901 = vand.u32 2147483647, %v846
  %vm902 = vcmp.eq.f32.partialorder %v901, 8.507059e+37
  %v903 = vand.u32 %v846, 2147483648
  %v904 = vor.u32 1.1754944e-38, %v903
  %v905 = vsel %vm902, %v904, %v900
  %v906 = vmul.f32 1.0, %v905
  %v907 = vmul.f32 %v785, %v746
  %v908 = vmul.f32 %v800, %v748
  %v909 = vmul.f32 %v815, %v751
  %v910 = vmul.f32 %v830, %v753
  %v911 = vadd.f32 %v708, %v907
  %v912 = vadd.f32 %v710, %v908
  %v913 = vadd.f32 %v713, %v909
  %v914 = vadd.f32 %v715, %v910
  %v915 = vtanh.pop %v911
  %v916 = vtanh.pop %v912
  %v917 = vtanh.pop %v913
  %v918 = vtanh.pop %v914
  %v919 = vsub.f32 1.0, %v861
  %v920 = vsub.f32 1.0, %v876
  %v921 = vsub.f32 1.0, %v891
  %v922 = vsub.f32 1.0, %v906
  %v923 = vmul.f32 %v919, %v915
  %v924 = vmul.f32 %v920, %v916
  %v925 = vmul.f32 %v921, %v917
  %v926 = vmul.f32 %v922, %v918
  %v927 = vmul.f32 %v861, %v48
  %v928 = vmul.f32 %v876, %v49
  %v929 = vmul.f32 %v891, %v50
  %v930 = vmul.f32 %v906, %v51
  %v931 = vadd.f32 %v923, %v927
  %v932 = vadd.f32 %v924, %v928
  %v933 = vadd.f32 %v925, %v929
  %v934 = vadd.f32 %v926, %v930
  %v935 = vpack.c.bf16 %v931, %v931
  %v936 = vpack.c.bf16 %v932, %v932
  %v937 = vpack.c.bf16 %v933, %v933
  %v938 = vpack.c.bf16 %v934, %v934
  %s939 = scalar_lea.vmem %s2, 64
  %v940 = vld [vmem:[%s939] sm:$0xf]
  %v941 = vld [vmem:[%s939 + $0x4] sm:$0xf]
  %v942 = vld [vmem:[%s939 + $0x8] sm:$0xf]
  %v943 = vld [vmem:[%s939 + $0xc] sm:$0xf]
  %v944 = vld [vmem:[%s939 + $0x10] sm:$0xf]
  %v945 = vld [vmem:[%s939 + $0x14] sm:$0xf]
  %v946 = vld [vmem:[%s939 + $0x18] sm:$0xf]
  %v947 = vld [vmem:[%s939 + $0x1c] sm:$0xf]
  %v948 = vld [vmem:[%s939 + $0x20] sm:$0xf]
  %v949 = vld [vmem:[%s939 + $0x24] sm:$0xf]
  %v950 = vld [vmem:[%s939 + $0x28] sm:$0xf]
  %v951 = vld [vmem:[%s939 + $0x2c] sm:$0xf]
  %v952 = vld [vmem:[%s939 + $0x30] sm:$0xf]
  %v953 = vld [vmem:[%s939 + $0x34] sm:$0xf]
  %v954 = vld [vmem:[%s939 + $0x38] sm:$0xf]
  %v955 = vld [vmem:[%s939 + $0x3c] sm:$0xf]
  %v960 = vunpack.c.l.b16 %v935
  %v961 = vunpack.c.l.b16 %v936
  %v962 = vunpack.c.l.b16 %v937
  %v963 = vunpack.c.l.b16 %v938
  %v964 = vpack.c.b16 %v961, %v960
  %v965 = vpack.c.b16 %v963, %v962
  %v984 = vunpack.c.l.b16 %v940
  %v985 = vunpack.c.l.b16 %v941
  %v986 = vunpack.c.l.b16 %v942
  %v987 = vunpack.c.l.b16 %v943
  %v988 = vunpack.c.l.b16 %v944
  %v989 = vunpack.c.l.b16 %v945
  %v990 = vunpack.c.l.b16 %v946
  %v991 = vunpack.c.l.b16 %v947
  %v992 = vunpack.c.l.b16 %v948
  %v993 = vunpack.c.l.b16 %v949
  %v994 = vunpack.c.l.b16 %v950
  %v995 = vunpack.c.l.b16 %v951
  %v996 = vunpack.c.l.b16 %v952
  %v997 = vunpack.c.l.b16 %v953
  %v998 = vunpack.c.l.b16 %v954
  %v999 = vunpack.c.l.b16 %v955
  %v1000 = vpack.c.b16 %v985, %v984
  %v1001 = vpack.c.b16 %v987, %v986
  %v1002 = vpack.c.b16 %v989, %v988
  %v1003 = vpack.c.b16 %v991, %v990
  %v1004 = vpack.c.b16 %v993, %v992
  %v1005 = vpack.c.b16 %v995, %v994
  %v1006 = vpack.c.b16 %v997, %v996
  %v1007 = vpack.c.b16 %v999, %v998
  %1016 = vmatpush.bf16.msra.mxu0 %v1007
  %1017 = vmatpush.bf16.msra.mxu0 %v1006
  %1018 = vmatpush.bf16.msra.mxu0 %v1005
  %1019 = vmatpush.bf16.msra.mxu0 %v1004
  %1020 = vmatpush.bf16.msra.mxu0 %v1003
  %1021 = vmatpush.bf16.msra.mxu0 %v1002
  %1022 = vmatpush.bf16.msra.mxu0 %v1001
  %1023 = vmatpush.bf16.msra.mxu0 %v1000
  %1024 = vmatmul.bf16.gmra.mxu0 %v964
  %v1025 = vpop.f32.mrf.mxu0
  %v1026 = vadd.f32 0.0, %v1025
  %v1027 = vpop.f32.mrf.mxu0
  %v1028 = vadd.f32 0.0, %v1027
  %1029 = vmatmul.bf16.gmra.mxu0 %v965
  %v1030 = vpop.f32.mrf.mxu0
  %v1031 = vadd.f32 0.0, %v1030
  %v1032 = vpop.f32.mrf.mxu0
  %v1033 = vadd.f32 0.0, %v1032
  %1034 = vdwg.mxu0
  %v1035 = vpack.c.bf16 %v1028, %v1026
  %v1036 = vpack.c.bf16 %v1033, %v1031
  %1037 = vmatpush.bf16.msra.mxu0 0
  %1038 = vmatpush.bf16.msra.mxu0 0
  %1039 = vmatpush.bf16.msra.mxu0 0
  %1040 = vmatpush.bf16.msra.mxu0 0
  %1041 = vmatpush.bf16.msra.mxu0 0
  %1042 = vmatpush.bf16.msra.mxu0 0
  %1043 = vmatpush.bf16.msra.mxu0 %v1036
  %1044 = vmatpush.bf16.msra.mxu0 %v1035
  %1045 = vmatmul.bf16.gmra.mxu0 %v234
  %v1046 = vpop.f32.mrf.mxu0
  %v1047 = vadd.f32 0.0, %v1046
  %v1048 = vpop.f32.mrf.mxu0
  %v1049 = vadd.f32 0.0, %v1048
  %1050 = vmatmul.bf16.gmra.mxu0 %v237
  %v1051 = vpop.f32.mrf.mxu0
  %v1052 = vadd.f32 0.0, %v1051
  %v1053 = vpop.f32.mrf.mxu0
  %v1054 = vadd.f32 0.0, %v1053
  %1055 = vdwg.mxu0
  %v1056 = vpack.c.bf16 %v1047, %v1047
  %v1057 = vpack.c.bf16 %v1049, %v1049
  %v1058 = vpack.c.bf16 %v1052, %v1052
  %v1059 = vpack.c.bf16 %v1054, %v1054
  %v1064 = vunpack.c.l.b16 %v1056
  %v1065 = vunpack.c.l.b16 %v1057
  %v1066 = vunpack.c.l.b16 %v1058
  %v1067 = vunpack.c.l.b16 %v1059
  %v1068 = vpack.c.b16 %v1065, %v1064
  %v1069 = vpack.c.b16 %v1067, %v1066
  %1072 = vmatpush.bf16.msra.mxu0 %v503
  %1073 = vmatpush.bf16.msra.mxu0 %v499
  %1074 = vmatpush.bf16.msra.mxu0 %v495
  %1075 = vmatpush.bf16.msra.mxu0 %v491
  %1076 = vmatpush.bf16.msra.mxu0 %v487
  %1077 = vmatpush.bf16.msra.mxu0 %v483
  %1078 = vmatpush.bf16.msra.mxu0 %v479
  %1079 = vmatpush.bf16.msra.mxu0 %v475
  %1080 = vmatmul.bf16.gmra.mxu0 %v1068
  %v1081 = vpop.f32.mrf.mxu0
  %v1082 = vadd.f32 %v275, %v1081
  %v1083 = vpop.f32.mrf.mxu0
  %v1084 = vadd.f32 %v275, %v1083
  %1085 = vmatmul.bf16.gmra.mxu0 %v1069
  %v1086 = vpop.f32.mrf.mxu0
  %v1087 = vadd.f32 %v275, %v1086
  %v1088 = vpop.f32.mrf.mxu0
  %v1089 = vadd.f32 %v275, %v1088
  %1090 = vdwg.mxu0
  %1091 = vmatpush.bf16.msra.mxu0 %v535
  %1092 = vmatpush.bf16.msra.mxu0 %v531
  %1093 = vmatpush.bf16.msra.mxu0 %v527
  %1094 = vmatpush.bf16.msra.mxu0 %v523
  %1095 = vmatpush.bf16.msra.mxu0 %v519
  %1096 = vmatpush.bf16.msra.mxu0 %v515
  %1097 = vmatpush.bf16.msra.mxu0 %v511
  %1098 = vmatpush.bf16.msra.mxu0 %v507
  %1099 = vmatmul.bf16.gmra.mxu0 %v964
  %v1100 = vpop.f32.mrf.mxu0
  %v1101 = vadd.f32 %v1082, %v1100
  %v1102 = vpop.f32.mrf.mxu0
  %v1103 = vadd.f32 %v1084, %v1102
  %1104 = vmatmul.bf16.gmra.mxu0 %v965
  %v1105 = vpop.f32.mrf.mxu0
  %v1106 = vadd.f32 %v1087, %v1105
  %v1107 = vpop.f32.mrf.mxu0
  %v1108 = vadd.f32 %v1089, %v1107
  %1109 = vdwg.mxu0
  %1110 = vmatpush.bf16.msra.mxu0 %v504
  %1111 = vmatpush.bf16.msra.mxu0 %v500
  %1112 = vmatpush.bf16.msra.mxu0 %v496
  %1113 = vmatpush.bf16.msra.mxu0 %v492
  %1114 = vmatpush.bf16.msra.mxu0 %v488
  %1115 = vmatpush.bf16.msra.mxu0 %v484
  %1116 = vmatpush.bf16.msra.mxu0 %v480
  %1117 = vmatpush.bf16.msra.mxu0 %v476
  %1118 = vmatmul.bf16.gmra.mxu0 %v1068
  %v1119 = vpop.f32.mrf.mxu0
  %v1120 = vadd.f32 %v276, %v1119
  %v1121 = vpop.f32.mrf.mxu0
  %v1122 = vadd.f32 %v276, %v1121
  %1123 = vmatmul.bf16.gmra.mxu0 %v1069
  %v1124 = vpop.f32.mrf.mxu0
  %v1125 = vadd.f32 %v276, %v1124
  %v1126 = vpop.f32.mrf.mxu0
  %v1127 = vadd.f32 %v276, %v1126
  %1128 = vdwg.mxu0
  %1129 = vmatpush.bf16.msra.mxu0 %v536
  %1130 = vmatpush.bf16.msra.mxu0 %v532
  %1131 = vmatpush.bf16.msra.mxu0 %v528
  %1132 = vmatpush.bf16.msra.mxu0 %v524
  %1133 = vmatpush.bf16.msra.mxu0 %v520
  %1134 = vmatpush.bf16.msra.mxu0 %v516
  %1135 = vmatpush.bf16.msra.mxu0 %v512
  %1136 = vmatpush.bf16.msra.mxu0 %v508
  %1137 = vmatmul.bf16.gmra.mxu0 %v964
  %v1138 = vpop.f32.mrf.mxu0
  %v1139 = vadd.f32 %v1120, %v1138
  %v1140 = vpop.f32.mrf.mxu0
  %v1141 = vadd.f32 %v1122, %v1140
  %1142 = vmatmul.bf16.gmra.mxu0 %v965
  %v1143 = vpop.f32.mrf.mxu0
  %v1144 = vadd.f32 %v1125, %v1143
  %v1145 = vpop.f32.mrf.mxu0
  %v1146 = vadd.f32 %v1127, %v1145
  %1147 = vdwg.mxu0
  %1148 = vmatpush.bf16.msra.mxu0 %v505
  %1149 = vmatpush.bf16.msra.mxu0 %v501
  %1150 = vmatpush.bf16.msra.mxu0 %v497
  %1151 = vmatpush.bf16.msra.mxu0 %v493
  %1152 = vmatpush.bf16.msra.mxu0 %v489
  %1153 = vmatpush.bf16.msra.mxu0 %v485
  %1154 = vmatpush.bf16.msra.mxu0 %v481
  %1155 = vmatpush.bf16.msra.mxu0 %v477
  %1156 = vmatmul.bf16.gmra.mxu0 %v1068
  %v1157 = vpop.f32.mrf.mxu0
  %v1158 = vadd.f32 %v277, %v1157
  %v1159 = vpop.f32.mrf.mxu0
  %v1160 = vadd.f32 %v277, %v1159
  %1161 = vmatmul.bf16.gmra.mxu0 %v1069
  %v1162 = vpop.f32.mrf.mxu0
  %v1163 = vadd.f32 %v277, %v1162
  %v1164 = vpop.f32.mrf.mxu0
  %v1165 = vadd.f32 %v277, %v1164
  %1166 = vdwg.mxu0
  %1167 = vmatpush.bf16.msra.mxu0 %v537
  %1168 = vmatpush.bf16.msra.mxu0 %v533
  %1169 = vmatpush.bf16.msra.mxu0 %v529
  %1170 = vmatpush.bf16.msra.mxu0 %v525
  %1171 = vmatpush.bf16.msra.mxu0 %v521
  %1172 = vmatpush.bf16.msra.mxu0 %v517
  %1173 = vmatpush.bf16.msra.mxu0 %v513
  %1174 = vmatpush.bf16.msra.mxu0 %v509
  %1175 = vmatmul.bf16.gmra.mxu0 %v964
  %v1176 = vpop.f32.mrf.mxu0
  %v1177 = vadd.f32 %v1158, %v1176
  %v1178 = vpop.f32.mrf.mxu0
  %v1179 = vadd.f32 %v1160, %v1178
  %1180 = vmatmul.bf16.gmra.mxu0 %v965
  %v1181 = vpop.f32.mrf.mxu0
  %v1182 = vadd.f32 %v1163, %v1181
  %v1183 = vpop.f32.mrf.mxu0
  %v1184 = vadd.f32 %v1165, %v1183
  %1185 = vdwg.mxu0
  %1186 = vmatpush.bf16.msra.mxu0 %v506
  %1187 = vmatpush.bf16.msra.mxu0 %v502
  %1188 = vmatpush.bf16.msra.mxu0 %v498
  %1189 = vmatpush.bf16.msra.mxu0 %v494
  %1190 = vmatpush.bf16.msra.mxu0 %v490
  %1191 = vmatpush.bf16.msra.mxu0 %v486
  %1192 = vmatpush.bf16.msra.mxu0 %v482
  %1193 = vmatpush.bf16.msra.mxu0 %v478
  %1194 = vmatmul.bf16.gmra.mxu0 %v1068
  %v1195 = vpop.f32.mrf.mxu0
  %v1196 = vadd.f32 %v278, %v1195
  %v1197 = vpop.f32.mrf.mxu0
  %v1198 = vadd.f32 %v278, %v1197
  %1199 = vmatmul.bf16.gmra.mxu0 %v1069
  %v1200 = vpop.f32.mrf.mxu0
  %v1201 = vadd.f32 %v278, %v1200
  %v1202 = vpop.f32.mrf.mxu0
  %v1203 = vadd.f32 %v278, %v1202
  %1204 = vdwg.mxu0
  %1205 = vmatpush.bf16.msra.mxu0 %v538
  %1206 = vmatpush.bf16.msra.mxu0 %v534
  %1207 = vmatpush.bf16.msra.mxu0 %v530
  %1208 = vmatpush.bf16.msra.mxu0 %v526
  %1209 = vmatpush.bf16.msra.mxu0 %v522
  %1210 = vmatpush.bf16.msra.mxu0 %v518
  %1211 = vmatpush.bf16.msra.mxu0 %v514
  %1212 = vmatpush.bf16.msra.mxu0 %v510
  %1213 = vmatmul.bf16.gmra.mxu0 %v964
  %v1214 = vpop.f32.mrf.mxu0
  %v1215 = vadd.f32 %v1196, %v1214
  %v1216 = vpop.f32.mrf.mxu0
  %v1217 = vadd.f32 %v1198, %v1216
  %1218 = vmatmul.bf16.gmra.mxu0 %v965
  %v1219 = vpop.f32.mrf.mxu0
  %v1220 = vadd.f32 %v1201, %v1219
  %v1221 = vpop.f32.mrf.mxu0
  %v1222 = vadd.f32 %v1203, %v1221
  %1223 = vdwg.mxu0
  %v1224 = vxor.u32 %v1101, 2147483648
  %v1225 = vxor.u32 %v1103, 2147483648
  %v1226 = vxor.u32 %v1106, 2147483648
  %v1227 = vxor.u32 %v1108, 2147483648
  %v1228 = vmul.f32 %v1224, 1.442695
  %v1229 = vpow.pop %v1228
  %v1230 = vmul.f32 %v1225, 1.442695
  %v1231 = vpow.pop %v1230
  %v1232 = vmul.f32 %v1226, 1.442695
  %v1233 = vpow.pop %v1232
  %v1234 = vmul.f32 %v1227, 1.442695
  %v1235 = vpow.pop %v1234
  %v1236 = vadd.f32 %v1229, 1.0
  %v1237 = vadd.f32 %v1231, 1.0
  %v1238 = vadd.f32 %v1233, 1.0
  %v1239 = vadd.f32 %v1235, 1.0
  %v1240 = vrcp.pop %v1236
  %v1241 = vmul.f32 %v1236, %v1240
  %v1242 = vsub.f32 1.0, %v1241
  %v1243 = vmul.f32 %v1240, %v1242
  %v1244 = vadd.f32 %v1240, %v1243
  %vm1245 = vweird.f32 %v1236
  %vm1246 = vweird.f32 %v1240
  %vm1247 = vmor %vm1245, %vm1246
  %v1248 = vsel %vm1247, %v1240, %v1244
  %v1249 = vand.u32 2147483647, %v1236
  %vm1250 = vcmp.eq.f32.partialorder %v1249, 8.507059e+37
  %v1251 = vand.u32 %v1236, 2147483648
  %v1252 = vor.u32 1.1754944e-38, %v1251
  %v1253 = vsel %vm1250, %v1252, %v1248
  %v1254 = vmul.f32 1.0, %v1253
  %v1255 = vrcp.pop %v1237
  %v1256 = vmul.f32 %v1237, %v1255
  %v1257 = vsub.f32 1.0, %v1256
  %v1258 = vmul.f32 %v1255, %v1257
  %v1259 = vadd.f32 %v1255, %v1258
  %vm1260 = vweird.f32 %v1237
  %vm1261 = vweird.f32 %v1255
  %vm1262 = vmor %vm1260, %vm1261
  %v1263 = vsel %vm1262, %v1255, %v1259
  %v1264 = vand.u32 2147483647, %v1237
  %vm1265 = vcmp.eq.f32.partialorder %v1264, 8.507059e+37
  %v1266 = vand.u32 %v1237, 2147483648
  %v1267 = vor.u32 1.1754944e-38, %v1266
  %v1268 = vsel %vm1265, %v1267, %v1263
  %v1269 = vmul.f32 1.0, %v1268
  %v1270 = vrcp.pop %v1238
  %v1271 = vmul.f32 %v1238, %v1270
  %v1272 = vsub.f32 1.0, %v1271
  %v1273 = vmul.f32 %v1270, %v1272
  %v1274 = vadd.f32 %v1270, %v1273
  %vm1275 = vweird.f32 %v1238
  %vm1276 = vweird.f32 %v1270
  %vm1277 = vmor %vm1275, %vm1276
  %v1278 = vsel %vm1277, %v1270, %v1274
  %v1279 = vand.u32 2147483647, %v1238
  %vm1280 = vcmp.eq.f32.partialorder %v1279, 8.507059e+37
  %v1281 = vand.u32 %v1238, 2147483648
  %v1282 = vor.u32 1.1754944e-38, %v1281
  %v1283 = vsel %vm1280, %v1282, %v1278
  %v1284 = vmul.f32 1.0, %v1283
  %v1285 = vrcp.pop %v1239
  %v1286 = vmul.f32 %v1239, %v1285
  %v1287 = vsub.f32 1.0, %v1286
  %v1288 = vmul.f32 %v1285, %v1287
  %v1289 = vadd.f32 %v1285, %v1288
  %vm1290 = vweird.f32 %v1239
  %vm1291 = vweird.f32 %v1285
  %vm1292 = vmor %vm1290, %vm1291
  %v1293 = vsel %vm1292, %v1285, %v1289
  %v1294 = vand.u32 2147483647, %v1239
  %vm1295 = vcmp.eq.f32.partialorder %v1294, 8.507059e+37
  %v1296 = vand.u32 %v1239, 2147483648
  %v1297 = vor.u32 1.1754944e-38, %v1296
  %v1298 = vsel %vm1295, %v1297, %v1293
  %v1299 = vmul.f32 1.0, %v1298
  %v1300 = vxor.u32 %v1139, 2147483648
  %v1301 = vxor.u32 %v1141, 2147483648
  %v1302 = vxor.u32 %v1144, 2147483648
  %v1303 = vxor.u32 %v1146, 2147483648
  %v1304 = vmul.f32 %v1300, 1.442695
  %v1305 = vpow.pop %v1304
  %v1306 = vmul.f32 %v1301, 1.442695
  %v1307 = vpow.pop %v1306
  %v1308 = vmul.f32 %v1302, 1.442695
  %v1309 = vpow.pop %v1308
  %v1310 = vmul.f32 %v1303, 1.442695
  %v1311 = vpow.pop %v1310
  %v1312 = vadd.f32 %v1305, 1.0
  %v1313 = vadd.f32 %v1307, 1.0
  %v1314 = vadd.f32 %v1309, 1.0
  %v1315 = vadd.f32 %v1311, 1.0
  %v1316 = vrcp.pop %v1312
  %v1317 = vmul.f32 %v1312, %v1316
  %v1318 = vsub.f32 1.0, %v1317
  %v1319 = vmul.f32 %v1316, %v1318
  %v1320 = vadd.f32 %v1316, %v1319
  %vm1321 = vweird.f32 %v1312
  %vm1322 = vweird.f32 %v1316
  %vm1323 = vmor %vm1321, %vm1322
  %v1324 = vsel %vm1323, %v1316, %v1320
  %v1325 = vand.u32 2147483647, %v1312
  %vm1326 = vcmp.eq.f32.partialorder %v1325, 8.507059e+37
  %v1327 = vand.u32 %v1312, 2147483648
  %v1328 = vor.u32 1.1754944e-38, %v1327
  %v1329 = vsel %vm1326, %v1328, %v1324
  %v1330 = vmul.f32 1.0, %v1329
  %v1331 = vrcp.pop %v1313
  %v1332 = vmul.f32 %v1313, %v1331
  %v1333 = vsub.f32 1.0, %v1332
  %v1334 = vmul.f32 %v1331, %v1333
  %v1335 = vadd.f32 %v1331, %v1334
  %vm1336 = vweird.f32 %v1313
  %vm1337 = vweird.f32 %v1331
  %vm1338 = vmor %vm1336, %vm1337
  %v1339 = vsel %vm1338, %v1331, %v1335
  %v1340 = vand.u32 2147483647, %v1313
  %vm1341 = vcmp.eq.f32.partialorder %v1340, 8.507059e+37
  %v1342 = vand.u32 %v1313, 2147483648
  %v1343 = vor.u32 1.1754944e-38, %v1342
  %v1344 = vsel %vm1341, %v1343, %v1339
  %v1345 = vmul.f32 1.0, %v1344
  %v1346 = vrcp.pop %v1314
  %v1347 = vmul.f32 %v1314, %v1346
  %v1348 = vsub.f32 1.0, %v1347
  %v1349 = vmul.f32 %v1346, %v1348
  %v1350 = vadd.f32 %v1346, %v1349
  %vm1351 = vweird.f32 %v1314
  %vm1352 = vweird.f32 %v1346
  %vm1353 = vmor %vm1351, %vm1352
  %v1354 = vsel %vm1353, %v1346, %v1350
  %v1355 = vand.u32 2147483647, %v1314
  %vm1356 = vcmp.eq.f32.partialorder %v1355, 8.507059e+37
  %v1357 = vand.u32 %v1314, 2147483648
  %v1358 = vor.u32 1.1754944e-38, %v1357
  %v1359 = vsel %vm1356, %v1358, %v1354
  %v1360 = vmul.f32 1.0, %v1359
  %v1361 = vrcp.pop %v1315
  %v1362 = vmul.f32 %v1315, %v1361
  %v1363 = vsub.f32 1.0, %v1362
  %v1364 = vmul.f32 %v1361, %v1363
  %v1365 = vadd.f32 %v1361, %v1364
  %vm1366 = vweird.f32 %v1315
  %vm1367 = vweird.f32 %v1361
  %vm1368 = vmor %vm1366, %vm1367
  %v1369 = vsel %vm1368, %v1361, %v1365
  %v1370 = vand.u32 2147483647, %v1315
  %vm1371 = vcmp.eq.f32.partialorder %v1370, 8.507059e+37
  %v1372 = vand.u32 %v1315, 2147483648
  %v1373 = vor.u32 1.1754944e-38, %v1372
  %v1374 = vsel %vm1371, %v1373, %v1369
  %v1375 = vmul.f32 1.0, %v1374
  %v1376 = vmul.f32 %v1254, %v1215
  %v1377 = vmul.f32 %v1269, %v1217
  %v1378 = vmul.f32 %v1284, %v1220
  %v1379 = vmul.f32 %v1299, %v1222
  %v1380 = vadd.f32 %v1177, %v1376
  %v1381 = vadd.f32 %v1179, %v1377
  %v1382 = vadd.f32 %v1182, %v1378
  %v1383 = vadd.f32 %v1184, %v1379
  %v1384 = vtanh.pop %v1380
  %v1385 = vtanh.pop %v1381
  %v1386 = vtanh.pop %v1382
  %v1387 = vtanh.pop %v1383
  %v1388 = vsub.f32 1.0, %v1330
  %v1389 = vsub.f32 1.0, %v1345
  %v1390 = vsub.f32 1.0, %v1360
  %v1391 = vsub.f32 1.0, %v1375
  %v1392 = vmul.f32 %v1388, %v1384
  %v1393 = vmul.f32 %v1389, %v1385
  %v1394 = vmul.f32 %v1390, %v1386
  %v1395 = vmul.f32 %v1391, %v1387
  %v1396 = vmul.f32 %v1330, %v931
  %v1397 = vmul.f32 %v1345, %v932
  %v1398 = vmul.f32 %v1360, %v933
  %v1399 = vmul.f32 %v1375, %v934
  %v1400 = vadd.f32 %v1392, %v1396
  %v1401 = vadd.f32 %v1393, %v1397
  %v1402 = vadd.f32 %v1394, %v1398
  %v1403 = vadd.f32 %v1395, %v1399
  %v1404 = vpack.c.bf16 %v1400, %v1400
  %v1405 = vpack.c.bf16 %v1401, %v1401
  %v1406 = vpack.c.bf16 %v1402, %v1402
  %v1407 = vpack.c.bf16 %v1403, %v1403
  %s1408 = scalar_lea.vmem %s2, 128
  %v1409 = vld [vmem:[%s1408] sm:$0xf]
  %v1410 = vld [vmem:[%s1408 + $0x4] sm:$0xf]
  %v1411 = vld [vmem:[%s1408 + $0x8] sm:$0xf]
  %v1412 = vld [vmem:[%s1408 + $0xc] sm:$0xf]
  %v1413 = vld [vmem:[%s1408 + $0x10] sm:$0xf]
  %v1414 = vld [vmem:[%s1408 + $0x14] sm:$0xf]
  %v1415 = vld [vmem:[%s1408 + $0x18] sm:$0xf]
  %v1416 = vld [vmem:[%s1408 + $0x1c] sm:$0xf]
  %v1417 = vld [vmem:[%s1408 + $0x20] sm:$0xf]
  %v1418 = vld [vmem:[%s1408 + $0x24] sm:$0xf]
  %v1419 = vld [vmem:[%s1408 + $0x28] sm:$0xf]
  %v1420 = vld [vmem:[%s1408 + $0x2c] sm:$0xf]
  %v1421 = vld [vmem:[%s1408 + $0x30] sm:$0xf]
  %v1422 = vld [vmem:[%s1408 + $0x34] sm:$0xf]
  %v1423 = vld [vmem:[%s1408 + $0x38] sm:$0xf]
  %v1424 = vld [vmem:[%s1408 + $0x3c] sm:$0xf]
  %v1429 = vunpack.c.l.b16 %v1404
  %v1430 = vunpack.c.l.b16 %v1405
  %v1431 = vunpack.c.l.b16 %v1406
  %v1432 = vunpack.c.l.b16 %v1407
  %v1433 = vpack.c.b16 %v1430, %v1429
  %v1434 = vpack.c.b16 %v1432, %v1431
  %v1453 = vunpack.c.l.b16 %v1409
  %v1454 = vunpack.c.l.b16 %v1410
  %v1455 = vunpack.c.l.b16 %v1411
  %v1456 = vunpack.c.l.b16 %v1412
  %v1457 = vunpack.c.l.b16 %v1413
  %v1458 = vunpack.c.l.b16 %v1414
  %v1459 = vunpack.c.l.b16 %v1415
  %v1460 = vunpack.c.l.b16 %v1416
  %v1461 = vunpack.c.l.b16 %v1417
  %v1462 = vunpack.c.l.b16 %v1418
  %v1463 = vunpack.c.l.b16 %v1419
  %v1464 = vunpack.c.l.b16 %v1420
  %v1465 = vunpack.c.l.b16 %v1421
  %v1466 = vunpack.c.l.b16 %v1422
  %v1467 = vunpack.c.l.b16 %v1423
  %v1468 = vunpack.c.l.b16 %v1424
  %v1469 = vpack.c.b16 %v1454, %v1453
  %v1470 = vpack.c.b16 %v1456, %v1455
  %v1471 = vpack.c.b16 %v1458, %v1457
  %v1472 = vpack.c.b16 %v1460, %v1459
  %v1473 = vpack.c.b16 %v1462, %v1461
  %v1474 = vpack.c.b16 %v1464, %v1463
  %v1475 = vpack.c.b16 %v1466, %v1465
  %v1476 = vpack.c.b16 %v1468, %v1467
  %1485 = vmatpush.bf16.msra.mxu0 %v1476
  %1486 = vmatpush.bf16.msra.mxu0 %v1475
  %1487 = vmatpush.bf16.msra.mxu0 %v1474
  %1488 = vmatpush.bf16.msra.mxu0 %v1473
  %1489 = vmatpush.bf16.msra.mxu0 %v1472
  %1490 = vmatpush.bf16.msra.mxu0 %v1471
  %1491 = vmatpush.bf16.msra.mxu0 %v1470
  %1492 = vmatpush.bf16.msra.mxu0 %v1469
  %1493 = vmatmul.bf16.gmra.mxu0 %v1433
  %v1494 = vpop.f32.mrf.mxu0
  %v1495 = vadd.f32 0.0, %v1494
  %v1496 = vpop.f32.mrf.mxu0
  %v1497 = vadd.f32 0.0, %v1496
  %1498 = vmatmul.bf16.gmra.mxu0 %v1434
  %v1499 = vpop.f32.mrf.mxu0
  %v1500 = vadd.f32 0.0, %v1499
  %v1501 = vpop.f32.mrf.mxu0
  %v1502 = vadd.f32 0.0, %v1501
  %1503 = vdwg.mxu0
  %v1504 = vpack.c.bf16 %v1497, %v1495
  %v1505 = vpack.c.bf16 %v1502, %v1500
  %1506 = vmatpush.bf16.msra.mxu0 0
  %1507 = vmatpush.bf16.msra.mxu0 0
  %1508 = vmatpush.bf16.msra.mxu0 0
  %1509 = vmatpush.bf16.msra.mxu0 0
  %1510 = vmatpush.bf16.msra.mxu0 0
  %1511 = vmatpush.bf16.msra.mxu0 0
  %1512 = vmatpush.bf16.msra.mxu0 %v1505
  %1513 = vmatpush.bf16.msra.mxu0 %v1504
  %1514 = vmatmul.bf16.gmra.mxu0 %v234
  %v1515 = vpop.f32.mrf.mxu0
  %v1516 = vadd.f32 0.0, %v1515
  %v1517 = vpop.f32.mrf.mxu0
  %v1518 = vadd.f32 0.0, %v1517
  %1519 = vmatmul.bf16.gmra.mxu0 %v237
  %v1520 = vpop.f32.mrf.mxu0
  %v1521 = vadd.f32 0.0, %v1520
  %v1522 = vpop.f32.mrf.mxu0
  %v1523 = vadd.f32 0.0, %v1522
  %1524 = vdwg.mxu0
  %v1525 = vpack.c.bf16 %v1516, %v1516
  %v1526 = vpack.c.bf16 %v1518, %v1518
  %v1527 = vpack.c.bf16 %v1521, %v1521
  %v1528 = vpack.c.bf16 %v1523, %v1523
  %v1533 = vunpack.c.l.b16 %v1525
  %v1534 = vunpack.c.l.b16 %v1526
  %v1535 = vunpack.c.l.b16 %v1527
  %v1536 = vunpack.c.l.b16 %v1528
  %v1537 = vpack.c.b16 %v1534, %v1533
  %v1538 = vpack.c.b16 %v1536, %v1535
  %1541 = vmatpush.bf16.msra.mxu0 %v503
  %1542 = vmatpush.bf16.msra.mxu0 %v499
  %1543 = vmatpush.bf16.msra.mxu0 %v495
  %1544 = vmatpush.bf16.msra.mxu0 %v491
  %1545 = vmatpush.bf16.msra.mxu0 %v487
  %1546 = vmatpush.bf16.msra.mxu0 %v483
  %1547 = vmatpush.bf16.msra.mxu0 %v479
  %1548 = vmatpush.bf16.msra.mxu0 %v475
  %1549 = vmatmul.bf16.gmra.mxu0 %v1537
  %v1550 = vpop.f32.mrf.mxu0
  %v1551 = vadd.f32 %v275, %v1550
  %v1552 = vpop.f32.mrf.mxu0
  %v1553 = vadd.f32 %v275, %v1552
  %1554 = vmatmul.bf16.gmra.mxu0 %v1538
  %v1555 = vpop.f32.mrf.mxu0
  %v1556 = vadd.f32 %v275, %v1555
  %v1557 = vpop.f32.mrf.mxu0
  %v1558 = vadd.f32 %v275, %v1557
  %1559 = vdwg.mxu0
  %1560 = vmatpush.bf16.msra.mxu0 %v535
  %1561 = vmatpush.bf16.msra.mxu0 %v531
  %1562 = vmatpush.bf16.msra.mxu0 %v527
  %1563 = vmatpush.bf16.msra.mxu0 %v523
  %1564 = vmatpush.bf16.msra.mxu0 %v519
  %1565 = vmatpush.bf16.msra.mxu0 %v515
  %1566 = vmatpush.bf16.msra.mxu0 %v511
  %1567 = vmatpush.bf16.msra.mxu0 %v507
  %1568 = vmatmul.bf16.gmra.mxu0 %v1433
  %v1569 = vpop.f32.mrf.mxu0
  %v1570 = vadd.f32 %v1551, %v1569
  %v1571 = vpop.f32.mrf.mxu0
  %v1572 = vadd.f32 %v1553, %v1571
  %1573 = vmatmul.bf16.gmra.mxu0 %v1434
  %v1574 = vpop.f32.mrf.mxu0
  %v1575 = vadd.f32 %v1556, %v1574
  %v1576 = vpop.f32.mrf.mxu0
  %v1577 = vadd.f32 %v1558, %v1576
  %1578 = vdwg.mxu0
  %1579 = vmatpush.bf16.msra.mxu0 %v504
  %1580 = vmatpush.bf16.msra.mxu0 %v500
  %1581 = vmatpush.bf16.msra.mxu0 %v496
  %1582 = vmatpush.bf16.msra.mxu0 %v492
  %1583 = vmatpush.bf16.msra.mxu0 %v488
  %1584 = vmatpush.bf16.msra.mxu0 %v484
  %1585 = vmatpush.bf16.msra.mxu0 %v480
  %1586 = vmatpush.bf16.msra.mxu0 %v476
  %1587 = vmatmul.bf16.gmra.mxu0 %v1537
  %v1588 = vpop.f32.mrf.mxu0
  %v1589 = vadd.f32 %v276, %v1588
  %v1590 = vpop.f32.mrf.mxu0
  %v1591 = vadd.f32 %v276, %v1590
  %1592 = vmatmul.bf16.gmra.mxu0 %v1538
  %v1593 = vpop.f32.mrf.mxu0
  %v1594 = vadd.f32 %v276, %v1593
  %v1595 = vpop.f32.mrf.mxu0
  %v1596 = vadd.f32 %v276, %v1595
  %1597 = vdwg.mxu0
  %1598 = vmatpush.bf16.msra.mxu0 %v536
  %1599 = vmatpush.bf16.msra.mxu0 %v532
  %1600 = vmatpush.bf16.msra.mxu0 %v528
  %1601 = vmatpush.bf16.msra.mxu0 %v524
  %1602 = vmatpush.bf16.msra.mxu0 %v520
  %1603 = vmatpush.bf16.msra.mxu0 %v516
  %1604 = vmatpush.bf16.msra.mxu0 %v512
  %1605 = vmatpush.bf16.msra.mxu0 %v508
  %1606 = vmatmul.bf16.gmra.mxu0 %v1433
  %v1607 = vpop.f32.mrf.mxu0
  %v1608 = vadd.f32 %v1589, %v1607
  %v1609 = vpop.f32.mrf.mxu0
  %v1610 = vadd.f32 %v1591, %v1609
  %1611 = vmatmul.bf16.gmra.mxu0 %v1434
  %v1612 = vpop.f32.mrf.mxu0
  %v1613 = vadd.f32 %v1594, %v1612
  %v1614 = vpop.f32.mrf.mxu0
  %v1615 = vadd.f32 %v1596, %v1614
  %1616 = vdwg.mxu0
  %1617 = vmatpush.bf16.msra.mxu0 %v505
  %1618 = vmatpush.bf16.msra.mxu0 %v501
  %1619 = vmatpush.bf16.msra.mxu0 %v497
  %1620 = vmatpush.bf16.msra.mxu0 %v493
  %1621 = vmatpush.bf16.msra.mxu0 %v489
  %1622 = vmatpush.bf16.msra.mxu0 %v485
  %1623 = vmatpush.bf16.msra.mxu0 %v481
  %1624 = vmatpush.bf16.msra.mxu0 %v477
  %1625 = vmatmul.bf16.gmra.mxu0 %v1537
  %v1626 = vpop.f32.mrf.mxu0
  %v1627 = vadd.f32 %v277, %v1626
  %v1628 = vpop.f32.mrf.mxu0
  %v1629 = vadd.f32 %v277, %v1628
  %1630 = vmatmul.bf16.gmra.mxu0 %v1538
  %v1631 = vpop.f32.mrf.mxu0
  %v1632 = vadd.f32 %v277, %v1631
  %v1633 = vpop.f32.mrf.mxu0
  %v1634 = vadd.f32 %v277, %v1633
  %1635 = vdwg.mxu0
  %1636 = vmatpush.bf16.msra.mxu0 %v537
  %1637 = vmatpush.bf16.msra.mxu0 %v533
  %1638 = vmatpush.bf16.msra.mxu0 %v529
  %1639 = vmatpush.bf16.msra.mxu0 %v525
  %1640 = vmatpush.bf16.msra.mxu0 %v521
  %1641 = vmatpush.bf16.msra.mxu0 %v517
  %1642 = vmatpush.bf16.msra.mxu0 %v513
  %1643 = vmatpush.bf16.msra.mxu0 %v509
  %1644 = vmatmul.bf16.gmra.mxu0 %v1433
  %v1645 = vpop.f32.mrf.mxu0
  %v1646 = vadd.f32 %v1627, %v1645
  %v1647 = vpop.f32.mrf.mxu0
  %v1648 = vadd.f32 %v1629, %v1647
  %1649 = vmatmul.bf16.gmra.mxu0 %v1434
  %v1650 = vpop.f32.mrf.mxu0
  %v1651 = vadd.f32 %v1632, %v1650
  %v1652 = vpop.f32.mrf.mxu0
  %v1653 = vadd.f32 %v1634, %v1652
  %1654 = vdwg.mxu0
  %1655 = vmatpush.bf16.msra.mxu0 %v506
  %1656 = vmatpush.bf16.msra.mxu0 %v502
  %1657 = vmatpush.bf16.msra.mxu0 %v498
  %1658 = vmatpush.bf16.msra.mxu0 %v494
  %1659 = vmatpush.bf16.msra.mxu0 %v490
  %1660 = vmatpush.bf16.msra.mxu0 %v486
  %1661 = vmatpush.bf16.msra.mxu0 %v482
  %1662 = vmatpush.bf16.msra.mxu0 %v478
  %1663 = vmatmul.bf16.gmra.mxu0 %v1537
  %v1664 = vpop.f32.mrf.mxu0
  %v1665 = vadd.f32 %v278, %v1664
  %v1666 = vpop.f32.mrf.mxu0
  %v1667 = vadd.f32 %v278, %v1666
  %1668 = vmatmul.bf16.gmra.mxu0 %v1538
  %v1669 = vpop.f32.mrf.mxu0
  %v1670 = vadd.f32 %v278, %v1669
  %v1671 = vpop.f32.mrf.mxu0
  %v1672 = vadd.f32 %v278, %v1671
  %1673 = vdwg.mxu0
  %1674 = vmatpush.bf16.msra.mxu0 %v538
  %1675 = vmatpush.bf16.msra.mxu0 %v534
  %1676 = vmatpush.bf16.msra.mxu0 %v530
  %1677 = vmatpush.bf16.msra.mxu0 %v526
  %1678 = vmatpush.bf16.msra.mxu0 %v522
  %1679 = vmatpush.bf16.msra.mxu0 %v518
  %1680 = vmatpush.bf16.msra.mxu0 %v514
  %1681 = vmatpush.bf16.msra.mxu0 %v510
  %1682 = vmatmul.bf16.gmra.mxu0 %v1433
  %v1683 = vpop.f32.mrf.mxu0
  %v1684 = vadd.f32 %v1665, %v1683
  %v1685 = vpop.f32.mrf.mxu0
  %v1686 = vadd.f32 %v1667, %v1685
  %1687 = vmatmul.bf16.gmra.mxu0 %v1434
  %v1688 = vpop.f32.mrf.mxu0
  %v1689 = vadd.f32 %v1670, %v1688
  %v1690 = vpop.f32.mrf.mxu0
  %v1691 = vadd.f32 %v1672, %v1690
  %1692 = vdwg.mxu0
  %v1693 = vxor.u32 %v1570, 2147483648
  %v1694 = vxor.u32 %v1572, 2147483648
  %v1695 = vxor.u32 %v1575, 2147483648
  %v1696 = vxor.u32 %v1577, 2147483648
  %v1697 = vmul.f32 %v1693, 1.442695
  %v1698 = vpow.pop %v1697
  %v1699 = vmul.f32 %v1694, 1.442695
  %v1700 = vpow.pop %v1699
  %v1701 = vmul.f32 %v1695, 1.442695
  %v1702 = vpow.pop %v1701
  %v1703 = vmul.f32 %v1696, 1.442695
  %v1704 = vpow.pop %v1703
  %v1705 = vadd.f32 %v1698, 1.0
  %v1706 = vadd.f32 %v1700, 1.0
  %v1707 = vadd.f32 %v1702, 1.0
  %v1708 = vadd.f32 %v1704, 1.0
  %v1709 = vrcp.pop %v1705
  %v1710 = vmul.f32 %v1705, %v1709
  %v1711 = vsub.f32 1.0, %v1710
  %v1712 = vmul.f32 %v1709, %v1711
  %v1713 = vadd.f32 %v1709, %v1712
  %vm1714 = vweird.f32 %v1705
  %vm1715 = vweird.f32 %v1709
  %vm1716 = vmor %vm1714, %vm1715
  %v1717 = vsel %vm1716, %v1709, %v1713
  %v1718 = vand.u32 2147483647, %v1705
  %vm1719 = vcmp.eq.f32.partialorder %v1718, 8.507059e+37
  %v1720 = vand.u32 %v1705, 2147483648
  %v1721 = vor.u32 1.1754944e-38, %v1720
  %v1722 = vsel %vm1719, %v1721, %v1717
  %v1723 = vmul.f32 1.0, %v1722
  %v1724 = vrcp.pop %v1706
  %v1725 = vmul.f32 %v1706, %v1724
  %v1726 = vsub.f32 1.0, %v1725
  %v1727 = vmul.f32 %v1724, %v1726
  %v1728 = vadd.f32 %v1724, %v1727
  %vm1729 = vweird.f32 %v1706
  %vm1730 = vweird.f32 %v1724
  %vm1731 = vmor %vm1729, %vm1730
  %v1732 = vsel %vm1731, %v1724, %v1728
  %v1733 = vand.u32 2147483647, %v1706
  %vm1734 = vcmp.eq.f32.partialorder %v1733, 8.507059e+37
  %v1735 = vand.u32 %v1706, 2147483648
  %v1736 = vor.u32 1.1754944e-38, %v1735
  %v1737 = vsel %vm1734, %v1736, %v1732
  %v1738 = vmul.f32 1.0, %v1737
  %v1739 = vrcp.pop %v1707
  %v1740 = vmul.f32 %v1707, %v1739
  %v1741 = vsub.f32 1.0, %v1740
  %v1742 = vmul.f32 %v1739, %v1741
  %v1743 = vadd.f32 %v1739, %v1742
  %vm1744 = vweird.f32 %v1707
  %vm1745 = vweird.f32 %v1739
  %vm1746 = vmor %vm1744, %vm1745
  %v1747 = vsel %vm1746, %v1739, %v1743
  %v1748 = vand.u32 2147483647, %v1707
  %vm1749 = vcmp.eq.f32.partialorder %v1748, 8.507059e+37
  %v1750 = vand.u32 %v1707, 2147483648
  %v1751 = vor.u32 1.1754944e-38, %v1750
  %v1752 = vsel %vm1749, %v1751, %v1747
  %v1753 = vmul.f32 1.0, %v1752
  %v1754 = vrcp.pop %v1708
  %v1755 = vmul.f32 %v1708, %v1754
  %v1756 = vsub.f32 1.0, %v1755
  %v1757 = vmul.f32 %v1754, %v1756
  %v1758 = vadd.f32 %v1754, %v1757
  %vm1759 = vweird.f32 %v1708
  %vm1760 = vweird.f32 %v1754
  %vm1761 = vmor %vm1759, %vm1760
  %v1762 = vsel %vm1761, %v1754, %v1758
  %v1763 = vand.u32 2147483647, %v1708
  %vm1764 = vcmp.eq.f32.partialorder %v1763, 8.507059e+37
  %v1765 = vand.u32 %v1708, 2147483648
  %v1766 = vor.u32 1.1754944e-38, %v1765
  %v1767 = vsel %vm1764, %v1766, %v1762
  %v1768 = vmul.f32 1.0, %v1767
  %v1769 = vxor.u32 %v1608, 2147483648
  %v1770 = vxor.u32 %v1610, 2147483648
  %v1771 = vxor.u32 %v1613, 2147483648
  %v1772 = vxor.u32 %v1615, 2147483648
  %v1773 = vmul.f32 %v1769, 1.442695
  %v1774 = vpow.pop %v1773
  %v1775 = vmul.f32 %v1770, 1.442695
  %v1776 = vpow.pop %v1775
  %v1777 = vmul.f32 %v1771, 1.442695
  %v1778 = vpow.pop %v1777
  %v1779 = vmul.f32 %v1772, 1.442695
  %v1780 = vpow.pop %v1779
  %v1781 = vadd.f32 %v1774, 1.0
  %v1782 = vadd.f32 %v1776, 1.0
  %v1783 = vadd.f32 %v1778, 1.0
  %v1784 = vadd.f32 %v1780, 1.0
  %v1785 = vrcp.pop %v1781
  %v1786 = vmul.f32 %v1781, %v1785
  %v1787 = vsub.f32 1.0, %v1786
  %v1788 = vmul.f32 %v1785, %v1787
  %v1789 = vadd.f32 %v1785, %v1788
  %vm1790 = vweird.f32 %v1781
  %vm1791 = vweird.f32 %v1785
  %vm1792 = vmor %vm1790, %vm1791
  %v1793 = vsel %vm1792, %v1785, %v1789
  %v1794 = vand.u32 2147483647, %v1781
  %vm1795 = vcmp.eq.f32.partialorder %v1794, 8.507059e+37
  %v1796 = vand.u32 %v1781, 2147483648
  %v1797 = vor.u32 1.1754944e-38, %v1796
  %v1798 = vsel %vm1795, %v1797, %v1793
  %v1799 = vmul.f32 1.0, %v1798
  %v1800 = vrcp.pop %v1782
  %v1801 = vmul.f32 %v1782, %v1800
  %v1802 = vsub.f32 1.0, %v1801
  %v1803 = vmul.f32 %v1800, %v1802
  %v1804 = vadd.f32 %v1800, %v1803
  %vm1805 = vweird.f32 %v1782
  %vm1806 = vweird.f32 %v1800
  %vm1807 = vmor %vm1805, %vm1806
  %v1808 = vsel %vm1807, %v1800, %v1804
  %v1809 = vand.u32 2147483647, %v1782
  %vm1810 = vcmp.eq.f32.partialorder %v1809, 8.507059e+37
  %v1811 = vand.u32 %v1782, 2147483648
  %v1812 = vor.u32 1.1754944e-38, %v1811
  %v1813 = vsel %vm1810, %v1812, %v1808
  %v1814 = vmul.f32 1.0, %v1813
  %v1815 = vrcp.pop %v1783
  %v1816 = vmul.f32 %v1783, %v1815
  %v1817 = vsub.f32 1.0, %v1816
  %v1818 = vmul.f32 %v1815, %v1817
  %v1819 = vadd.f32 %v1815, %v1818
  %vm1820 = vweird.f32 %v1783
  %vm1821 = vweird.f32 %v1815
  %vm1822 = vmor %vm1820, %vm1821
  %v1823 = vsel %vm1822, %v1815, %v1819
  %v1824 = vand.u32 2147483647, %v1783
  %vm1825 = vcmp.eq.f32.partialorder %v1824, 8.507059e+37
  %v1826 = vand.u32 %v1783, 2147483648
  %v1827 = vor.u32 1.1754944e-38, %v1826
  %v1828 = vsel %vm1825, %v1827, %v1823
  %v1829 = vmul.f32 1.0, %v1828
  %v1830 = vrcp.pop %v1784
  %v1831 = vmul.f32 %v1784, %v1830
  %v1832 = vsub.f32 1.0, %v1831
  %v1833 = vmul.f32 %v1830, %v1832
  %v1834 = vadd.f32 %v1830, %v1833
  %vm1835 = vweird.f32 %v1784
  %vm1836 = vweird.f32 %v1830
  %vm1837 = vmor %vm1835, %vm1836
  %v1838 = vsel %vm1837, %v1830, %v1834
  %v1839 = vand.u32 2147483647, %v1784
  %vm1840 = vcmp.eq.f32.partialorder %v1839, 8.507059e+37
  %v1841 = vand.u32 %v1784, 2147483648
  %v1842 = vor.u32 1.1754944e-38, %v1841
  %v1843 = vsel %vm1840, %v1842, %v1838
  %v1844 = vmul.f32 1.0, %v1843
  %v1845 = vmul.f32 %v1723, %v1684
  %v1846 = vmul.f32 %v1738, %v1686
  %v1847 = vmul.f32 %v1753, %v1689
  %v1848 = vmul.f32 %v1768, %v1691
  %v1849 = vadd.f32 %v1646, %v1845
  %v1850 = vadd.f32 %v1648, %v1846
  %v1851 = vadd.f32 %v1651, %v1847
  %v1852 = vadd.f32 %v1653, %v1848
  %v1853 = vtanh.pop %v1849
  %v1854 = vtanh.pop %v1850
  %v1855 = vtanh.pop %v1851
  %v1856 = vtanh.pop %v1852
  %v1857 = vsub.f32 1.0, %v1799
  %v1858 = vsub.f32 1.0, %v1814
  %v1859 = vsub.f32 1.0, %v1829
  %v1860 = vsub.f32 1.0, %v1844
  %v1861 = vmul.f32 %v1857, %v1853
  %v1862 = vmul.f32 %v1858, %v1854
  %v1863 = vmul.f32 %v1859, %v1855
  %v1864 = vmul.f32 %v1860, %v1856
  %v1865 = vmul.f32 %v1799, %v1400
  %v1866 = vmul.f32 %v1814, %v1401
  %v1867 = vmul.f32 %v1829, %v1402
  %v1868 = vmul.f32 %v1844, %v1403
  %v1869 = vadd.f32 %v1861, %v1865
  %v1870 = vadd.f32 %v1862, %v1866
  %v1871 = vadd.f32 %v1863, %v1867
  %v1872 = vadd.f32 %v1864, %v1868
  %v1873 = vpack.c.bf16 %v1869, %v1869
  %v1874 = vpack.c.bf16 %v1870, %v1870
  %v1875 = vpack.c.bf16 %v1871, %v1871
  %v1876 = vpack.c.bf16 %v1872, %v1872
  %s1877 = scalar_lea.vmem %s2, 192
  %v1878 = vld [vmem:[%s1877] sm:$0xf]
  %v1879 = vld [vmem:[%s1877 + $0x4] sm:$0xf]
  %v1880 = vld [vmem:[%s1877 + $0x8] sm:$0xf]
  %v1881 = vld [vmem:[%s1877 + $0xc] sm:$0xf]
  %v1882 = vld [vmem:[%s1877 + $0x10] sm:$0xf]
  %v1883 = vld [vmem:[%s1877 + $0x14] sm:$0xf]
  %v1884 = vld [vmem:[%s1877 + $0x18] sm:$0xf]
  %v1885 = vld [vmem:[%s1877 + $0x1c] sm:$0xf]
  %v1886 = vld [vmem:[%s1877 + $0x20] sm:$0xf]
  %v1887 = vld [vmem:[%s1877 + $0x24] sm:$0xf]
  %v1888 = vld [vmem:[%s1877 + $0x28] sm:$0xf]
  %v1889 = vld [vmem:[%s1877 + $0x2c] sm:$0xf]
  %v1890 = vld [vmem:[%s1877 + $0x30] sm:$0xf]
  %v1891 = vld [vmem:[%s1877 + $0x34] sm:$0xf]
  %v1892 = vld [vmem:[%s1877 + $0x38] sm:$0xf]
  %v1893 = vld [vmem:[%s1877 + $0x3c] sm:$0xf]
  %v1898 = vunpack.c.l.b16 %v1873
  %v1899 = vunpack.c.l.b16 %v1874
  %v1900 = vunpack.c.l.b16 %v1875
  %v1901 = vunpack.c.l.b16 %v1876
  %v1902 = vpack.c.b16 %v1899, %v1898
  %v1903 = vpack.c.b16 %v1901, %v1900
  %v1922 = vunpack.c.l.b16 %v1878
  %v1923 = vunpack.c.l.b16 %v1879
  %v1924 = vunpack.c.l.b16 %v1880
  %v1925 = vunpack.c.l.b16 %v1881
  %v1926 = vunpack.c.l.b16 %v1882
  %v1927 = vunpack.c.l.b16 %v1883
  %v1928 = vunpack.c.l.b16 %v1884
  %v1929 = vunpack.c.l.b16 %v1885
  %v1930 = vunpack.c.l.b16 %v1886
  %v1931 = vunpack.c.l.b16 %v1887
  %v1932 = vunpack.c.l.b16 %v1888
  %v1933 = vunpack.c.l.b16 %v1889
  %v1934 = vunpack.c.l.b16 %v1890
  %v1935 = vunpack.c.l.b16 %v1891
  %v1936 = vunpack.c.l.b16 %v1892
  %v1937 = vunpack.c.l.b16 %v1893
  %v1938 = vpack.c.b16 %v1923, %v1922
  %v1939 = vpack.c.b16 %v1925, %v1924
  %v1940 = vpack.c.b16 %v1927, %v1926
  %v1941 = vpack.c.b16 %v1929, %v1928
  %v1942 = vpack.c.b16 %v1931, %v1930
  %v1943 = vpack.c.b16 %v1933, %v1932
  %v1944 = vpack.c.b16 %v1935, %v1934
  %v1945 = vpack.c.b16 %v1937, %v1936
  %1954 = vmatpush.bf16.msra.mxu0 %v1945
  %1955 = vmatpush.bf16.msra.mxu0 %v1944
  %1956 = vmatpush.bf16.msra.mxu0 %v1943
  %1957 = vmatpush.bf16.msra.mxu0 %v1942
  %1958 = vmatpush.bf16.msra.mxu0 %v1941
  %1959 = vmatpush.bf16.msra.mxu0 %v1940
  %1960 = vmatpush.bf16.msra.mxu0 %v1939
  %1961 = vmatpush.bf16.msra.mxu0 %v1938
  %1962 = vmatmul.bf16.gmra.mxu0 %v1902
  %v1963 = vpop.f32.mrf.mxu0
  %v1964 = vadd.f32 0.0, %v1963
  %v1965 = vpop.f32.mrf.mxu0
  %v1966 = vadd.f32 0.0, %v1965
  %1967 = vmatmul.bf16.gmra.mxu0 %v1903
  %v1968 = vpop.f32.mrf.mxu0
  %v1969 = vadd.f32 0.0, %v1968
  %v1970 = vpop.f32.mrf.mxu0
  %v1971 = vadd.f32 0.0, %v1970
  %1972 = vdwg.mxu0
  %v1973 = vpack.c.bf16 %v1966, %v1964
  %v1974 = vpack.c.bf16 %v1971, %v1969
  %1975 = vmatpush.bf16.msra.mxu0 0
  %1976 = vmatpush.bf16.msra.mxu0 0
  %1977 = vmatpush.bf16.msra.mxu0 0
  %1978 = vmatpush.bf16.msra.mxu0 0
  %1979 = vmatpush.bf16.msra.mxu0 0
  %1980 = vmatpush.bf16.msra.mxu0 0
  %1981 = vmatpush.bf16.msra.mxu0 %v1974
  %1982 = vmatpush.bf16.msra.mxu0 %v1973
  %1983 = vmatmul.bf16.gmra.mxu0 %v234
  %v1984 = vpop.f32.mrf.mxu0
  %v1985 = vadd.f32 0.0, %v1984
  %v1986 = vpop.f32.mrf.mxu0
  %v1987 = vadd.f32 0.0, %v1986
  %1988 = vmatmul.bf16.gmra.mxu0 %v237
  %v1989 = vpop.f32.mrf.mxu0
  %v1990 = vadd.f32 0.0, %v1989
  %v1991 = vpop.f32.mrf.mxu0
  %v1992 = vadd.f32 0.0, %v1991
  %1993 = vdwg.mxu0
  %v1994 = vpack.c.bf16 %v1985, %v1985
  %v1995 = vpack.c.bf16 %v1987, %v1987
  %v1996 = vpack.c.bf16 %v1990, %v1990
  %v1997 = vpack.c.bf16 %v1992, %v1992
  %v2002 = vunpack.c.l.b16 %v1994
  %v2003 = vunpack.c.l.b16 %v1995
  %v2004 = vunpack.c.l.b16 %v1996
  %v2005 = vunpack.c.l.b16 %v1997
  %v2006 = vpack.c.b16 %v2003, %v2002
  %v2007 = vpack.c.b16 %v2005, %v2004
  %2010 = vmatpush.bf16.msra.mxu0 %v503
  %2011 = vmatpush.bf16.msra.mxu0 %v499
  %2012 = vmatpush.bf16.msra.mxu0 %v495
  %2013 = vmatpush.bf16.msra.mxu0 %v491
  %2014 = vmatpush.bf16.msra.mxu0 %v487
  %2015 = vmatpush.bf16.msra.mxu0 %v483
  %2016 = vmatpush.bf16.msra.mxu0 %v479
  %2017 = vmatpush.bf16.msra.mxu0 %v475
  %2018 = vmatmul.bf16.gmra.mxu0 %v2006
  %v2019 = vpop.f32.mrf.mxu0
  %v2020 = vadd.f32 %v275, %v2019
  %v2021 = vpop.f32.mrf.mxu0
  %v2022 = vadd.f32 %v275, %v2021
  %2023 = vmatmul.bf16.gmra.mxu0 %v2007
  %v2024 = vpop.f32.mrf.mxu0
  %v2025 = vadd.f32 %v275, %v2024
  %v2026 = vpop.f32.mrf.mxu0
  %v2027 = vadd.f32 %v275, %v2026
  %2028 = vdwg.mxu0
  %2029 = vmatpush.bf16.msra.mxu0 %v535
  %2030 = vmatpush.bf16.msra.mxu0 %v531
  %2031 = vmatpush.bf16.msra.mxu0 %v527
  %2032 = vmatpush.bf16.msra.mxu0 %v523
  %2033 = vmatpush.bf16.msra.mxu0 %v519
  %2034 = vmatpush.bf16.msra.mxu0 %v515
  %2035 = vmatpush.bf16.msra.mxu0 %v511
  %2036 = vmatpush.bf16.msra.mxu0 %v507
  %2037 = vmatmul.bf16.gmra.mxu0 %v1902
  %v2038 = vpop.f32.mrf.mxu0
  %v2039 = vadd.f32 %v2020, %v2038
  %v2040 = vpop.f32.mrf.mxu0
  %v2041 = vadd.f32 %v2022, %v2040
  %2042 = vmatmul.bf16.gmra.mxu0 %v1903
  %v2043 = vpop.f32.mrf.mxu0
  %v2044 = vadd.f32 %v2025, %v2043
  %v2045 = vpop.f32.mrf.mxu0
  %v2046 = vadd.f32 %v2027, %v2045
  %2047 = vdwg.mxu0
  %2048 = vmatpush.bf16.msra.mxu0 %v504
  %2049 = vmatpush.bf16.msra.mxu0 %v500
  %2050 = vmatpush.bf16.msra.mxu0 %v496
  %2051 = vmatpush.bf16.msra.mxu0 %v492
  %2052 = vmatpush.bf16.msra.mxu0 %v488
  %2053 = vmatpush.bf16.msra.mxu0 %v484
  %2054 = vmatpush.bf16.msra.mxu0 %v480
  %2055 = vmatpush.bf16.msra.mxu0 %v476
  %2056 = vmatmul.bf16.gmra.mxu0 %v2006
  %v2057 = vpop.f32.mrf.mxu0
  %v2058 = vadd.f32 %v276, %v2057
  %v2059 = vpop.f32.mrf.mxu0
  %v2060 = vadd.f32 %v276, %v2059
  %2061 = vmatmul.bf16.gmra.mxu0 %v2007
  %v2062 = vpop.f32.mrf.mxu0
  %v2063 = vadd.f32 %v276, %v2062
  %v2064 = vpop.f32.mrf.mxu0
  %v2065 = vadd.f32 %v276, %v2064
  %2066 = vdwg.mxu0
  %2067 = vmatpush.bf16.msra.mxu0 %v536
  %2068 = vmatpush.bf16.msra.mxu0 %v532
  %2069 = vmatpush.bf16.msra.mxu0 %v528
  %2070 = vmatpush.bf16.msra.mxu0 %v524
  %2071 = vmatpush.bf16.msra.mxu0 %v520
  %2072 = vmatpush.bf16.msra.mxu0 %v516
  %2073 = vmatpush.bf16.msra.mxu0 %v512
  %2074 = vmatpush.bf16.msra.mxu0 %v508
  %2075 = vmatmul.bf16.gmra.mxu0 %v1902
  %v2076 = vpop.f32.mrf.mxu0
  %v2077 = vadd.f32 %v2058, %v2076
  %v2078 = vpop.f32.mrf.mxu0
  %v2079 = vadd.f32 %v2060, %v2078
  %2080 = vmatmul.bf16.gmra.mxu0 %v1903
  %v2081 = vpop.f32.mrf.mxu0
  %v2082 = vadd.f32 %v2063, %v2081
  %v2083 = vpop.f32.mrf.mxu0
  %v2084 = vadd.f32 %v2065, %v2083
  %2085 = vdwg.mxu0
  %2086 = vmatpush.bf16.msra.mxu0 %v505
  %2087 = vmatpush.bf16.msra.mxu0 %v501
  %2088 = vmatpush.bf16.msra.mxu0 %v497
  %2089 = vmatpush.bf16.msra.mxu0 %v493
  %2090 = vmatpush.bf16.msra.mxu0 %v489
  %2091 = vmatpush.bf16.msra.mxu0 %v485
  %2092 = vmatpush.bf16.msra.mxu0 %v481
  %2093 = vmatpush.bf16.msra.mxu0 %v477
  %2094 = vmatmul.bf16.gmra.mxu0 %v2006
  %v2095 = vpop.f32.mrf.mxu0
  %v2096 = vadd.f32 %v277, %v2095
  %v2097 = vpop.f32.mrf.mxu0
  %v2098 = vadd.f32 %v277, %v2097
  %2099 = vmatmul.bf16.gmra.mxu0 %v2007
  %v2100 = vpop.f32.mrf.mxu0
  %v2101 = vadd.f32 %v277, %v2100
  %v2102 = vpop.f32.mrf.mxu0
  %v2103 = vadd.f32 %v277, %v2102
  %2104 = vdwg.mxu0
  %2105 = vmatpush.bf16.msra.mxu0 %v537
  %2106 = vmatpush.bf16.msra.mxu0 %v533
  %2107 = vmatpush.bf16.msra.mxu0 %v529
  %2108 = vmatpush.bf16.msra.mxu0 %v525
  %2109 = vmatpush.bf16.msra.mxu0 %v521
  %2110 = vmatpush.bf16.msra.mxu0 %v517
  %2111 = vmatpush.bf16.msra.mxu0 %v513
  %2112 = vmatpush.bf16.msra.mxu0 %v509
  %2113 = vmatmul.bf16.gmra.mxu0 %v1902
  %v2114 = vpop.f32.mrf.mxu0
  %v2115 = vadd.f32 %v2096, %v2114
  %v2116 = vpop.f32.mrf.mxu0
  %v2117 = vadd.f32 %v2098, %v2116
  %2118 = vmatmul.bf16.gmra.mxu0 %v1903
  %v2119 = vpop.f32.mrf.mxu0
  %v2120 = vadd.f32 %v2101, %v2119
  %v2121 = vpop.f32.mrf.mxu0
  %v2122 = vadd.f32 %v2103, %v2121
  %2123 = vdwg.mxu0
  %2124 = vmatpush.bf16.msra.mxu0 %v506
  %2125 = vmatpush.bf16.msra.mxu0 %v502
  %2126 = vmatpush.bf16.msra.mxu0 %v498
  %2127 = vmatpush.bf16.msra.mxu0 %v494
  %2128 = vmatpush.bf16.msra.mxu0 %v490
  %2129 = vmatpush.bf16.msra.mxu0 %v486
  %2130 = vmatpush.bf16.msra.mxu0 %v482
  %2131 = vmatpush.bf16.msra.mxu0 %v478
  %2132 = vmatmul.bf16.gmra.mxu0 %v2006
  %v2133 = vpop.f32.mrf.mxu0
  %v2134 = vadd.f32 %v278, %v2133
  %v2135 = vpop.f32.mrf.mxu0
  %v2136 = vadd.f32 %v278, %v2135
  %2137 = vmatmul.bf16.gmra.mxu0 %v2007
  %v2138 = vpop.f32.mrf.mxu0
  %v2139 = vadd.f32 %v278, %v2138
  %v2140 = vpop.f32.mrf.mxu0
  %v2141 = vadd.f32 %v278, %v2140
  %2142 = vdwg.mxu0
  %2143 = vmatpush.bf16.msra.mxu0 %v538
  %2144 = vmatpush.bf16.msra.mxu0 %v534
  %2145 = vmatpush.bf16.msra.mxu0 %v530
  %2146 = vmatpush.bf16.msra.mxu0 %v526
  %2147 = vmatpush.bf16.msra.mxu0 %v522
  %2148 = vmatpush.bf16.msra.mxu0 %v518
  %2149 = vmatpush.bf16.msra.mxu0 %v514
  %2150 = vmatpush.bf16.msra.mxu0 %v510
  %2151 = vmatmul.bf16.gmra.mxu0 %v1902
  %v2152 = vpop.f32.mrf.mxu0
  %v2153 = vadd.f32 %v2134, %v2152
  %v2154 = vpop.f32.mrf.mxu0
  %v2155 = vadd.f32 %v2136, %v2154
  %2156 = vmatmul.bf16.gmra.mxu0 %v1903
  %v2157 = vpop.f32.mrf.mxu0
  %v2158 = vadd.f32 %v2139, %v2157
  %v2159 = vpop.f32.mrf.mxu0
  %v2160 = vadd.f32 %v2141, %v2159
  %2161 = vdwg.mxu0
  %v2162 = vxor.u32 %v2039, 2147483648
  %v2163 = vxor.u32 %v2041, 2147483648
  %v2164 = vxor.u32 %v2044, 2147483648
  %v2165 = vxor.u32 %v2046, 2147483648
  %v2166 = vmul.f32 %v2162, 1.442695
  %v2167 = vpow.pop %v2166
  %v2168 = vmul.f32 %v2163, 1.442695
  %v2169 = vpow.pop %v2168
  %v2170 = vmul.f32 %v2164, 1.442695
  %v2171 = vpow.pop %v2170
  %v2172 = vmul.f32 %v2165, 1.442695
  %v2173 = vpow.pop %v2172
  %v2174 = vadd.f32 %v2167, 1.0
  %v2175 = vadd.f32 %v2169, 1.0
  %v2176 = vadd.f32 %v2171, 1.0
  %v2177 = vadd.f32 %v2173, 1.0
  %v2178 = vrcp.pop %v2174
  %v2179 = vmul.f32 %v2174, %v2178
  %v2180 = vsub.f32 1.0, %v2179
  %v2181 = vmul.f32 %v2178, %v2180
  %v2182 = vadd.f32 %v2178, %v2181
  %vm2183 = vweird.f32 %v2174
  %vm2184 = vweird.f32 %v2178
  %vm2185 = vmor %vm2183, %vm2184
  %v2186 = vsel %vm2185, %v2178, %v2182
  %v2187 = vand.u32 2147483647, %v2174
  %vm2188 = vcmp.eq.f32.partialorder %v2187, 8.507059e+37
  %v2189 = vand.u32 %v2174, 2147483648
  %v2190 = vor.u32 1.1754944e-38, %v2189
  %v2191 = vsel %vm2188, %v2190, %v2186
  %v2192 = vmul.f32 1.0, %v2191
  %v2193 = vrcp.pop %v2175
  %v2194 = vmul.f32 %v2175, %v2193
  %v2195 = vsub.f32 1.0, %v2194
  %v2196 = vmul.f32 %v2193, %v2195
  %v2197 = vadd.f32 %v2193, %v2196
  %vm2198 = vweird.f32 %v2175
  %vm2199 = vweird.f32 %v2193
  %vm2200 = vmor %vm2198, %vm2199
  %v2201 = vsel %vm2200, %v2193, %v2197
  %v2202 = vand.u32 2147483647, %v2175
  %vm2203 = vcmp.eq.f32.partialorder %v2202, 8.507059e+37
  %v2204 = vand.u32 %v2175, 2147483648
  %v2205 = vor.u32 1.1754944e-38, %v2204
  %v2206 = vsel %vm2203, %v2205, %v2201
  %v2207 = vmul.f32 1.0, %v2206
  %v2208 = vrcp.pop %v2176
  %v2209 = vmul.f32 %v2176, %v2208
  %v2210 = vsub.f32 1.0, %v2209
  %v2211 = vmul.f32 %v2208, %v2210
  %v2212 = vadd.f32 %v2208, %v2211
  %vm2213 = vweird.f32 %v2176
  %vm2214 = vweird.f32 %v2208
  %vm2215 = vmor %vm2213, %vm2214
  %v2216 = vsel %vm2215, %v2208, %v2212
  %v2217 = vand.u32 2147483647, %v2176
  %vm2218 = vcmp.eq.f32.partialorder %v2217, 8.507059e+37
  %v2219 = vand.u32 %v2176, 2147483648
  %v2220 = vor.u32 1.1754944e-38, %v2219
  %v2221 = vsel %vm2218, %v2220, %v2216
  %v2222 = vmul.f32 1.0, %v2221
  %v2223 = vrcp.pop %v2177
  %v2224 = vmul.f32 %v2177, %v2223
  %v2225 = vsub.f32 1.0, %v2224
  %v2226 = vmul.f32 %v2223, %v2225
  %v2227 = vadd.f32 %v2223, %v2226
  %vm2228 = vweird.f32 %v2177
  %vm2229 = vweird.f32 %v2223
  %vm2230 = vmor %vm2228, %vm2229
  %v2231 = vsel %vm2230, %v2223, %v2227
  %v2232 = vand.u32 2147483647, %v2177
  %vm2233 = vcmp.eq.f32.partialorder %v2232, 8.507059e+37
  %v2234 = vand.u32 %v2177, 2147483648
  %v2235 = vor.u32 1.1754944e-38, %v2234
  %v2236 = vsel %vm2233, %v2235, %v2231
  %v2237 = vmul.f32 1.0, %v2236
  %v2238 = vxor.u32 %v2077, 2147483648
  %v2239 = vxor.u32 %v2079, 2147483648
  %v2240 = vxor.u32 %v2082, 2147483648
  %v2241 = vxor.u32 %v2084, 2147483648
  %v2242 = vmul.f32 %v2238, 1.442695
  %v2243 = vpow.pop %v2242
  %v2244 = vmul.f32 %v2239, 1.442695
  %v2245 = vpow.pop %v2244
  %v2246 = vmul.f32 %v2240, 1.442695
  %v2247 = vpow.pop %v2246
  %v2248 = vmul.f32 %v2241, 1.442695
  %v2249 = vpow.pop %v2248
  %v2250 = vadd.f32 %v2243, 1.0
  %v2251 = vadd.f32 %v2245, 1.0
  %v2252 = vadd.f32 %v2247, 1.0
  %v2253 = vadd.f32 %v2249, 1.0
  %v2254 = vrcp.pop %v2250
  %v2255 = vmul.f32 %v2250, %v2254
  %v2256 = vsub.f32 1.0, %v2255
  %v2257 = vmul.f32 %v2254, %v2256
  %v2258 = vadd.f32 %v2254, %v2257
  %vm2259 = vweird.f32 %v2250
  %vm2260 = vweird.f32 %v2254
  %vm2261 = vmor %vm2259, %vm2260
  %v2262 = vsel %vm2261, %v2254, %v2258
  %v2263 = vand.u32 2147483647, %v2250
  %vm2264 = vcmp.eq.f32.partialorder %v2263, 8.507059e+37
  %v2265 = vand.u32 %v2250, 2147483648
  %v2266 = vor.u32 1.1754944e-38, %v2265
  %v2267 = vsel %vm2264, %v2266, %v2262
  %v2268 = vmul.f32 1.0, %v2267
  %v2269 = vrcp.pop %v2251
  %v2270 = vmul.f32 %v2251, %v2269
  %v2271 = vsub.f32 1.0, %v2270
  %v2272 = vmul.f32 %v2269, %v2271
  %v2273 = vadd.f32 %v2269, %v2272
  %vm2274 = vweird.f32 %v2251
  %vm2275 = vweird.f32 %v2269
  %vm2276 = vmor %vm2274, %vm2275
  %v2277 = vsel %vm2276, %v2269, %v2273
  %v2278 = vand.u32 2147483647, %v2251
  %vm2279 = vcmp.eq.f32.partialorder %v2278, 8.507059e+37
  %v2280 = vand.u32 %v2251, 2147483648
  %v2281 = vor.u32 1.1754944e-38, %v2280
  %v2282 = vsel %vm2279, %v2281, %v2277
  %v2283 = vmul.f32 1.0, %v2282
  %v2284 = vrcp.pop %v2252
  %v2285 = vmul.f32 %v2252, %v2284
  %v2286 = vsub.f32 1.0, %v2285
  %v2287 = vmul.f32 %v2284, %v2286
  %v2288 = vadd.f32 %v2284, %v2287
  %vm2289 = vweird.f32 %v2252
  %vm2290 = vweird.f32 %v2284
  %vm2291 = vmor %vm2289, %vm2290
  %v2292 = vsel %vm2291, %v2284, %v2288
  %v2293 = vand.u32 2147483647, %v2252
  %vm2294 = vcmp.eq.f32.partialorder %v2293, 8.507059e+37
  %v2295 = vand.u32 %v2252, 2147483648
  %v2296 = vor.u32 1.1754944e-38, %v2295
  %v2297 = vsel %vm2294, %v2296, %v2292
  %v2298 = vmul.f32 1.0, %v2297
  %v2299 = vrcp.pop %v2253
  %v2300 = vmul.f32 %v2253, %v2299
  %v2301 = vsub.f32 1.0, %v2300
  %v2302 = vmul.f32 %v2299, %v2301
  %v2303 = vadd.f32 %v2299, %v2302
  %vm2304 = vweird.f32 %v2253
  %vm2305 = vweird.f32 %v2299
  %vm2306 = vmor %vm2304, %vm2305
  %v2307 = vsel %vm2306, %v2299, %v2303
  %v2308 = vand.u32 2147483647, %v2253
  %vm2309 = vcmp.eq.f32.partialorder %v2308, 8.507059e+37
  %v2310 = vand.u32 %v2253, 2147483648
  %v2311 = vor.u32 1.1754944e-38, %v2310
  %v2312 = vsel %vm2309, %v2311, %v2307
  %v2313 = vmul.f32 1.0, %v2312
  %v2314 = vmul.f32 %v2192, %v2153
  %v2315 = vmul.f32 %v2207, %v2155
  %v2316 = vmul.f32 %v2222, %v2158
  %v2317 = vmul.f32 %v2237, %v2160
  %v2318 = vadd.f32 %v2115, %v2314
  %v2319 = vadd.f32 %v2117, %v2315
  %v2320 = vadd.f32 %v2120, %v2316
  %v2321 = vadd.f32 %v2122, %v2317
  %v2322 = vtanh.pop %v2318
  %v2323 = vtanh.pop %v2319
  %v2324 = vtanh.pop %v2320
  %v2325 = vtanh.pop %v2321
  %v2326 = vsub.f32 1.0, %v2268
  %v2327 = vsub.f32 1.0, %v2283
  %v2328 = vsub.f32 1.0, %v2298
  %v2329 = vsub.f32 1.0, %v2313
  %v2330 = vmul.f32 %v2326, %v2322
  %v2331 = vmul.f32 %v2327, %v2323
  %v2332 = vmul.f32 %v2328, %v2324
  %v2333 = vmul.f32 %v2329, %v2325
  %v2334 = vmul.f32 %v2268, %v1869
  %v2335 = vmul.f32 %v2283, %v1870
  %v2336 = vmul.f32 %v2298, %v1871
  %v2337 = vmul.f32 %v2313, %v1872
  %v2338 = vadd.f32 %v2330, %v2334
  %v2339 = vadd.f32 %v2331, %v2335
  %v2340 = vadd.f32 %v2332, %v2336
  %v2341 = vadd.f32 %v2333, %v2337
  %v2342 = vpack.c.bf16 %v2338, %v2338
  %v2343 = vpack.c.bf16 %v2339, %v2339
  %v2344 = vpack.c.bf16 %v2340, %v2340
  %v2345 = vpack.c.bf16 %v2341, %v2341
  %s2346 = scalar_lea.vmem %s2, 256
  %v2347 = vld [vmem:[%s2346] sm:$0xf]
  %v2348 = vld [vmem:[%s2346 + $0x4] sm:$0xf]
  %v2349 = vld [vmem:[%s2346 + $0x8] sm:$0xf]
  %v2350 = vld [vmem:[%s2346 + $0xc] sm:$0xf]
  %v2351 = vld [vmem:[%s2346 + $0x10] sm:$0xf]
  %v2352 = vld [vmem:[%s2346 + $0x14] sm:$0xf]
  %v2353 = vld [vmem:[%s2346 + $0x18] sm:$0xf]
  %v2354 = vld [vmem:[%s2346 + $0x1c] sm:$0xf]
  %v2355 = vld [vmem:[%s2346 + $0x20] sm:$0xf]
  %v2356 = vld [vmem:[%s2346 + $0x24] sm:$0xf]
  %v2357 = vld [vmem:[%s2346 + $0x28] sm:$0xf]
  %v2358 = vld [vmem:[%s2346 + $0x2c] sm:$0xf]
  %v2359 = vld [vmem:[%s2346 + $0x30] sm:$0xf]
  %v2360 = vld [vmem:[%s2346 + $0x34] sm:$0xf]
  %v2361 = vld [vmem:[%s2346 + $0x38] sm:$0xf]
  %v2362 = vld [vmem:[%s2346 + $0x3c] sm:$0xf]
  %v2367 = vunpack.c.l.b16 %v2342
  %v2368 = vunpack.c.l.b16 %v2343
  %v2369 = vunpack.c.l.b16 %v2344
  %v2370 = vunpack.c.l.b16 %v2345
  %v2371 = vpack.c.b16 %v2368, %v2367
  %v2372 = vpack.c.b16 %v2370, %v2369
  %v2391 = vunpack.c.l.b16 %v2347
  %v2392 = vunpack.c.l.b16 %v2348
  %v2393 = vunpack.c.l.b16 %v2349
  %v2394 = vunpack.c.l.b16 %v2350
  %v2395 = vunpack.c.l.b16 %v2351
  %v2396 = vunpack.c.l.b16 %v2352
  %v2397 = vunpack.c.l.b16 %v2353
  %v2398 = vunpack.c.l.b16 %v2354
  %v2399 = vunpack.c.l.b16 %v2355
  %v2400 = vunpack.c.l.b16 %v2356
  %v2401 = vunpack.c.l.b16 %v2357
  %v2402 = vunpack.c.l.b16 %v2358
  %v2403 = vunpack.c.l.b16 %v2359
  %v2404 = vunpack.c.l.b16 %v2360
  %v2405 = vunpack.c.l.b16 %v2361
  %v2406 = vunpack.c.l.b16 %v2362
  %v2407 = vpack.c.b16 %v2392, %v2391
  %v2408 = vpack.c.b16 %v2394, %v2393
  %v2409 = vpack.c.b16 %v2396, %v2395
  %v2410 = vpack.c.b16 %v2398, %v2397
  %v2411 = vpack.c.b16 %v2400, %v2399
  %v2412 = vpack.c.b16 %v2402, %v2401
  %v2413 = vpack.c.b16 %v2404, %v2403
  %v2414 = vpack.c.b16 %v2406, %v2405
  %2423 = vmatpush.bf16.msra.mxu0 %v2414
  %2424 = vmatpush.bf16.msra.mxu0 %v2413
  %2425 = vmatpush.bf16.msra.mxu0 %v2412
  %2426 = vmatpush.bf16.msra.mxu0 %v2411
  %2427 = vmatpush.bf16.msra.mxu0 %v2410
  %2428 = vmatpush.bf16.msra.mxu0 %v2409
  %2429 = vmatpush.bf16.msra.mxu0 %v2408
  %2430 = vmatpush.bf16.msra.mxu0 %v2407
  %2431 = vmatmul.bf16.gmra.mxu0 %v2371
  %v2432 = vpop.f32.mrf.mxu0
  %v2433 = vadd.f32 0.0, %v2432
  %v2434 = vpop.f32.mrf.mxu0
  %v2435 = vadd.f32 0.0, %v2434
  %2436 = vmatmul.bf16.gmra.mxu0 %v2372
  %v2437 = vpop.f32.mrf.mxu0
  %v2438 = vadd.f32 0.0, %v2437
  %v2439 = vpop.f32.mrf.mxu0
  %v2440 = vadd.f32 0.0, %v2439
  %2441 = vdwg.mxu0
  %v2442 = vpack.c.bf16 %v2435, %v2433
  %v2443 = vpack.c.bf16 %v2440, %v2438
  %2444 = vmatpush.bf16.msra.mxu0 0
  %2445 = vmatpush.bf16.msra.mxu0 0
  %2446 = vmatpush.bf16.msra.mxu0 0
  %2447 = vmatpush.bf16.msra.mxu0 0
  %2448 = vmatpush.bf16.msra.mxu0 0
  %2449 = vmatpush.bf16.msra.mxu0 0
  %2450 = vmatpush.bf16.msra.mxu0 %v2443
  %2451 = vmatpush.bf16.msra.mxu0 %v2442
  %2452 = vmatmul.bf16.gmra.mxu0 %v234
  %v2453 = vpop.f32.mrf.mxu0
  %v2454 = vadd.f32 0.0, %v2453
  %v2455 = vpop.f32.mrf.mxu0
  %v2456 = vadd.f32 0.0, %v2455
  %2457 = vmatmul.bf16.gmra.mxu0 %v237
  %v2458 = vpop.f32.mrf.mxu0
  %v2459 = vadd.f32 0.0, %v2458
  %v2460 = vpop.f32.mrf.mxu0
  %v2461 = vadd.f32 0.0, %v2460
  %2462 = vdwg.mxu0
  %v2463 = vpack.c.bf16 %v2454, %v2454
  %v2464 = vpack.c.bf16 %v2456, %v2456
  %v2465 = vpack.c.bf16 %v2459, %v2459
  %v2466 = vpack.c.bf16 %v2461, %v2461
  %v2471 = vunpack.c.l.b16 %v2463
  %v2472 = vunpack.c.l.b16 %v2464
  %v2473 = vunpack.c.l.b16 %v2465
  %v2474 = vunpack.c.l.b16 %v2466
  %v2475 = vpack.c.b16 %v2472, %v2471
  %v2476 = vpack.c.b16 %v2474, %v2473
  %2479 = vmatpush.bf16.msra.mxu0 %v503
  %2480 = vmatpush.bf16.msra.mxu0 %v499
  %2481 = vmatpush.bf16.msra.mxu0 %v495
  %2482 = vmatpush.bf16.msra.mxu0 %v491
  %2483 = vmatpush.bf16.msra.mxu0 %v487
  %2484 = vmatpush.bf16.msra.mxu0 %v483
  %2485 = vmatpush.bf16.msra.mxu0 %v479
  %2486 = vmatpush.bf16.msra.mxu0 %v475
  %2487 = vmatmul.bf16.gmra.mxu0 %v2475
  %v2488 = vpop.f32.mrf.mxu0
  %v2489 = vadd.f32 %v275, %v2488
  %v2490 = vpop.f32.mrf.mxu0
  %v2491 = vadd.f32 %v275, %v2490
  %2492 = vmatmul.bf16.gmra.mxu0 %v2476
  %v2493 = vpop.f32.mrf.mxu0
  %v2494 = vadd.f32 %v275, %v2493
  %v2495 = vpop.f32.mrf.mxu0
  %v2496 = vadd.f32 %v275, %v2495
  %2497 = vdwg.mxu0
  %2498 = vmatpush.bf16.msra.mxu0 %v535
  %2499 = vmatpush.bf16.msra.mxu0 %v531
  %2500 = vmatpush.bf16.msra.mxu0 %v527
  %2501 = vmatpush.bf16.msra.mxu0 %v523
  %2502 = vmatpush.bf16.msra.mxu0 %v519
  %2503 = vmatpush.bf16.msra.mxu0 %v515
  %2504 = vmatpush.bf16.msra.mxu0 %v511
  %2505 = vmatpush.bf16.msra.mxu0 %v507
  %2506 = vmatmul.bf16.gmra.mxu0 %v2371
  %v2507 = vpop.f32.mrf.mxu0
  %v2508 = vadd.f32 %v2489, %v2507
  %v2509 = vpop.f32.mrf.mxu0
  %v2510 = vadd.f32 %v2491, %v2509
  %2511 = vmatmul.bf16.gmra.mxu0 %v2372
  %v2512 = vpop.f32.mrf.mxu0
  %v2513 = vadd.f32 %v2494, %v2512
  %v2514 = vpop.f32.mrf.mxu0
  %v2515 = vadd.f32 %v2496, %v2514
  %2516 = vdwg.mxu0
  %2517 = vmatpush.bf16.msra.mxu0 %v504
  %2518 = vmatpush.bf16.msra.mxu0 %v500
  %2519 = vmatpush.bf16.msra.mxu0 %v496
  %2520 = vmatpush.bf16.msra.mxu0 %v492
  %2521 = vmatpush.bf16.msra.mxu0 %v488
  %2522 = vmatpush.bf16.msra.mxu0 %v484
  %2523 = vmatpush.bf16.msra.mxu0 %v480
  %2524 = vmatpush.bf16.msra.mxu0 %v476
  %2525 = vmatmul.bf16.gmra.mxu0 %v2475
  %v2526 = vpop.f32.mrf.mxu0
  %v2527 = vadd.f32 %v276, %v2526
  %v2528 = vpop.f32.mrf.mxu0
  %v2529 = vadd.f32 %v276, %v2528
  %2530 = vmatmul.bf16.gmra.mxu0 %v2476
  %v2531 = vpop.f32.mrf.mxu0
  %v2532 = vadd.f32 %v276, %v2531
  %v2533 = vpop.f32.mrf.mxu0
  %v2534 = vadd.f32 %v276, %v2533
  %2535 = vdwg.mxu0
  %2536 = vmatpush.bf16.msra.mxu0 %v536
  %2537 = vmatpush.bf16.msra.mxu0 %v532
  %2538 = vmatpush.bf16.msra.mxu0 %v528
  %2539 = vmatpush.bf16.msra.mxu0 %v524
  %2540 = vmatpush.bf16.msra.mxu0 %v520
  %2541 = vmatpush.bf16.msra.mxu0 %v516
  %2542 = vmatpush.bf16.msra.mxu0 %v512
  %2543 = vmatpush.bf16.msra.mxu0 %v508
  %2544 = vmatmul.bf16.gmra.mxu0 %v2371
  %v2545 = vpop.f32.mrf.mxu0
  %v2546 = vadd.f32 %v2527, %v2545
  %v2547 = vpop.f32.mrf.mxu0
  %v2548 = vadd.f32 %v2529, %v2547
  %2549 = vmatmul.bf16.gmra.mxu0 %v2372
  %v2550 = vpop.f32.mrf.mxu0
  %v2551 = vadd.f32 %v2532, %v2550
  %v2552 = vpop.f32.mrf.mxu0
  %v2553 = vadd.f32 %v2534, %v2552
  %2554 = vdwg.mxu0
  %2555 = vmatpush.bf16.msra.mxu0 %v505
  %2556 = vmatpush.bf16.msra.mxu0 %v501
  %2557 = vmatpush.bf16.msra.mxu0 %v497
  %2558 = vmatpush.bf16.msra.mxu0 %v493
  %2559 = vmatpush.bf16.msra.mxu0 %v489
  %2560 = vmatpush.bf16.msra.mxu0 %v485
  %2561 = vmatpush.bf16.msra.mxu0 %v481
  %2562 = vmatpush.bf16.msra.mxu0 %v477
  %2563 = vmatmul.bf16.gmra.mxu0 %v2475
  %v2564 = vpop.f32.mrf.mxu0
  %v2565 = vadd.f32 %v277, %v2564
  %v2566 = vpop.f32.mrf.mxu0
  %v2567 = vadd.f32 %v277, %v2566
  %2568 = vmatmul.bf16.gmra.mxu0 %v2476
  %v2569 = vpop.f32.mrf.mxu0
  %v2570 = vadd.f32 %v277, %v2569
  %v2571 = vpop.f32.mrf.mxu0
  %v2572 = vadd.f32 %v277, %v2571
  %2573 = vdwg.mxu0
  %2574 = vmatpush.bf16.msra.mxu0 %v537
  %2575 = vmatpush.bf16.msra.mxu0 %v533
  %2576 = vmatpush.bf16.msra.mxu0 %v529
  %2577 = vmatpush.bf16.msra.mxu0 %v525
  %2578 = vmatpush.bf16.msra.mxu0 %v521
  %2579 = vmatpush.bf16.msra.mxu0 %v517
  %2580 = vmatpush.bf16.msra.mxu0 %v513
  %2581 = vmatpush.bf16.msra.mxu0 %v509
  %2582 = vmatmul.bf16.gmra.mxu0 %v2371
  %v2583 = vpop.f32.mrf.mxu0
  %v2584 = vadd.f32 %v2565, %v2583
  %v2585 = vpop.f32.mrf.mxu0
  %v2586 = vadd.f32 %v2567, %v2585
  %2587 = vmatmul.bf16.gmra.mxu0 %v2372
  %v2588 = vpop.f32.mrf.mxu0
  %v2589 = vadd.f32 %v2570, %v2588
  %v2590 = vpop.f32.mrf.mxu0
  %v2591 = vadd.f32 %v2572, %v2590
  %2592 = vdwg.mxu0
  %2593 = vmatpush.bf16.msra.mxu0 %v506
  %2594 = vmatpush.bf16.msra.mxu0 %v502
  %2595 = vmatpush.bf16.msra.mxu0 %v498
  %2596 = vmatpush.bf16.msra.mxu0 %v494
  %2597 = vmatpush.bf16.msra.mxu0 %v490
  %2598 = vmatpush.bf16.msra.mxu0 %v486
  %2599 = vmatpush.bf16.msra.mxu0 %v482
  %2600 = vmatpush.bf16.msra.mxu0 %v478
  %2601 = vmatmul.bf16.gmra.mxu0 %v2475
  %v2602 = vpop.f32.mrf.mxu0
  %v2603 = vadd.f32 %v278, %v2602
  %v2604 = vpop.f32.mrf.mxu0
  %v2605 = vadd.f32 %v278, %v2604
  %2606 = vmatmul.bf16.gmra.mxu0 %v2476
  %v2607 = vpop.f32.mrf.mxu0
  %v2608 = vadd.f32 %v278, %v2607
  %v2609 = vpop.f32.mrf.mxu0
  %v2610 = vadd.f32 %v278, %v2609
  %2611 = vdwg.mxu0
  %2612 = vmatpush.bf16.msra.mxu0 %v538
  %2613 = vmatpush.bf16.msra.mxu0 %v534
  %2614 = vmatpush.bf16.msra.mxu0 %v530
  %2615 = vmatpush.bf16.msra.mxu0 %v526
  %2616 = vmatpush.bf16.msra.mxu0 %v522
  %2617 = vmatpush.bf16.msra.mxu0 %v518
  %2618 = vmatpush.bf16.msra.mxu0 %v514
  %2619 = vmatpush.bf16.msra.mxu0 %v510
  %2620 = vmatmul.bf16.gmra.mxu0 %v2371
  %v2621 = vpop.f32.mrf.mxu0
  %v2622 = vadd.f32 %v2603, %v2621
  %v2623 = vpop.f32.mrf.mxu0
  %v2624 = vadd.f32 %v2605, %v2623
  %2625 = vmatmul.bf16.gmra.mxu0 %v2372
  %v2626 = vpop.f32.mrf.mxu0
  %v2627 = vadd.f32 %v2608, %v2626
  %v2628 = vpop.f32.mrf.mxu0
  %v2629 = vadd.f32 %v2610, %v2628
  %2630 = vdwg.mxu0
  %v2631 = vxor.u32 %v2508, 2147483648
  %v2632 = vxor.u32 %v2510, 2147483648
  %v2633 = vxor.u32 %v2513, 2147483648
  %v2634 = vxor.u32 %v2515, 2147483648
  %v2635 = vmul.f32 %v2631, 1.442695
  %v2636 = vpow.pop %v2635
  %v2637 = vmul.f32 %v2632, 1.442695
  %v2638 = vpow.pop %v2637
  %v2639 = vmul.f32 %v2633, 1.442695
  %v2640 = vpow.pop %v2639
  %v2641 = vmul.f32 %v2634, 1.442695
  %v2642 = vpow.pop %v2641
  %v2643 = vadd.f32 %v2636, 1.0
  %v2644 = vadd.f32 %v2638, 1.0
  %v2645 = vadd.f32 %v2640, 1.0
  %v2646 = vadd.f32 %v2642, 1.0
  %v2647 = vrcp.pop %v2643
  %v2648 = vmul.f32 %v2643, %v2647
  %v2649 = vsub.f32 1.0, %v2648
  %v2650 = vmul.f32 %v2647, %v2649
  %v2651 = vadd.f32 %v2647, %v2650
  %vm2652 = vweird.f32 %v2643
  %vm2653 = vweird.f32 %v2647
  %vm2654 = vmor %vm2652, %vm2653
  %v2655 = vsel %vm2654, %v2647, %v2651
  %v2656 = vand.u32 2147483647, %v2643
  %vm2657 = vcmp.eq.f32.partialorder %v2656, 8.507059e+37
  %v2658 = vand.u32 %v2643, 2147483648
  %v2659 = vor.u32 1.1754944e-38, %v2658
  %v2660 = vsel %vm2657, %v2659, %v2655
  %v2661 = vmul.f32 1.0, %v2660
  %v2662 = vrcp.pop %v2644
  %v2663 = vmul.f32 %v2644, %v2662
  %v2664 = vsub.f32 1.0, %v2663
  %v2665 = vmul.f32 %v2662, %v2664
  %v2666 = vadd.f32 %v2662, %v2665
  %vm2667 = vweird.f32 %v2644
  %vm2668 = vweird.f32 %v2662
  %vm2669 = vmor %vm2667, %vm2668
  %v2670 = vsel %vm2669, %v2662, %v2666
  %v2671 = vand.u32 2147483647, %v2644
  %vm2672 = vcmp.eq.f32.partialorder %v2671, 8.507059e+37
  %v2673 = vand.u32 %v2644, 2147483648
  %v2674 = vor.u32 1.1754944e-38, %v2673
  %v2675 = vsel %vm2672, %v2674, %v2670
  %v2676 = vmul.f32 1.0, %v2675
  %v2677 = vrcp.pop %v2645
  %v2678 = vmul.f32 %v2645, %v2677
  %v2679 = vsub.f32 1.0, %v2678
  %v2680 = vmul.f32 %v2677, %v2679
  %v2681 = vadd.f32 %v2677, %v2680
  %vm2682 = vweird.f32 %v2645
  %vm2683 = vweird.f32 %v2677
  %vm2684 = vmor %vm2682, %vm2683
  %v2685 = vsel %vm2684, %v2677, %v2681
  %v2686 = vand.u32 2147483647, %v2645
  %vm2687 = vcmp.eq.f32.partialorder %v2686, 8.507059e+37
  %v2688 = vand.u32 %v2645, 2147483648
  %v2689 = vor.u32 1.1754944e-38, %v2688
  %v2690 = vsel %vm2687, %v2689, %v2685
  %v2691 = vmul.f32 1.0, %v2690
  %v2692 = vrcp.pop %v2646
  %v2693 = vmul.f32 %v2646, %v2692
  %v2694 = vsub.f32 1.0, %v2693
  %v2695 = vmul.f32 %v2692, %v2694
  %v2696 = vadd.f32 %v2692, %v2695
  %vm2697 = vweird.f32 %v2646
  %vm2698 = vweird.f32 %v2692
  %vm2699 = vmor %vm2697, %vm2698
  %v2700 = vsel %vm2699, %v2692, %v2696
  %v2701 = vand.u32 2147483647, %v2646
  %vm2702 = vcmp.eq.f32.partialorder %v2701, 8.507059e+37
  %v2703 = vand.u32 %v2646, 2147483648
  %v2704 = vor.u32 1.1754944e-38, %v2703
  %v2705 = vsel %vm2702, %v2704, %v2700
  %v2706 = vmul.f32 1.0, %v2705
  %v2707 = vxor.u32 %v2546, 2147483648
  %v2708 = vxor.u32 %v2548, 2147483648
  %v2709 = vxor.u32 %v2551, 2147483648
  %v2710 = vxor.u32 %v2553, 2147483648
  %v2711 = vmul.f32 %v2707, 1.442695
  %v2712 = vpow.pop %v2711
  %v2713 = vmul.f32 %v2708, 1.442695
  %v2714 = vpow.pop %v2713
  %v2715 = vmul.f32 %v2709, 1.442695
  %v2716 = vpow.pop %v2715
  %v2717 = vmul.f32 %v2710, 1.442695
  %v2718 = vpow.pop %v2717
  %v2719 = vadd.f32 %v2712, 1.0
  %v2720 = vadd.f32 %v2714, 1.0
  %v2721 = vadd.f32 %v2716, 1.0
  %v2722 = vadd.f32 %v2718, 1.0
  %v2723 = vrcp.pop %v2719
  %v2724 = vmul.f32 %v2719, %v2723
  %v2725 = vsub.f32 1.0, %v2724
  %v2726 = vmul.f32 %v2723, %v2725
  %v2727 = vadd.f32 %v2723, %v2726
  %vm2728 = vweird.f32 %v2719
  %vm2729 = vweird.f32 %v2723
  %vm2730 = vmor %vm2728, %vm2729
  %v2731 = vsel %vm2730, %v2723, %v2727
  %v2732 = vand.u32 2147483647, %v2719
  %vm2733 = vcmp.eq.f32.partialorder %v2732, 8.507059e+37
  %v2734 = vand.u32 %v2719, 2147483648
  %v2735 = vor.u32 1.1754944e-38, %v2734
  %v2736 = vsel %vm2733, %v2735, %v2731
  %v2737 = vmul.f32 1.0, %v2736
  %v2738 = vrcp.pop %v2720
  %v2739 = vmul.f32 %v2720, %v2738
  %v2740 = vsub.f32 1.0, %v2739
  %v2741 = vmul.f32 %v2738, %v2740
  %v2742 = vadd.f32 %v2738, %v2741
  %vm2743 = vweird.f32 %v2720
  %vm2744 = vweird.f32 %v2738
  %vm2745 = vmor %vm2743, %vm2744
  %v2746 = vsel %vm2745, %v2738, %v2742
  %v2747 = vand.u32 2147483647, %v2720
  %vm2748 = vcmp.eq.f32.partialorder %v2747, 8.507059e+37
  %v2749 = vand.u32 %v2720, 2147483648
  %v2750 = vor.u32 1.1754944e-38, %v2749
  %v2751 = vsel %vm2748, %v2750, %v2746
  %v2752 = vmul.f32 1.0, %v2751
  %v2753 = vrcp.pop %v2721
  %v2754 = vmul.f32 %v2721, %v2753
  %v2755 = vsub.f32 1.0, %v2754
  %v2756 = vmul.f32 %v2753, %v2755
  %v2757 = vadd.f32 %v2753, %v2756
  %vm2758 = vweird.f32 %v2721
  %vm2759 = vweird.f32 %v2753
  %vm2760 = vmor %vm2758, %vm2759
  %v2761 = vsel %vm2760, %v2753, %v2757
  %v2762 = vand.u32 2147483647, %v2721
  %vm2763 = vcmp.eq.f32.partialorder %v2762, 8.507059e+37
  %v2764 = vand.u32 %v2721, 2147483648
  %v2765 = vor.u32 1.1754944e-38, %v2764
  %v2766 = vsel %vm2763, %v2765, %v2761
  %v2767 = vmul.f32 1.0, %v2766
  %v2768 = vrcp.pop %v2722
  %v2769 = vmul.f32 %v2722, %v2768
  %v2770 = vsub.f32 1.0, %v2769
  %v2771 = vmul.f32 %v2768, %v2770
  %v2772 = vadd.f32 %v2768, %v2771
  %vm2773 = vweird.f32 %v2722
  %vm2774 = vweird.f32 %v2768
  %vm2775 = vmor %vm2773, %vm2774
  %v2776 = vsel %vm2775, %v2768, %v2772
  %v2777 = vand.u32 2147483647, %v2722
  %vm2778 = vcmp.eq.f32.partialorder %v2777, 8.507059e+37
  %v2779 = vand.u32 %v2722, 2147483648
  %v2780 = vor.u32 1.1754944e-38, %v2779
  %v2781 = vsel %vm2778, %v2780, %v2776
  %v2782 = vmul.f32 1.0, %v2781
  %v2783 = vmul.f32 %v2661, %v2622
  %v2784 = vmul.f32 %v2676, %v2624
  %v2785 = vmul.f32 %v2691, %v2627
  %v2786 = vmul.f32 %v2706, %v2629
  %v2787 = vadd.f32 %v2584, %v2783
  %v2788 = vadd.f32 %v2586, %v2784
  %v2789 = vadd.f32 %v2589, %v2785
  %v2790 = vadd.f32 %v2591, %v2786
  %v2791 = vtanh.pop %v2787
  %v2792 = vtanh.pop %v2788
  %v2793 = vtanh.pop %v2789
  %v2794 = vtanh.pop %v2790
  %v2795 = vsub.f32 1.0, %v2737
  %v2796 = vsub.f32 1.0, %v2752
  %v2797 = vsub.f32 1.0, %v2767
  %v2798 = vsub.f32 1.0, %v2782
  %v2799 = vmul.f32 %v2795, %v2791
  %v2800 = vmul.f32 %v2796, %v2792
  %v2801 = vmul.f32 %v2797, %v2793
  %v2802 = vmul.f32 %v2798, %v2794
  %v2803 = vmul.f32 %v2737, %v2338
  %v2804 = vmul.f32 %v2752, %v2339
  %v2805 = vmul.f32 %v2767, %v2340
  %v2806 = vmul.f32 %v2782, %v2341
  %v2807 = vadd.f32 %v2799, %v2803
  %v2808 = vadd.f32 %v2800, %v2804
  %v2809 = vadd.f32 %v2801, %v2805
  %v2810 = vadd.f32 %v2802, %v2806
  %v2811 = vld [vmem:[%s5] sm:$0xf]
  %v2812 = vld [vmem:[%s5 + $0x4] sm:$0xf]
  %v2813 = vpack.c.bf16 %v2808, %v2807
  %v2814 = vpack.c.bf16 %v2810, %v2809
  %v2817 = vunpack.c.l.b16 %v2811
  %v2818 = vunpack.c.l.b16 %v2812
  %v2819 = vpack.c.b16 %v2818, %v2817
  %v2821 = vsel %vm232, %v2819, 0
  %2823 = vmatpush.bf16.msra.mxu0 0
  %2824 = vmatpush.bf16.msra.mxu0 0
  %2825 = vmatpush.bf16.msra.mxu0 0
  %2826 = vmatpush.bf16.msra.mxu0 0
  %2827 = vmatpush.bf16.msra.mxu0 0
  %2828 = vmatpush.bf16.msra.mxu0 0
  %2829 = vmatpush.bf16.msra.mxu0 %v2814
  %2830 = vmatpush.bf16.msra.mxu0 %v2813
  %2831 = vmatmul.bf16.gmra.mxu0 %v2821
  %v2832 = vpop.f32.mrf.mxu0
  %v2833 = vadd.f32 0.0, %v2832
  %v2834 = vpop.f32.mrf.mxu0
  %v2835 = vadd.f32 0.0, %v2834
  %2836 = vdwg.mxu0
  %v2837 = vpack.c.bf16 %v2835, %v2833
  %v2838 = vld [vmem:[%s6] sm:$0xff]
  %v2839 = vld [vmem:[%s6 + $0x8] sm:$0xff]
  %v2840 = vld [vmem:[%s6 + $0x10] sm:$0xff]
  %v2841 = vld [vmem:[%s6 + $0x18] sm:$0xff]
  %v2842 = vld [vmem:[%s6 + $0x20] sm:$0xff]
  %v2843 = vld [vmem:[%s6 + $0x28] sm:$0xff]
  %v2844 = vld [vmem:[%s6 + $0x30] sm:$0xff]
  %v2845 = vld [vmem:[%s6 + $0x38] sm:$0xff]
  %v2846 = vld [vmem:[%s6 + $0x40] sm:$0xff]
  %v2847 = vld [vmem:[%s6 + $0x48] sm:$0xff]
  %v2848 = vld [vmem:[%s6 + $0x50] sm:$0xff]
  %v2849 = vld [vmem:[%s6 + $0x58] sm:$0xff]
  %v2850 = vld [vmem:[%s6 + $0x60] sm:$0xff]
  %v2851 = vld [vmem:[%s6 + $0x68] sm:$0xff]
  %v2852 = vld [vmem:[%s6 + $0x70] sm:$0xff]
  %v2853 = vld [vmem:[%s6 + $0x78] sm:$0xff]
  %v2854 = vld [vmem:[%s6 + $0x80] sm:$0xff]
  %v2855 = vld [vmem:[%s6 + $0x88] sm:$0xff]
  %v2856 = vld [vmem:[%s6 + $0x90] sm:$0xff]
  %v2857 = vld [vmem:[%s6 + $0x98] sm:$0xff]
  %v2858 = vld [vmem:[%s6 + $0xa0] sm:$0xff]
  %v2859 = vld [vmem:[%s6 + $0xa8] sm:$0xff]
  %v2860 = vld [vmem:[%s6 + $0xb0] sm:$0xff]
  %v2861 = vld [vmem:[%s6 + $0xb8] sm:$0xff]
  %v2862 = vld [vmem:[%s6 + $0xc0] sm:$0xff]
  %v2863 = vld [vmem:[%s6 + $0xc8] sm:$0xff]
  %v2864 = vld [vmem:[%s6 + $0xd0] sm:$0xff]
  %v2865 = vld [vmem:[%s6 + $0xd8] sm:$0xff]
  %v2866 = vld [vmem:[%s6 + $0xe0] sm:$0xff]
  %v2867 = vld [vmem:[%s6 + $0xe8] sm:$0xff]
  %v2868 = vld [vmem:[%s6 + $0xf0] sm:$0xff]
  %v2869 = vld [vmem:[%s6 + $0xf8] sm:$0xff]
  %v2870 = vld [vmem:[%s7] sm:$0xf]
  %v2872 = vperm.slane %v2870, 0
  %v2873 = vperm.slane %v2870, 1
  %v2874 = vperm.slane %v2870, 2
  %v2875 = vperm.slane %v2870, 3
  %v2912 = vunpack.c.l.b16 %v2838
  %v2913 = vunpack.c.h.b16 %v2838
  %v2914 = vunpack.c.l.b16 %v2839
  %v2915 = vunpack.c.h.b16 %v2839
  %v2916 = vunpack.c.l.b16 %v2840
  %v2917 = vunpack.c.h.b16 %v2840
  %v2918 = vunpack.c.l.b16 %v2841
  %v2919 = vunpack.c.h.b16 %v2841
  %v2920 = vunpack.c.l.b16 %v2842
  %v2921 = vunpack.c.h.b16 %v2842
  %v2922 = vunpack.c.l.b16 %v2843
  %v2923 = vunpack.c.h.b16 %v2843
  %v2924 = vunpack.c.l.b16 %v2844
  %v2925 = vunpack.c.h.b16 %v2844
  %v2926 = vunpack.c.l.b16 %v2845
  %v2927 = vunpack.c.h.b16 %v2845
  %v2928 = vunpack.c.l.b16 %v2846
  %v2929 = vunpack.c.h.b16 %v2846
  %v2930 = vunpack.c.l.b16 %v2847
  %v2931 = vunpack.c.h.b16 %v2847
  %v2932 = vunpack.c.l.b16 %v2848
  %v2933 = vunpack.c.h.b16 %v2848
  %v2934 = vunpack.c.l.b16 %v2849
  %v2935 = vunpack.c.h.b16 %v2849
  %v2936 = vunpack.c.l.b16 %v2850
  %v2937 = vunpack.c.h.b16 %v2850
  %v2938 = vunpack.c.l.b16 %v2851
  %v2939 = vunpack.c.h.b16 %v2851
  %v2940 = vunpack.c.l.b16 %v2852
  %v2941 = vunpack.c.h.b16 %v2852
  %v2942 = vunpack.c.l.b16 %v2853
  %v2943 = vunpack.c.h.b16 %v2853
  %v2944 = vunpack.c.l.b16 %v2854
  %v2945 = vunpack.c.h.b16 %v2854
  %v2946 = vunpack.c.l.b16 %v2855
  %v2947 = vunpack.c.h.b16 %v2855
  %v2948 = vunpack.c.l.b16 %v2856
  %v2949 = vunpack.c.h.b16 %v2856
  %v2950 = vunpack.c.l.b16 %v2857
  %v2951 = vunpack.c.h.b16 %v2857
  %v2952 = vunpack.c.l.b16 %v2858
  %v2953 = vunpack.c.h.b16 %v2858
  %v2954 = vunpack.c.l.b16 %v2859
  %v2955 = vunpack.c.h.b16 %v2859
  %v2956 = vunpack.c.l.b16 %v2860
  %v2957 = vunpack.c.h.b16 %v2860
  %v2958 = vunpack.c.l.b16 %v2861
  %v2959 = vunpack.c.h.b16 %v2861
  %v2960 = vunpack.c.l.b16 %v2862
  %v2961 = vunpack.c.h.b16 %v2862
  %v2962 = vunpack.c.l.b16 %v2863
  %v2963 = vunpack.c.h.b16 %v2863
  %v2964 = vunpack.c.l.b16 %v2864
  %v2965 = vunpack.c.h.b16 %v2864
  %v2966 = vunpack.c.l.b16 %v2865
  %v2967 = vunpack.c.h.b16 %v2865
  %v2968 = vunpack.c.l.b16 %v2866
  %v2969 = vunpack.c.h.b16 %v2866
  %v2970 = vunpack.c.l.b16 %v2867
  %v2971 = vunpack.c.h.b16 %v2867
  %v2972 = vunpack.c.l.b16 %v2868
  %v2973 = vunpack.c.h.b16 %v2868
  %v2974 = vunpack.c.l.b16 %v2869
  %v2975 = vunpack.c.h.b16 %v2869
  %v2976 = vpack.c.b16 %v2916, %v2912
  %v2977 = vpack.c.b16 %v2917, %v2913
  %v2978 = vpack.c.b16 %v2918, %v2914
  %v2979 = vpack.c.b16 %v2919, %v2915
  %v2980 = vpack.c.b16 %v2924, %v2920
  %v2981 = vpack.c.b16 %v2925, %v2921
  %v2982 = vpack.c.b16 %v2926, %v2922
  %v2983 = vpack.c.b16 %v2927, %v2923
  %v2984 = vpack.c.b16 %v2932, %v2928
  %v2985 = vpack.c.b16 %v2933, %v2929
  %v2986 = vpack.c.b16 %v2934, %v2930
  %v2987 = vpack.c.b16 %v2935, %v2931
  %v2988 = vpack.c.b16 %v2940, %v2936
  %v2989 = vpack.c.b16 %v2941, %v2937
  %v2990 = vpack.c.b16 %v2942, %v2938
  %v2991 = vpack.c.b16 %v2943, %v2939
  %v2992 = vpack.c.b16 %v2948, %v2944
  %v2993 = vpack.c.b16 %v2949, %v2945
  %v2994 = vpack.c.b16 %v2950, %v2946
  %v2995 = vpack.c.b16 %v2951, %v2947
  %v2996 = vpack.c.b16 %v2956, %v2952
  %v2997 = vpack.c.b16 %v2957, %v2953
  %v2998 = vpack.c.b16 %v2958, %v2954
  %v2999 = vpack.c.b16 %v2959, %v2955
  %v3000 = vpack.c.b16 %v2964, %v2960
  %v3001 = vpack.c.b16 %v2965, %v2961
  %v3002 = vpack.c.b16 %v2966, %v2962
  %v3003 = vpack.c.b16 %v2967, %v2963
  %v3004 = vpack.c.b16 %v2972, %v2968
  %v3005 = vpack.c.b16 %v2973, %v2969
  %v3006 = vpack.c.b16 %v2974, %v2970
  %v3007 = vpack.c.b16 %v2975, %v2971
  %3040 = vmatpush.bf16.msra.mxu0 %v3004
  %3041 = vmatpush.bf16.msra.mxu0 %v3000
  %3042 = vmatpush.bf16.msra.mxu0 %v2996
  %3043 = vmatpush.bf16.msra.mxu0 %v2992
  %3044 = vmatpush.bf16.msra.mxu0 %v2988
  %3045 = vmatpush.bf16.msra.mxu0 %v2984
  %3046 = vmatpush.bf16.msra.mxu0 %v2980
  %3047 = vmatpush.bf16.msra.mxu0 %v2976
  %3048 = vmatmul.bf16.gmra.mxu0 %v2837
  %v3049 = vpop.f32.mrf.mxu0
  %v3050 = vadd.f32 %v2872, %v3049
  %v3051 = vpop.f32.mrf.mxu0
  %v3052 = vadd.f32 %v2872, %v3051
  %3053 = vdwg.mxu0
  %3054 = vmatpush.bf16.msra.mxu0 %v3005
  %3055 = vmatpush.bf16.msra.mxu0 %v3001
  %3056 = vmatpush.bf16.msra.mxu0 %v2997
  %3057 = vmatpush.bf16.msra.mxu0 %v2993
  %3058 = vmatpush.bf16.msra.mxu0 %v2989
  %3059 = vmatpush.bf16.msra.mxu0 %v2985
  %3060 = vmatpush.bf16.msra.mxu0 %v2981
  %3061 = vmatpush.bf16.msra.mxu0 %v2977
  %3062 = vmatmul.bf16.gmra.mxu0 %v2837
  %v3063 = vpop.f32.mrf.mxu0
  %v3064 = vadd.f32 %v2873, %v3063
  %v3065 = vpop.f32.mrf.mxu0
  %v3066 = vadd.f32 %v2873, %v3065
  %3067 = vdwg.mxu0
  %3068 = vmatpush.bf16.msra.mxu0 %v3006
  %3069 = vmatpush.bf16.msra.mxu0 %v3002
  %3070 = vmatpush.bf16.msra.mxu0 %v2998
  %3071 = vmatpush.bf16.msra.mxu0 %v2994
  %3072 = vmatpush.bf16.msra.mxu0 %v2990
  %3073 = vmatpush.bf16.msra.mxu0 %v2986
  %3074 = vmatpush.bf16.msra.mxu0 %v2982
  %3075 = vmatpush.bf16.msra.mxu0 %v2978
  %3076 = vmatmul.bf16.gmra.mxu0 %v2837
  %v3077 = vpop.f32.mrf.mxu0
  %v3078 = vadd.f32 %v2874, %v3077
  %v3079 = vpop.f32.mrf.mxu0
  %v3080 = vadd.f32 %v2874, %v3079
  %3081 = vdwg.mxu0
  %3082 = vmatpush.bf16.msra.mxu0 %v3007
  %3083 = vmatpush.bf16.msra.mxu0 %v3003
  %3084 = vmatpush.bf16.msra.mxu0 %v2999
  %3085 = vmatpush.bf16.msra.mxu0 %v2995
  %3086 = vmatpush.bf16.msra.mxu0 %v2991
  %3087 = vmatpush.bf16.msra.mxu0 %v2987
  %3088 = vmatpush.bf16.msra.mxu0 %v2983
  %3089 = vmatpush.bf16.msra.mxu0 %v2979
  %3090 = vmatmul.bf16.gmra.mxu0 %v2837
  %v3091 = vpop.f32.mrf.mxu0
  %v3092 = vadd.f32 %v2875, %v3091
  %v3093 = vpop.f32.mrf.mxu0
  %v3094 = vadd.f32 %v2875, %v3093
  %3095 = vdwg.mxu0
  %v3096 = vmax.f32 %v3050, 0.0
  %v3097 = vmax.f32 %v3064, 0.0
  %v3098 = vmax.f32 %v3078, 0.0
  %v3099 = vmax.f32 %v3092, 0.0
  %v3100 = vmax.f32 %v3052, 0.0
  %v3101 = vmax.f32 %v3066, 0.0
  %v3102 = vmax.f32 %v3080, 0.0
  %v3103 = vmax.f32 %v3094, 0.0
  %v3104 = vpack.c.bf16 %v3100, %v3096
  %v3105 = vpack.c.bf16 %v3101, %v3097
  %v3106 = vpack.c.bf16 %v3102, %v3098
  %v3107 = vpack.c.bf16 %v3103, %v3099
  %v3108 = vld [vmem:[%s8] sm:$0xff]
  %v3109 = vld [vmem:[%s8 + $0x8] sm:$0xff]
  %v3110 = vld [vmem:[%s8 + $0x10] sm:$0xff]
  %v3111 = vld [vmem:[%s8 + $0x18] sm:$0xff]
  %v3112 = vld [vmem:[%s8 + $0x20] sm:$0xff]
  %v3113 = vld [vmem:[%s8 + $0x28] sm:$0xff]
  %v3114 = vld [vmem:[%s8 + $0x30] sm:$0xff]
  %v3115 = vld [vmem:[%s8 + $0x38] sm:$0xff]
  %v3116 = vld [vmem:[%s8 + $0x40] sm:$0xff]
  %v3117 = vld [vmem:[%s8 + $0x48] sm:$0xff]
  %v3118 = vld [vmem:[%s8 + $0x50] sm:$0xff]
  %v3119 = vld [vmem:[%s8 + $0x58] sm:$0xff]
  %v3120 = vld [vmem:[%s8 + $0x60] sm:$0xff]
  %v3121 = vld [vmem:[%s8 + $0x68] sm:$0xff]
  %v3122 = vld [vmem:[%s8 + $0x70] sm:$0xff]
  %v3123 = vld [vmem:[%s8 + $0x78] sm:$0xff]
  %v3124 = vld [vmem:[%s8 + $0x80] sm:$0xff]
  %v3125 = vld [vmem:[%s8 + $0x88] sm:$0xff]
  %v3126 = vld [vmem:[%s8 + $0x90] sm:$0xff]
  %v3127 = vld [vmem:[%s8 + $0x98] sm:$0xff]
  %v3128 = vld [vmem:[%s8 + $0xa0] sm:$0xff]
  %v3129 = vld [vmem:[%s8 + $0xa8] sm:$0xff]
  %v3130 = vld [vmem:[%s8 + $0xb0] sm:$0xff]
  %v3131 = vld [vmem:[%s8 + $0xb8] sm:$0xff]
  %v3132 = vld [vmem:[%s8 + $0xc0] sm:$0xff]
  %v3133 = vld [vmem:[%s8 + $0xc8] sm:$0xff]
  %v3134 = vld [vmem:[%s8 + $0xd0] sm:$0xff]
  %v3135 = vld [vmem:[%s8 + $0xd8] sm:$0xff]
  %v3136 = vld [vmem:[%s8 + $0xe0] sm:$0xff]
  %v3137 = vld [vmem:[%s8 + $0xe8] sm:$0xff]
  %v3138 = vld [vmem:[%s8 + $0xf0] sm:$0xff]
  %v3139 = vld [vmem:[%s8 + $0xf8] sm:$0xff]
  %v3140 = vld [vmem:[%s8 + $0x100] sm:$0xff]
  %v3141 = vld [vmem:[%s8 + $0x108] sm:$0xff]
  %v3142 = vld [vmem:[%s8 + $0x110] sm:$0xff]
  %v3143 = vld [vmem:[%s8 + $0x118] sm:$0xff]
  %v3144 = vld [vmem:[%s8 + $0x120] sm:$0xff]
  %v3145 = vld [vmem:[%s8 + $0x128] sm:$0xff]
  %v3146 = vld [vmem:[%s8 + $0x130] sm:$0xff]
  %v3147 = vld [vmem:[%s8 + $0x138] sm:$0xff]
  %v3148 = vld [vmem:[%s8 + $0x140] sm:$0xff]
  %v3149 = vld [vmem:[%s8 + $0x148] sm:$0xff]
  %v3150 = vld [vmem:[%s8 + $0x150] sm:$0xff]
  %v3151 = vld [vmem:[%s8 + $0x158] sm:$0xff]
  %v3152 = vld [vmem:[%s8 + $0x160] sm:$0xff]
  %v3153 = vld [vmem:[%s8 + $0x168] sm:$0xff]
  %v3154 = vld [vmem:[%s8 + $0x170] sm:$0xff]
  %v3155 = vld [vmem:[%s8 + $0x178] sm:$0xff]
  %v3156 = vld [vmem:[%s8 + $0x180] sm:$0xff]
  %v3157 = vld [vmem:[%s8 + $0x188] sm:$0xff]
  %v3158 = vld [vmem:[%s8 + $0x190] sm:$0xff]
  %v3159 = vld [vmem:[%s8 + $0x198] sm:$0xff]
  %v3160 = vld [vmem:[%s8 + $0x1a0] sm:$0xff]
  %v3161 = vld [vmem:[%s8 + $0x1a8] sm:$0xff]
  %v3162 = vld [vmem:[%s8 + $0x1b0] sm:$0xff]
  %v3163 = vld [vmem:[%s8 + $0x1b8] sm:$0xff]
  %v3164 = vld [vmem:[%s8 + $0x1c0] sm:$0xff]
  %v3165 = vld [vmem:[%s8 + $0x1c8] sm:$0xff]
  %v3166 = vld [vmem:[%s8 + $0x1d0] sm:$0xff]
  %v3167 = vld [vmem:[%s8 + $0x1d8] sm:$0xff]
  %v3168 = vld [vmem:[%s8 + $0x1e0] sm:$0xff]
  %v3169 = vld [vmem:[%s8 + $0x1e8] sm:$0xff]
  %v3170 = vld [vmem:[%s8 + $0x1f0] sm:$0xff]
  %v3171 = vld [vmem:[%s8 + $0x1f8] sm:$0xff]
  %v3172 = vld [vmem:[%s8 + $0x200] sm:$0xff]
  %v3173 = vld [vmem:[%s8 + $0x208] sm:$0xff]
  %v3174 = vld [vmem:[%s8 + $0x210] sm:$0xff]
  %v3175 = vld [vmem:[%s8 + $0x218] sm:$0xff]
  %v3176 = vld [vmem:[%s8 + $0x220] sm:$0xff]
  %v3177 = vld [vmem:[%s8 + $0x228] sm:$0xff]
  %v3178 = vld [vmem:[%s8 + $0x230] sm:$0xff]
  %v3179 = vld [vmem:[%s8 + $0x238] sm:$0xff]
  %v3180 = vld [vmem:[%s8 + $0x240] sm:$0xff]
  %v3181 = vld [vmem:[%s8 + $0x248] sm:$0xff]
  %v3182 = vld [vmem:[%s8 + $0x250] sm:$0xff]
  %v3183 = vld [vmem:[%s8 + $0x258] sm:$0xff]
  %v3184 = vld [vmem:[%s8 + $0x260] sm:$0xff]
  %v3185 = vld [vmem:[%s8 + $0x268] sm:$0xff]
  %v3186 = vld [vmem:[%s8 + $0x270] sm:$0xff]
  %v3187 = vld [vmem:[%s8 + $0x278] sm:$0xff]
  %v3188 = vld [vmem:[%s8 + $0x280] sm:$0xff]
  %v3189 = vld [vmem:[%s8 + $0x288] sm:$0xff]
  %v3190 = vld [vmem:[%s8 + $0x290] sm:$0xff]
  %v3191 = vld [vmem:[%s8 + $0x298] sm:$0xff]
  %v3192 = vld [vmem:[%s8 + $0x2a0] sm:$0xff]
  %v3193 = vld [vmem:[%s8 + $0x2a8] sm:$0xff]
  %v3194 = vld [vmem:[%s8 + $0x2b0] sm:$0xff]
  %v3195 = vld [vmem:[%s8 + $0x2b8] sm:$0xff]
  %v3196 = vld [vmem:[%s8 + $0x2c0] sm:$0xff]
  %v3197 = vld [vmem:[%s8 + $0x2c8] sm:$0xff]
  %v3198 = vld [vmem:[%s8 + $0x2d0] sm:$0xff]
  %v3199 = vld [vmem:[%s8 + $0x2d8] sm:$0xff]
  %v3200 = vld [vmem:[%s8 + $0x2e0] sm:$0xff]
  %v3201 = vld [vmem:[%s8 + $0x2e8] sm:$0xff]
  %v3202 = vld [vmem:[%s8 + $0x2f0] sm:$0xff]
  %v3203 = vld [vmem:[%s8 + $0x2f8] sm:$0xff]
  %v3204 = vld [vmem:[%s8 + $0x300] sm:$0xff]
  %v3205 = vld [vmem:[%s8 + $0x308] sm:$0xff]
  %v3206 = vld [vmem:[%s8 + $0x310] sm:$0xff]
  %v3207 = vld [vmem:[%s8 + $0x318] sm:$0xff]
  %v3208 = vld [vmem:[%s8 + $0x320] sm:$0xff]
  %v3209 = vld [vmem:[%s8 + $0x328] sm:$0xff]
  %v3210 = vld [vmem:[%s8 + $0x330] sm:$0xff]
  %v3211 = vld [vmem:[%s8 + $0x338] sm:$0xff]
  %v3212 = vld [vmem:[%s8 + $0x340] sm:$0xff]
  %v3213 = vld [vmem:[%s8 + $0x348] sm:$0xff]
  %v3214 = vld [vmem:[%s8 + $0x350] sm:$0xff]
  %v3215 = vld [vmem:[%s8 + $0x358] sm:$0xff]
  %v3216 = vld [vmem:[%s8 + $0x360] sm:$0xff]
  %v3217 = vld [vmem:[%s8 + $0x368] sm:$0xff]
  %v3218 = vld [vmem:[%s8 + $0x370] sm:$0xff]
  %v3219 = vld [vmem:[%s8 + $0x378] sm:$0xff]
  %v3220 = vld [vmem:[%s8 + $0x380] sm:$0xff]
  %v3221 = vld [vmem:[%s8 + $0x388] sm:$0xff]
  %v3222 = vld [vmem:[%s8 + $0x390] sm:$0xff]
  %v3223 = vld [vmem:[%s8 + $0x398] sm:$0xff]
  %v3224 = vld [vmem:[%s8 + $0x3a0] sm:$0xff]
  %v3225 = vld [vmem:[%s8 + $0x3a8] sm:$0xff]
  %v3226 = vld [vmem:[%s8 + $0x3b0] sm:$0xff]
  %v3227 = vld [vmem:[%s8 + $0x3b8] sm:$0xff]
  %v3228 = vld [vmem:[%s8 + $0x3c0] sm:$0xff]
  %v3229 = vld [vmem:[%s8 + $0x3c8] sm:$0xff]
  %v3230 = vld [vmem:[%s8 + $0x3d0] sm:$0xff]
  %v3231 = vld [vmem:[%s8 + $0x3d8] sm:$0xff]
  %v3232 = vld [vmem:[%s8 + $0x3e0] sm:$0xff]
  %v3233 = vld [vmem:[%s8 + $0x3e8] sm:$0xff]
  %v3234 = vld [vmem:[%s8 + $0x3f0] sm:$0xff]
  %v3235 = vld [vmem:[%s8 + $0x3f8] sm:$0xff]
  %v3236 = vld [vmem:[%s9] sm:$0xf]
  %v3238 = vperm.slane %v3236, 0
  %v3239 = vperm.slane %v3236, 1
  %v3240 = vperm.slane %v3236, 2
  %v3241 = vperm.slane %v3236, 3
  %v3374 = vunpack.c.l.b16 %v3108
  %v3375 = vunpack.c.h.b16 %v3108
  %v3376 = vunpack.c.l.b16 %v3109
  %v3377 = vunpack.c.h.b16 %v3109
  %v3378 = vunpack.c.l.b16 %v3110
  %v3379 = vunpack.c.h.b16 %v3110
  %v3380 = vunpack.c.l.b16 %v3111
  %v3381 = vunpack.c.h.b16 %v3111
  %v3382 = vunpack.c.l.b16 %v3112
  %v3383 = vunpack.c.h.b16 %v3112
  %v3384 = vunpack.c.l.b16 %v3113
  %v3385 = vunpack.c.h.b16 %v3113
  %v3386 = vunpack.c.l.b16 %v3114
  %v3387 = vunpack.c.h.b16 %v3114
  %v3388 = vunpack.c.l.b16 %v3115
  %v3389 = vunpack.c.h.b16 %v3115
  %v3390 = vunpack.c.l.b16 %v3116
  %v3391 = vunpack.c.h.b16 %v3116
  %v3392 = vunpack.c.l.b16 %v3117
  %v3393 = vunpack.c.h.b16 %v3117
  %v3394 = vunpack.c.l.b16 %v3118
  %v3395 = vunpack.c.h.b16 %v3118
  %v3396 = vunpack.c.l.b16 %v3119
  %v3397 = vunpack.c.h.b16 %v3119
  %v3398 = vunpack.c.l.b16 %v3120
  %v3399 = vunpack.c.h.b16 %v3120
  %v3400 = vunpack.c.l.b16 %v3121
  %v3401 = vunpack.c.h.b16 %v3121
  %v3402 = vunpack.c.l.b16 %v3122
  %v3403 = vunpack.c.h.b16 %v3122
  %v3404 = vunpack.c.l.b16 %v3123
  %v3405 = vunpack.c.h.b16 %v3123
  %v3406 = vunpack.c.l.b16 %v3124
  %v3407 = vunpack.c.h.b16 %v3124
  %v3408 = vunpack.c.l.b16 %v3125
  %v3409 = vunpack.c.h.b16 %v3125
  %v3410 = vunpack.c.l.b16 %v3126
  %v3411 = vunpack.c.h.b16 %v3126
  %v3412 = vunpack.c.l.b16 %v3127
  %v3413 = vunpack.c.h.b16 %v3127
  %v3414 = vunpack.c.l.b16 %v3128
  %v3415 = vunpack.c.h.b16 %v3128
  %v3416 = vunpack.c.l.b16 %v3129
  %v3417 = vunpack.c.h.b16 %v3129
  %v3418 = vunpack.c.l.b16 %v3130
  %v3419 = vunpack.c.h.b16 %v3130
  %v3420 = vunpack.c.l.b16 %v3131
  %v3421 = vunpack.c.h.b16 %v3131
  %v3422 = vunpack.c.l.b16 %v3132
  %v3423 = vunpack.c.h.b16 %v3132
  %v3424 = vunpack.c.l.b16 %v3133
  %v3425 = vunpack.c.h.b16 %v3133
  %v3426 = vunpack.c.l.b16 %v3134
  %v3427 = vunpack.c.h.b16 %v3134
  %v3428 = vunpack.c.l.b16 %v3135
  %v3429 = vunpack.c.h.b16 %v3135
  %v3430 = vunpack.c.l.b16 %v3136
  %v3431 = vunpack.c.h.b16 %v3136
  %v3432 = vunpack.c.l.b16 %v3137
  %v3433 = vunpack.c.h.b16 %v3137
  %v3434 = vunpack.c.l.b16 %v3138
  %v3435 = vunpack.c.h.b16 %v3138
  %v3436 = vunpack.c.l.b16 %v3139
  %v3437 = vunpack.c.h.b16 %v3139
  %v3438 = vunpack.c.l.b16 %v3140
  %v3439 = vunpack.c.h.b16 %v3140
  %v3440 = vunpack.c.l.b16 %v3141
  %v3441 = vunpack.c.h.b16 %v3141
  %v3442 = vunpack.c.l.b16 %v3142
  %v3443 = vunpack.c.h.b16 %v3142
  %v3444 = vunpack.c.l.b16 %v3143
  %v3445 = vunpack.c.h.b16 %v3143
  %v3446 = vunpack.c.l.b16 %v3144
  %v3447 = vunpack.c.h.b16 %v3144
  %v3448 = vunpack.c.l.b16 %v3145
  %v3449 = vunpack.c.h.b16 %v3145
  %v3450 = vunpack.c.l.b16 %v3146
  %v3451 = vunpack.c.h.b16 %v3146
  %v3452 = vunpack.c.l.b16 %v3147
  %v3453 = vunpack.c.h.b16 %v3147
  %v3454 = vunpack.c.l.b16 %v3148
  %v3455 = vunpack.c.h.b16 %v3148
  %v3456 = vunpack.c.l.b16 %v3149
  %v3457 = vunpack.c.h.b16 %v3149
  %v3458 = vunpack.c.l.b16 %v3150
  %v3459 = vunpack.c.h.b16 %v3150
  %v3460 = vunpack.c.l.b16 %v3151
  %v3461 = vunpack.c.h.b16 %v3151
  %v3462 = vunpack.c.l.b16 %v3152
  %v3463 = vunpack.c.h.b16 %v3152
  %v3464 = vunpack.c.l.b16 %v3153
  %v3465 = vunpack.c.h.b16 %v3153
  %v3466 = vunpack.c.l.b16 %v3154
  %v3467 = vunpack.c.h.b16 %v3154
  %v3468 = vunpack.c.l.b16 %v3155
  %v3469 = vunpack.c.h.b16 %v3155
  %v3470 = vunpack.c.l.b16 %v3156
  %v3471 = vunpack.c.h.b16 %v3156
  %v3472 = vunpack.c.l.b16 %v3157
  %v3473 = vunpack.c.h.b16 %v3157
  %v3474 = vunpack.c.l.b16 %v3158
  %v3475 = vunpack.c.h.b16 %v3158
  %v3476 = vunpack.c.l.b16 %v3159
  %v3477 = vunpack.c.h.b16 %v3159
  %v3478 = vunpack.c.l.b16 %v3160
  %v3479 = vunpack.c.h.b16 %v3160
  %v3480 = vunpack.c.l.b16 %v3161
  %v3481 = vunpack.c.h.b16 %v3161
  %v3482 = vunpack.c.l.b16 %v3162
  %v3483 = vunpack.c.h.b16 %v3162
  %v3484 = vunpack.c.l.b16 %v3163
  %v3485 = vunpack.c.h.b16 %v3163
  %v3486 = vunpack.c.l.b16 %v3164
  %v3487 = vunpack.c.h.b16 %v3164
  %v3488 = vunpack.c.l.b16 %v3165
  %v3489 = vunpack.c.h.b16 %v3165
  %v3490 = vunpack.c.l.b16 %v3166
  %v3491 = vunpack.c.h.b16 %v3166
  %v3492 = vunpack.c.l.b16 %v3167
  %v3493 = vunpack.c.h.b16 %v3167
  %v3494 = vunpack.c.l.b16 %v3168
  %v3495 = vunpack.c.h.b16 %v3168
  %v3496 = vunpack.c.l.b16 %v3169
  %v3497 = vunpack.c.h.b16 %v3169
  %v3498 = vunpack.c.l.b16 %v3170
  %v3499 = vunpack.c.h.b16 %v3170
  %v3500 = vunpack.c.l.b16 %v3171
  %v3501 = vunpack.c.h.b16 %v3171
  %v3502 = vunpack.c.l.b16 %v3172
  %v3503 = vunpack.c.h.b16 %v3172
  %v3504 = vunpack.c.l.b16 %v3173
  %v3505 = vunpack.c.h.b16 %v3173
  %v3506 = vunpack.c.l.b16 %v3174
  %v3507 = vunpack.c.h.b16 %v3174
  %v3508 = vunpack.c.l.b16 %v3175
  %v3509 = vunpack.c.h.b16 %v3175
  %v3510 = vunpack.c.l.b16 %v3176
  %v3511 = vunpack.c.h.b16 %v3176
  %v3512 = vunpack.c.l.b16 %v3177
  %v3513 = vunpack.c.h.b16 %v3177
  %v3514 = vunpack.c.l.b16 %v3178
  %v3515 = vunpack.c.h.b16 %v3178
  %v3516 = vunpack.c.l.b16 %v3179
  %v3517 = vunpack.c.h.b16 %v3179
  %v3518 = vunpack.c.l.b16 %v3180
  %v3519 = vunpack.c.h.b16 %v3180
  %v3520 = vunpack.c.l.b16 %v3181
  %v3521 = vunpack.c.h.b16 %v3181
  %v3522 = vunpack.c.l.b16 %v3182
  %v3523 = vunpack.c.h.b16 %v3182
  %v3524 = vunpack.c.l.b16 %v3183
  %v3525 = vunpack.c.h.b16 %v3183
  %v3526 = vunpack.c.l.b16 %v3184
  %v3527 = vunpack.c.h.b16 %v3184
  %v3528 = vunpack.c.l.b16 %v3185
  %v3529 = vunpack.c.h.b16 %v3185
  %v3530 = vunpack.c.l.b16 %v3186
  %v3531 = vunpack.c.h.b16 %v3186
  %v3532 = vunpack.c.l.b16 %v3187
  %v3533 = vunpack.c.h.b16 %v3187
  %v3534 = vunpack.c.l.b16 %v3188
  %v3535 = vunpack.c.h.b16 %v3188
  %v3536 = vunpack.c.l.b16 %v3189
  %v3537 = vunpack.c.h.b16 %v3189
  %v3538 = vunpack.c.l.b16 %v3190
  %v3539 = vunpack.c.h.b16 %v3190
  %v3540 = vunpack.c.l.b16 %v3191
  %v3541 = vunpack.c.h.b16 %v3191
  %v3542 = vunpack.c.l.b16 %v3192
  %v3543 = vunpack.c.h.b16 %v3192
  %v3544 = vunpack.c.l.b16 %v3193
  %v3545 = vunpack.c.h.b16 %v3193
  %v3546 = vunpack.c.l.b16 %v3194
  %v3547 = vunpack.c.h.b16 %v3194
  %v3548 = vunpack.c.l.b16 %v3195
  %v3549 = vunpack.c.h.b16 %v3195
  %v3550 = vunpack.c.l.b16 %v3196
  %v3551 = vunpack.c.h.b16 %v3196
  %v3552 = vunpack.c.l.b16 %v3197
  %v3553 = vunpack.c.h.b16 %v3197
  %v3554 = vunpack.c.l.b16 %v3198
  %v3555 = vunpack.c.h.b16 %v3198
  %v3556 = vunpack.c.l.b16 %v3199
  %v3557 = vunpack.c.h.b16 %v3199
  %v3558 = vunpack.c.l.b16 %v3200
  %v3559 = vunpack.c.h.b16 %v3200
  %v3560 = vunpack.c.l.b16 %v3201
  %v3561 = vunpack.c.h.b16 %v3201
  %v3562 = vunpack.c.l.b16 %v3202
  %v3563 = vunpack.c.h.b16 %v3202
  %v3564 = vunpack.c.l.b16 %v3203
  %v3565 = vunpack.c.h.b16 %v3203
  %v3566 = vunpack.c.l.b16 %v3204
  %v3567 = vunpack.c.h.b16 %v3204
  %v3568 = vunpack.c.l.b16 %v3205
  %v3569 = vunpack.c.h.b16 %v3205
  %v3570 = vunpack.c.l.b16 %v3206
  %v3571 = vunpack.c.h.b16 %v3206
  %v3572 = vunpack.c.l.b16 %v3207
  %v3573 = vunpack.c.h.b16 %v3207
  %v3574 = vunpack.c.l.b16 %v3208
  %v3575 = vunpack.c.h.b16 %v3208
  %v3576 = vunpack.c.l.b16 %v3209
  %v3577 = vunpack.c.h.b16 %v3209
  %v3578 = vunpack.c.l.b16 %v3210
  %v3579 = vunpack.c.h.b16 %v3210
  %v3580 = vunpack.c.l.b16 %v3211
  %v3581 = vunpack.c.h.b16 %v3211
  %v3582 = vunpack.c.l.b16 %v3212
  %v3583 = vunpack.c.h.b16 %v3212
  %v3584 = vunpack.c.l.b16 %v3213
  %v3585 = vunpack.c.h.b16 %v3213
  %v3586 = vunpack.c.l.b16 %v3214
  %v3587 = vunpack.c.h.b16 %v3214
  %v3588 = vunpack.c.l.b16 %v3215
  %v3589 = vunpack.c.h.b16 %v3215
  %v3590 = vunpack.c.l.b16 %v3216
  %v3591 = vunpack.c.h.b16 %v3216
  %v3592 = vunpack.c.l.b16 %v3217
  %v3593 = vunpack.c.h.b16 %v3217
  %v3594 = vunpack.c.l.b16 %v3218
  %v3595 = vunpack.c.h.b16 %v3218
  %v3596 = vunpack.c.l.b16 %v3219
  %v3597 = vunpack.c.h.b16 %v3219
  %v3598 = vunpack.c.l.b16 %v3220
  %v3599 = vunpack.c.h.b16 %v3220
  %v3600 = vunpack.c.l.b16 %v3221
  %v3601 = vunpack.c.h.b16 %v3221
  %v3602 = vunpack.c.l.b16 %v3222
  %v3603 = vunpack.c.h.b16 %v3222
  %v3604 = vunpack.c.l.b16 %v3223
  %v3605 = vunpack.c.h.b16 %v3223
  %v3606 = vunpack.c.l.b16 %v3224
  %v3607 = vunpack.c.h.b16 %v3224
  %v3608 = vunpack.c.l.b16 %v3225
  %v3609 = vunpack.c.h.b16 %v3225
  %v3610 = vunpack.c.l.b16 %v3226
  %v3611 = vunpack.c.h.b16 %v3226
  %v3612 = vunpack.c.l.b16 %v3227
  %v3613 = vunpack.c.h.b16 %v3227
  %v3614 = vunpack.c.l.b16 %v3228
  %v3615 = vunpack.c.h.b16 %v3228
  %v3616 = vunpack.c.l.b16 %v3229
  %v3617 = vunpack.c.h.b16 %v3229
  %v3618 = vunpack.c.l.b16 %v3230
  %v3619 = vunpack.c.h.b16 %v3230
  %v3620 = vunpack.c.l.b16 %v3231
  %v3621 = vunpack.c.h.b16 %v3231
  %v3622 = vunpack.c.l.b16 %v3232
  %v3623 = vunpack.c.h.b16 %v3232
  %v3624 = vunpack.c.l.b16 %v3233
  %v3625 = vunpack.c.h.b16 %v3233
  %v3626 = vunpack.c.l.b16 %v3234
  %v3627 = vunpack.c.h.b16 %v3234
  %v3628 = vunpack.c.l.b16 %v3235
  %v3629 = vunpack.c.h.b16 %v3235
  %v3630 = vpack.c.b16 %v3378, %v3374
  %v3631 = vpack.c.b16 %v3379, %v3375
  %v3632 = vpack.c.b16 %v3380, %v3376
  %v3633 = vpack.c.b16 %v3381, %v3377
  %v3634 = vpack.c.b16 %v3386, %v3382
  %v3635 = vpack.c.b16 %v3387, %v3383
  %v3636 = vpack.c.b16 %v3388, %v3384
  %v3637 = vpack.c.b16 %v3389, %v3385
  %v3638 = vpack.c.b16 %v3394, %v3390
  %v3639 = vpack.c.b16 %v3395, %v3391
  %v3640 = vpack.c.b16 %v3396, %v3392
  %v3641 = vpack.c.b16 %v3397, %v3393
  %v3642 = vpack.c.b16 %v3402, %v3398
  %v3643 = vpack.c.b16 %v3403, %v3399
  %v3644 = vpack.c.b16 %v3404, %v3400
  %v3645 = vpack.c.b16 %v3405, %v3401
  %v3646 = vpack.c.b16 %v3410, %v3406
  %v3647 = vpack.c.b16 %v3411, %v3407
  %v3648 = vpack.c.b16 %v3412, %v3408
  %v3649 = vpack.c.b16 %v3413, %v3409
  %v3650 = vpack.c.b16 %v3418, %v3414
  %v3651 = vpack.c.b16 %v3419, %v3415
  %v3652 = vpack.c.b16 %v3420, %v3416
  %v3653 = vpack.c.b16 %v3421, %v3417
  %v3654 = vpack.c.b16 %v3426, %v3422
  %v3655 = vpack.c.b16 %v3427, %v3423
  %v3656 = vpack.c.b16 %v3428, %v3424
  %v3657 = vpack.c.b16 %v3429, %v3425
  %v3658 = vpack.c.b16 %v3434, %v3430
  %v3659 = vpack.c.b16 %v3435, %v3431
  %v3660 = vpack.c.b16 %v3436, %v3432
  %v3661 = vpack.c.b16 %v3437, %v3433
  %v3662 = vpack.c.b16 %v3442, %v3438
  %v3663 = vpack.c.b16 %v3443, %v3439
  %v3664 = vpack.c.b16 %v3444, %v3440
  %v3665 = vpack.c.b16 %v3445, %v3441
  %v3666 = vpack.c.b16 %v3450, %v3446
  %v3667 = vpack.c.b16 %v3451, %v3447
  %v3668 = vpack.c.b16 %v3452, %v3448
  %v3669 = vpack.c.b16 %v3453, %v3449
  %v3670 = vpack.c.b16 %v3458, %v3454
  %v3671 = vpack.c.b16 %v3459, %v3455
  %v3672 = vpack.c.b16 %v3460, %v3456
  %v3673 = vpack.c.b16 %v3461, %v3457
  %v3674 = vpack.c.b16 %v3466, %v3462
  %v3675 = vpack.c.b16 %v3467, %v3463
  %v3676 = vpack.c.b16 %v3468, %v3464
  %v3677 = vpack.c.b16 %v3469, %v3465
  %v3678 = vpack.c.b16 %v3474, %v3470
  %v3679 = vpack.c.b16 %v3475, %v3471
  %v3680 = vpack.c.b16 %v3476, %v3472
  %v3681 = vpack.c.b16 %v3477, %v3473
  %v3682 = vpack.c.b16 %v3482, %v3478
  %v3683 = vpack.c.b16 %v3483, %v3479
  %v3684 = vpack.c.b16 %v3484, %v3480
  %v3685 = vpack.c.b16 %v3485, %v3481
  %v3686 = vpack.c.b16 %v3490, %v3486
  %v3687 = vpack.c.b16 %v3491, %v3487
  %v3688 = vpack.c.b16 %v3492, %v3488
  %v3689 = vpack.c.b16 %v3493, %v3489
  %v3690 = vpack.c.b16 %v3498, %v3494
  %v3691 = vpack.c.b16 %v3499, %v3495
  %v3692 = vpack.c.b16 %v3500, %v3496
  %v3693 = vpack.c.b16 %v3501, %v3497
  %v3694 = vpack.c.b16 %v3506, %v3502
  %v3695 = vpack.c.b16 %v3507, %v3503
  %v3696 = vpack.c.b16 %v3508, %v3504
  %v3697 = vpack.c.b16 %v3509, %v3505
  %v3698 = vpack.c.b16 %v3514, %v3510
  %v3699 = vpack.c.b16 %v3515, %v3511
  %v3700 = vpack.c.b16 %v3516, %v3512
  %v3701 = vpack.c.b16 %v3517, %v3513
  %v3702 = vpack.c.b16 %v3522, %v3518
  %v3703 = vpack.c.b16 %v3523, %v3519
  %v3704 = vpack.c.b16 %v3524, %v3520
  %v3705 = vpack.c.b16 %v3525, %v3521
  %v3706 = vpack.c.b16 %v3530, %v3526
  %v3707 = vpack.c.b16 %v3531, %v3527
  %v3708 = vpack.c.b16 %v3532, %v3528
  %v3709 = vpack.c.b16 %v3533, %v3529
  %v3710 = vpack.c.b16 %v3538, %v3534
  %v3711 = vpack.c.b16 %v3539, %v3535
  %v3712 = vpack.c.b16 %v3540, %v3536
  %v3713 = vpack.c.b16 %v3541, %v3537
  %v3714 = vpack.c.b16 %v3546, %v3542
  %v3715 = vpack.c.b16 %v3547, %v3543
  %v3716 = vpack.c.b16 %v3548, %v3544
  %v3717 = vpack.c.b16 %v3549, %v3545
  %v3718 = vpack.c.b16 %v3554, %v3550
  %v3719 = vpack.c.b16 %v3555, %v3551
  %v3720 = vpack.c.b16 %v3556, %v3552
  %v3721 = vpack.c.b16 %v3557, %v3553
  %v3722 = vpack.c.b16 %v3562, %v3558
  %v3723 = vpack.c.b16 %v3563, %v3559
  %v3724 = vpack.c.b16 %v3564, %v3560
  %v3725 = vpack.c.b16 %v3565, %v3561
  %v3726 = vpack.c.b16 %v3570, %v3566
  %v3727 = vpack.c.b16 %v3571, %v3567
  %v3728 = vpack.c.b16 %v3572, %v3568
  %v3729 = vpack.c.b16 %v3573, %v3569
  %v3730 = vpack.c.b16 %v3578, %v3574
  %v3731 = vpack.c.b16 %v3579, %v3575
  %v3732 = vpack.c.b16 %v3580, %v3576
  %v3733 = vpack.c.b16 %v3581, %v3577
  %v3734 = vpack.c.b16 %v3586, %v3582
  %v3735 = vpack.c.b16 %v3587, %v3583
  %v3736 = vpack.c.b16 %v3588, %v3584
  %v3737 = vpack.c.b16 %v3589, %v3585
  %v3738 = vpack.c.b16 %v3594, %v3590
  %v3739 = vpack.c.b16 %v3595, %v3591
  %v3740 = vpack.c.b16 %v3596, %v3592
  %v3741 = vpack.c.b16 %v3597, %v3593
  %v3742 = vpack.c.b16 %v3602, %v3598
  %v3743 = vpack.c.b16 %v3603, %v3599
  %v3744 = vpack.c.b16 %v3604, %v3600
  %v3745 = vpack.c.b16 %v3605, %v3601
  %v3746 = vpack.c.b16 %v3610, %v3606
  %v3747 = vpack.c.b16 %v3611, %v3607
  %v3748 = vpack.c.b16 %v3612, %v3608
  %v3749 = vpack.c.b16 %v3613, %v3609
  %v3750 = vpack.c.b16 %v3618, %v3614
  %v3751 = vpack.c.b16 %v3619, %v3615
  %v3752 = vpack.c.b16 %v3620, %v3616
  %v3753 = vpack.c.b16 %v3621, %v3617
  %v3754 = vpack.c.b16 %v3626, %v3622
  %v3755 = vpack.c.b16 %v3627, %v3623
  %v3756 = vpack.c.b16 %v3628, %v3624
  %v3757 = vpack.c.b16 %v3629, %v3625
  %3886 = vmatpush.bf16.msra.mxu0 %v3658
  %3887 = vmatpush.bf16.msra.mxu0 %v3654
  %3888 = vmatpush.bf16.msra.mxu0 %v3650
  %3889 = vmatpush.bf16.msra.mxu0 %v3646
  %3890 = vmatpush.bf16.msra.mxu0 %v3642
  %3891 = vmatpush.bf16.msra.mxu0 %v3638
  %3892 = vmatpush.bf16.msra.mxu0 %v3634
  %3893 = vmatpush.bf16.msra.mxu0 %v3630
  %3894 = vmatmul.bf16.gmra.mxu0 %v3104
  %v3895 = vpop.f32.mrf.mxu0
  %v3896 = vadd.f32 %v3238, %v3895
  %v3897 = vpop.f32.mrf.mxu0
  %v3898 = vadd.f32 %v3238, %v3897
  %3899 = vdwg.mxu0
  %3900 = vmatpush.bf16.msra.mxu0 %v3690
  %3901 = vmatpush.bf16.msra.mxu0 %v3686
  %3902 = vmatpush.bf16.msra.mxu0 %v3682
  %3903 = vmatpush.bf16.msra.mxu0 %v3678
  %3904 = vmatpush.bf16.msra.mxu0 %v3674
  %3905 = vmatpush.bf16.msra.mxu0 %v3670
  %3906 = vmatpush.bf16.msra.mxu0 %v3666
  %3907 = vmatpush.bf16.msra.mxu0 %v3662
  %3908 = vmatmul.bf16.gmra.mxu0 %v3105
  %v3909 = vpop.f32.mrf.mxu0
  %v3910 = vadd.f32 %v3896, %v3909
  %v3911 = vpop.f32.mrf.mxu0
  %v3912 = vadd.f32 %v3898, %v3911
  %3913 = vdwg.mxu0
  %3914 = vmatpush.bf16.msra.mxu0 %v3722
  %3915 = vmatpush.bf16.msra.mxu0 %v3718
  %3916 = vmatpush.bf16.msra.mxu0 %v3714
  %3917 = vmatpush.bf16.msra.mxu0 %v3710
  %3918 = vmatpush.bf16.msra.mxu0 %v3706
  %3919 = vmatpush.bf16.msra.mxu0 %v3702
  %3920 = vmatpush.bf16.msra.mxu0 %v3698
  %3921 = vmatpush.bf16.msra.mxu0 %v3694
  %3922 = vmatmul.bf16.gmra.mxu0 %v3106
  %v3923 = vpop.f32.mrf.mxu0
  %v3924 = vadd.f32 %v3910, %v3923
  %v3925 = vpop.f32.mrf.mxu0
  %v3926 = vadd.f32 %v3912, %v3925
  %3927 = vdwg.mxu0
  %3928 = vmatpush.bf16.msra.mxu0 %v3754
  %3929 = vmatpush.bf16.msra.mxu0 %v3750
  %3930 = vmatpush.bf16.msra.mxu0 %v3746
  %3931 = vmatpush.bf16.msra.mxu0 %v3742
  %3932 = vmatpush.bf16.msra.mxu0 %v3738
  %3933 = vmatpush.bf16.msra.mxu0 %v3734
  %3934 = vmatpush.bf16.msra.mxu0 %v3730
  %3935 = vmatpush.bf16.msra.mxu0 %v3726
  %3936 = vmatmul.bf16.gmra.mxu0 %v3107
  %v3937 = vpop.f32.mrf.mxu0
  %v3938 = vadd.f32 %v3924, %v3937
  %v3939 = vpop.f32.mrf.mxu0
  %v3940 = vadd.f32 %v3926, %v3939
  %3941 = vdwg.mxu0
  %3942 = vmatpush.bf16.msra.mxu0 %v3659
  %3943 = vmatpush.bf16.msra.mxu0 %v3655
  %3944 = vmatpush.bf16.msra.mxu0 %v3651
  %3945 = vmatpush.bf16.msra.mxu0 %v3647
  %3946 = vmatpush.bf16.msra.mxu0 %v3643
  %3947 = vmatpush.bf16.msra.mxu0 %v3639
  %3948 = vmatpush.bf16.msra.mxu0 %v3635
  %3949 = vmatpush.bf16.msra.mxu0 %v3631
  %3950 = vmatmul.bf16.gmra.mxu0 %v3104
  %v3951 = vpop.f32.mrf.mxu0
  %v3952 = vadd.f32 %v3239, %v3951
  %v3953 = vpop.f32.mrf.mxu0
  %v3954 = vadd.f32 %v3239, %v3953
  %3955 = vdwg.mxu0
  %3956 = vmatpush.bf16.msra.mxu0 %v3691
  %3957 = vmatpush.bf16.msra.mxu0 %v3687
  %3958 = vmatpush.bf16.msra.mxu0 %v3683
  %3959 = vmatpush.bf16.msra.mxu0 %v3679
  %3960 = vmatpush.bf16.msra.mxu0 %v3675
  %3961 = vmatpush.bf16.msra.mxu0 %v3671
  %3962 = vmatpush.bf16.msra.mxu0 %v3667
  %3963 = vmatpush.bf16.msra.mxu0 %v3663
  %3964 = vmatmul.bf16.gmra.mxu0 %v3105
  %v3965 = vpop.f32.mrf.mxu0
  %v3966 = vadd.f32 %v3952, %v3965
  %v3967 = vpop.f32.mrf.mxu0
  %v3968 = vadd.f32 %v3954, %v3967
  %3969 = vdwg.mxu0
  %3970 = vmatpush.bf16.msra.mxu0 %v3723
  %3971 = vmatpush.bf16.msra.mxu0 %v3719
  %3972 = vmatpush.bf16.msra.mxu0 %v3715
  %3973 = vmatpush.bf16.msra.mxu0 %v3711
  %3974 = vmatpush.bf16.msra.mxu0 %v3707
  %3975 = vmatpush.bf16.msra.mxu0 %v3703
  %3976 = vmatpush.bf16.msra.mxu0 %v3699
  %3977 = vmatpush.bf16.msra.mxu0 %v3695
  %3978 = vmatmul.bf16.gmra.mxu0 %v3106
  %v3979 = vpop.f32.mrf.mxu0
  %v3980 = vadd.f32 %v3966, %v3979
  %v3981 = vpop.f32.mrf.mxu0
  %v3982 = vadd.f32 %v3968, %v3981
  %3983 = vdwg.mxu0
  %3984 = vmatpush.bf16.msra.mxu0 %v3755
  %3985 = vmatpush.bf16.msra.mxu0 %v3751
  %3986 = vmatpush.bf16.msra.mxu0 %v3747
  %3987 = vmatpush.bf16.msra.mxu0 %v3743
  %3988 = vmatpush.bf16.msra.mxu0 %v3739
  %3989 = vmatpush.bf16.msra.mxu0 %v3735
  %3990 = vmatpush.bf16.msra.mxu0 %v3731
  %3991 = vmatpush.bf16.msra.mxu0 %v3727
  %3992 = vmatmul.bf16.gmra.mxu0 %v3107
  %v3993 = vpop.f32.mrf.mxu0
  %v3994 = vadd.f32 %v3980, %v3993
  %v3995 = vpop.f32.mrf.mxu0
  %v3996 = vadd.f32 %v3982, %v3995
  %3997 = vdwg.mxu0
  %3998 = vmatpush.bf16.msra.mxu0 %v3660
  %3999 = vmatpush.bf16.msra.mxu0 %v3656
  %4000 = vmatpush.bf16.msra.mxu0 %v3652
  %4001 = vmatpush.bf16.msra.mxu0 %v3648
  %4002 = vmatpush.bf16.msra.mxu0 %v3644
  %4003 = vmatpush.bf16.msra.mxu0 %v3640
  %4004 = vmatpush.bf16.msra.mxu0 %v3636
  %4005 = vmatpush.bf16.msra.mxu0 %v3632
  %4006 = vmatmul.bf16.gmra.mxu0 %v3104
  %v4007 = vpop.f32.mrf.mxu0
  %v4008 = vadd.f32 %v3240, %v4007
  %v4009 = vpop.f32.mrf.mxu0
  %v4010 = vadd.f32 %v3240, %v4009
  %4011 = vdwg.mxu0
  %4012 = vmatpush.bf16.msra.mxu0 %v3692
  %4013 = vmatpush.bf16.msra.mxu0 %v3688
  %4014 = vmatpush.bf16.msra.mxu0 %v3684
  %4015 = vmatpush.bf16.msra.mxu0 %v3680
  %4016 = vmatpush.bf16.msra.mxu0 %v3676
  %4017 = vmatpush.bf16.msra.mxu0 %v3672
  %4018 = vmatpush.bf16.msra.mxu0 %v3668
  %4019 = vmatpush.bf16.msra.mxu0 %v3664
  %4020 = vmatmul.bf16.gmra.mxu0 %v3105
  %v4021 = vpop.f32.mrf.mxu0
  %v4022 = vadd.f32 %v4008, %v4021
  %v4023 = vpop.f32.mrf.mxu0
  %v4024 = vadd.f32 %v4010, %v4023
  %4025 = vdwg.mxu0
  %4026 = vmatpush.bf16.msra.mxu0 %v3724
  %4027 = vmatpush.bf16.msra.mxu0 %v3720
  %4028 = vmatpush.bf16.msra.mxu0 %v3716
  %4029 = vmatpush.bf16.msra.mxu0 %v3712
  %4030 = vmatpush.bf16.msra.mxu0 %v3708
  %4031 = vmatpush.bf16.msra.mxu0 %v3704
  %4032 = vmatpush.bf16.msra.mxu0 %v3700
  %4033 = vmatpush.bf16.msra.mxu0 %v3696
  %4034 = vmatmul.bf16.gmra.mxu0 %v3106
  %v4035 = vpop.f32.mrf.mxu0
  %v4036 = vadd.f32 %v4022, %v4035
  %v4037 = vpop.f32.mrf.mxu0
  %v4038 = vadd.f32 %v4024, %v4037
  %4039 = vdwg.mxu0
  %4040 = vmatpush.bf16.msra.mxu0 %v3756
  %4041 = vmatpush.bf16.msra.mxu0 %v3752
  %4042 = vmatpush.bf16.msra.mxu0 %v3748
  %4043 = vmatpush.bf16.msra.mxu0 %v3744
  %4044 = vmatpush.bf16.msra.mxu0 %v3740
  %4045 = vmatpush.bf16.msra.mxu0 %v3736
  %4046 = vmatpush.bf16.msra.mxu0 %v3732
  %4047 = vmatpush.bf16.msra.mxu0 %v3728
  %4048 = vmatmul.bf16.gmra.mxu0 %v3107
  %v4049 = vpop.f32.mrf.mxu0
  %v4050 = vadd.f32 %v4036, %v4049
  %v4051 = vpop.f32.mrf.mxu0
  %v4052 = vadd.f32 %v4038, %v4051
  %4053 = vdwg.mxu0
  %4054 = vmatpush.bf16.msra.mxu0 %v3661
  %4055 = vmatpush.bf16.msra.mxu0 %v3657
  %4056 = vmatpush.bf16.msra.mxu0 %v3653
  %4057 = vmatpush.bf16.msra.mxu0 %v3649
  %4058 = vmatpush.bf16.msra.mxu0 %v3645
  %4059 = vmatpush.bf16.msra.mxu0 %v3641
  %4060 = vmatpush.bf16.msra.mxu0 %v3637
  %4061 = vmatpush.bf16.msra.mxu0 %v3633
  %4062 = vmatmul.bf16.gmra.mxu0 %v3104
  %v4063 = vpop.f32.mrf.mxu0
  %v4064 = vadd.f32 %v3241, %v4063
  %v4065 = vpop.f32.mrf.mxu0
  %v4066 = vadd.f32 %v3241, %v4065
  %4067 = vdwg.mxu0
  %4068 = vmatpush.bf16.msra.mxu0 %v3693
  %4069 = vmatpush.bf16.msra.mxu0 %v3689
  %4070 = vmatpush.bf16.msra.mxu0 %v3685
  %4071 = vmatpush.bf16.msra.mxu0 %v3681
  %4072 = vmatpush.bf16.msra.mxu0 %v3677
  %4073 = vmatpush.bf16.msra.mxu0 %v3673
  %4074 = vmatpush.bf16.msra.mxu0 %v3669
  %4075 = vmatpush.bf16.msra.mxu0 %v3665
  %4076 = vmatmul.bf16.gmra.mxu0 %v3105
  %v4077 = vpop.f32.mrf.mxu0
  %v4078 = vadd.f32 %v4064, %v4077
  %v4079 = vpop.f32.mrf.mxu0
  %v4080 = vadd.f32 %v4066, %v4079
  %4081 = vdwg.mxu0
  %4082 = vmatpush.bf16.msra.mxu0 %v3725
  %4083 = vmatpush.bf16.msra.mxu0 %v3721
  %4084 = vmatpush.bf16.msra.mxu0 %v3717
  %4085 = vmatpush.bf16.msra.mxu0 %v3713
  %4086 = vmatpush.bf16.msra.mxu0 %v3709
  %4087 = vmatpush.bf16.msra.mxu0 %v3705
  %4088 = vmatpush.bf16.msra.mxu0 %v3701
  %4089 = vmatpush.bf16.msra.mxu0 %v3697
  %4090 = vmatmul.bf16.gmra.mxu0 %v3106
  %v4091 = vpop.f32.mrf.mxu0
  %v4092 = vadd.f32 %v4078, %v4091
  %v4093 = vpop.f32.mrf.mxu0
  %v4094 = vadd.f32 %v4080, %v4093
  %4095 = vdwg.mxu0
  %4096 = vmatpush.bf16.msra.mxu0 %v3757
  %4097 = vmatpush.bf16.msra.mxu0 %v3753
  %4098 = vmatpush.bf16.msra.mxu0 %v3749
  %4099 = vmatpush.bf16.msra.mxu0 %v3745
  %4100 = vmatpush.bf16.msra.mxu0 %v3741
  %4101 = vmatpush.bf16.msra.mxu0 %v3737
  %4102 = vmatpush.bf16.msra.mxu0 %v3733
  %4103 = vmatpush.bf16.msra.mxu0 %v3729
  %4104 = vmatmul.bf16.gmra.mxu0 %v3107
  %v4105 = vpop.f32.mrf.mxu0
  %v4106 = vadd.f32 %v4092, %v4105
  %v4107 = vpop.f32.mrf.mxu0
  %v4108 = vadd.f32 %v4094, %v4107
  %4109 = vdwg.mxu0
  %v4110 = vmax.f32 %v3938, 0.0
  %v4111 = vmax.f32 %v3994, 0.0
  %v4112 = vmax.f32 %v4050, 0.0
  %v4113 = vmax.f32 %v4106, 0.0
  %v4114 = vmax.f32 %v3940, 0.0
  %v4115 = vmax.f32 %v3996, 0.0
  %v4116 = vmax.f32 %v4052, 0.0
  %v4117 = vmax.f32 %v4108, 0.0
  %v4118 = vpack.c.bf16 %v4114, %v4110
  %v4119 = vpack.c.bf16 %v4115, %v4111
  %v4120 = vpack.c.bf16 %v4116, %v4112
  %v4121 = vpack.c.bf16 %v4117, %v4113
  %v4122 = vld [vmem:[%s10] sm:$0xff]
  %v4123 = vld [vmem:[%s10 + $0x8] sm:$0xff]
  %v4124 = vld [vmem:[%s10 + $0x10] sm:$0xff]
  %v4125 = vld [vmem:[%s10 + $0x18] sm:$0xff]
  %v4126 = vld [vmem:[%s10 + $0x20] sm:$0xff]
  %v4127 = vld [vmem:[%s10 + $0x28] sm:$0xff]
  %v4128 = vld [vmem:[%s10 + $0x30] sm:$0xff]
  %v4129 = vld [vmem:[%s10 + $0x38] sm:$0xff]
  %v4130 = vld [vmem:[%s10 + $0x40] sm:$0xff]
  %v4131 = vld [vmem:[%s10 + $0x48] sm:$0xff]
  %v4132 = vld [vmem:[%s10 + $0x50] sm:$0xff]
  %v4133 = vld [vmem:[%s10 + $0x58] sm:$0xff]
  %v4134 = vld [vmem:[%s10 + $0x60] sm:$0xff]
  %v4135 = vld [vmem:[%s10 + $0x68] sm:$0xff]
  %v4136 = vld [vmem:[%s10 + $0x70] sm:$0xff]
  %v4137 = vld [vmem:[%s10 + $0x78] sm:$0xff]
  %v4138 = vld [vmem:[%s10 + $0x80] sm:$0xff]
  %v4139 = vld [vmem:[%s10 + $0x88] sm:$0xff]
  %v4140 = vld [vmem:[%s10 + $0x90] sm:$0xff]
  %v4141 = vld [vmem:[%s10 + $0x98] sm:$0xff]
  %v4142 = vld [vmem:[%s10 + $0xa0] sm:$0xff]
  %v4143 = vld [vmem:[%s10 + $0xa8] sm:$0xff]
  %v4144 = vld [vmem:[%s10 + $0xb0] sm:$0xff]
  %v4145 = vld [vmem:[%s10 + $0xb8] sm:$0xff]
  %v4146 = vld [vmem:[%s10 + $0xc0] sm:$0xff]
  %v4147 = vld [vmem:[%s10 + $0xc8] sm:$0xff]
  %v4148 = vld [vmem:[%s10 + $0xd0] sm:$0xff]
  %v4149 = vld [vmem:[%s10 + $0xd8] sm:$0xff]
  %v4150 = vld [vmem:[%s10 + $0xe0] sm:$0xff]
  %v4151 = vld [vmem:[%s10 + $0xe8] sm:$0xff]
  %v4152 = vld [vmem:[%s10 + $0xf0] sm:$0xff]
  %v4153 = vld [vmem:[%s10 + $0xf8] sm:$0xff]
  %v4154 = vld [vmem:[%s10 + $0x100] sm:$0xff]
  %v4155 = vld [vmem:[%s10 + $0x108] sm:$0xff]
  %v4156 = vld [vmem:[%s10 + $0x110] sm:$0xff]
  %v4157 = vld [vmem:[%s10 + $0x118] sm:$0xff]
  %v4158 = vld [vmem:[%s10 + $0x120] sm:$0xff]
  %v4159 = vld [vmem:[%s10 + $0x128] sm:$0xff]
  %v4160 = vld [vmem:[%s10 + $0x130] sm:$0xff]
  %v4161 = vld [vmem:[%s10 + $0x138] sm:$0xff]
  %v4162 = vld [vmem:[%s10 + $0x140] sm:$0xff]
  %v4163 = vld [vmem:[%s10 + $0x148] sm:$0xff]
  %v4164 = vld [vmem:[%s10 + $0x150] sm:$0xff]
  %v4165 = vld [vmem:[%s10 + $0x158] sm:$0xff]
  %v4166 = vld [vmem:[%s10 + $0x160] sm:$0xff]
  %v4167 = vld [vmem:[%s10 + $0x168] sm:$0xff]
  %v4168 = vld [vmem:[%s10 + $0x170] sm:$0xff]
  %v4169 = vld [vmem:[%s10 + $0x178] sm:$0xff]
  %v4170 = vld [vmem:[%s10 + $0x180] sm:$0xff]
  %v4171 = vld [vmem:[%s10 + $0x188] sm:$0xff]
  %v4172 = vld [vmem:[%s10 + $0x190] sm:$0xff]
  %v4173 = vld [vmem:[%s10 + $0x198] sm:$0xff]
  %v4174 = vld [vmem:[%s10 + $0x1a0] sm:$0xff]
  %v4175 = vld [vmem:[%s10 + $0x1a8] sm:$0xff]
  %v4176 = vld [vmem:[%s10 + $0x1b0] sm:$0xff]
  %v4177 = vld [vmem:[%s10 + $0x1b8] sm:$0xff]
  %v4178 = vld [vmem:[%s10 + $0x1c0] sm:$0xff]
  %v4179 = vld [vmem:[%s10 + $0x1c8] sm:$0xff]
  %v4180 = vld [vmem:[%s10 + $0x1d0] sm:$0xff]
  %v4181 = vld [vmem:[%s10 + $0x1d8] sm:$0xff]
  %v4182 = vld [vmem:[%s10 + $0x1e0] sm:$0xff]
  %v4183 = vld [vmem:[%s10 + $0x1e8] sm:$0xff]
  %v4184 = vld [vmem:[%s10 + $0x1f0] sm:$0xff]
  %v4185 = vld [vmem:[%s10 + $0x1f8] sm:$0xff]
  %v4186 = vld [vmem:[%s10 + $0x200] sm:$0xff]
  %v4187 = vld [vmem:[%s10 + $0x208] sm:$0xff]
  %v4188 = vld [vmem:[%s10 + $0x210] sm:$0xff]
  %v4189 = vld [vmem:[%s10 + $0x218] sm:$0xff]
  %v4190 = vld [vmem:[%s10 + $0x220] sm:$0xff]
  %v4191 = vld [vmem:[%s10 + $0x228] sm:$0xff]
  %v4192 = vld [vmem:[%s10 + $0x230] sm:$0xff]
  %v4193 = vld [vmem:[%s10 + $0x238] sm:$0xff]
  %v4194 = vld [vmem:[%s10 + $0x240] sm:$0xff]
  %v4195 = vld [vmem:[%s10 + $0x248] sm:$0xff]
  %v4196 = vld [vmem:[%s10 + $0x250] sm:$0xff]
  %v4197 = vld [vmem:[%s10 + $0x258] sm:$0xff]
  %v4198 = vld [vmem:[%s10 + $0x260] sm:$0xff]
  %v4199 = vld [vmem:[%s10 + $0x268] sm:$0xff]
  %v4200 = vld [vmem:[%s10 + $0x270] sm:$0xff]
  %v4201 = vld [vmem:[%s10 + $0x278] sm:$0xff]
  %v4202 = vld [vmem:[%s10 + $0x280] sm:$0xff]
  %v4203 = vld [vmem:[%s10 + $0x288] sm:$0xff]
  %v4204 = vld [vmem:[%s10 + $0x290] sm:$0xff]
  %v4205 = vld [vmem:[%s10 + $0x298] sm:$0xff]
  %v4206 = vld [vmem:[%s10 + $0x2a0] sm:$0xff]
  %v4207 = vld [vmem:[%s10 + $0x2a8] sm:$0xff]
  %v4208 = vld [vmem:[%s10 + $0x2b0] sm:$0xff]
  %v4209 = vld [vmem:[%s10 + $0x2b8] sm:$0xff]
  %v4210 = vld [vmem:[%s10 + $0x2c0] sm:$0xff]
  %v4211 = vld [vmem:[%s10 + $0x2c8] sm:$0xff]
  %v4212 = vld [vmem:[%s10 + $0x2d0] sm:$0xff]
  %v4213 = vld [vmem:[%s10 + $0x2d8] sm:$0xff]
  %v4214 = vld [vmem:[%s10 + $0x2e0] sm:$0xff]
  %v4215 = vld [vmem:[%s10 + $0x2e8] sm:$0xff]
  %v4216 = vld [vmem:[%s10 + $0x2f0] sm:$0xff]
  %v4217 = vld [vmem:[%s10 + $0x2f8] sm:$0xff]
  %v4218 = vld [vmem:[%s10 + $0x300] sm:$0xff]
  %v4219 = vld [vmem:[%s10 + $0x308] sm:$0xff]
  %v4220 = vld [vmem:[%s10 + $0x310] sm:$0xff]
  %v4221 = vld [vmem:[%s10 + $0x318] sm:$0xff]
  %v4222 = vld [vmem:[%s10 + $0x320] sm:$0xff]
  %v4223 = vld [vmem:[%s10 + $0x328] sm:$0xff]
  %v4224 = vld [vmem:[%s10 + $0x330] sm:$0xff]
  %v4225 = vld [vmem:[%s10 + $0x338] sm:$0xff]
  %v4226 = vld [vmem:[%s10 + $0x340] sm:$0xff]
  %v4227 = vld [vmem:[%s10 + $0x348] sm:$0xff]
  %v4228 = vld [vmem:[%s10 + $0x350] sm:$0xff]
  %v4229 = vld [vmem:[%s10 + $0x358] sm:$0xff]
  %v4230 = vld [vmem:[%s10 + $0x360] sm:$0xff]
  %v4231 = vld [vmem:[%s10 + $0x368] sm:$0xff]
  %v4232 = vld [vmem:[%s10 + $0x370] sm:$0xff]
  %v4233 = vld [vmem:[%s10 + $0x378] sm:$0xff]
  %v4234 = vld [vmem:[%s10 + $0x380] sm:$0xff]
  %v4235 = vld [vmem:[%s10 + $0x388] sm:$0xff]
  %v4236 = vld [vmem:[%s10 + $0x390] sm:$0xff]
  %v4237 = vld [vmem:[%s10 + $0x398] sm:$0xff]
  %v4238 = vld [vmem:[%s10 + $0x3a0] sm:$0xff]
  %v4239 = vld [vmem:[%s10 + $0x3a8] sm:$0xff]
  %v4240 = vld [vmem:[%s10 + $0x3b0] sm:$0xff]
  %v4241 = vld [vmem:[%s10 + $0x3b8] sm:$0xff]
  %v4242 = vld [vmem:[%s10 + $0x3c0] sm:$0xff]
  %v4243 = vld [vmem:[%s10 + $0x3c8] sm:$0xff]
  %v4244 = vld [vmem:[%s10 + $0x3d0] sm:$0xff]
  %v4245 = vld [vmem:[%s10 + $0x3d8] sm:$0xff]
  %v4246 = vld [vmem:[%s10 + $0x3e0] sm:$0xff]
  %v4247 = vld [vmem:[%s10 + $0x3e8] sm:$0xff]
  %v4248 = vld [vmem:[%s10 + $0x3f0] sm:$0xff]
  %v4249 = vld [vmem:[%s10 + $0x3f8] sm:$0xff]
  %v4250 = vld [vmem:[%s11] sm:$0xf]
  %v4252 = vperm.slane %v4250, 0
  %v4253 = vperm.slane %v4250, 1
  %v4254 = vperm.slane %v4250, 2
  %v4255 = vperm.slane %v4250, 3
  %v4388 = vunpack.c.l.b16 %v4122
  %v4389 = vunpack.c.h.b16 %v4122
  %v4390 = vunpack.c.l.b16 %v4123
  %v4391 = vunpack.c.h.b16 %v4123
  %v4392 = vunpack.c.l.b16 %v4124
  %v4393 = vunpack.c.h.b16 %v4124
  %v4394 = vunpack.c.l.b16 %v4125
  %v4395 = vunpack.c.h.b16 %v4125
  %v4396 = vunpack.c.l.b16 %v4126
  %v4397 = vunpack.c.h.b16 %v4126
  %v4398 = vunpack.c.l.b16 %v4127
  %v4399 = vunpack.c.h.b16 %v4127
  %v4400 = vunpack.c.l.b16 %v4128
  %v4401 = vunpack.c.h.b16 %v4128
  %v4402 = vunpack.c.l.b16 %v4129
  %v4403 = vunpack.c.h.b16 %v4129
  %v4404 = vunpack.c.l.b16 %v4130
  %v4405 = vunpack.c.h.b16 %v4130
  %v4406 = vunpack.c.l.b16 %v4131
  %v4407 = vunpack.c.h.b16 %v4131
  %v4408 = vunpack.c.l.b16 %v4132
  %v4409 = vunpack.c.h.b16 %v4132
  %v4410 = vunpack.c.l.b16 %v4133
  %v4411 = vunpack.c.h.b16 %v4133
  %v4412 = vunpack.c.l.b16 %v4134
  %v4413 = vunpack.c.h.b16 %v4134
  %v4414 = vunpack.c.l.b16 %v4135
  %v4415 = vunpack.c.h.b16 %v4135
  %v4416 = vunpack.c.l.b16 %v4136
  %v4417 = vunpack.c.h.b16 %v4136
  %v4418 = vunpack.c.l.b16 %v4137
  %v4419 = vunpack.c.h.b16 %v4137
  %v4420 = vunpack.c.l.b16 %v4138
  %v4421 = vunpack.c.h.b16 %v4138
  %v4422 = vunpack.c.l.b16 %v4139
  %v4423 = vunpack.c.h.b16 %v4139
  %v4424 = vunpack.c.l.b16 %v4140
  %v4425 = vunpack.c.h.b16 %v4140
  %v4426 = vunpack.c.l.b16 %v4141
  %v4427 = vunpack.c.h.b16 %v4141
  %v4428 = vunpack.c.l.b16 %v4142
  %v4429 = vunpack.c.h.b16 %v4142
  %v4430 = vunpack.c.l.b16 %v4143
  %v4431 = vunpack.c.h.b16 %v4143
  %v4432 = vunpack.c.l.b16 %v4144
  %v4433 = vunpack.c.h.b16 %v4144
  %v4434 = vunpack.c.l.b16 %v4145
  %v4435 = vunpack.c.h.b16 %v4145
  %v4436 = vunpack.c.l.b16 %v4146
  %v4437 = vunpack.c.h.b16 %v4146
  %v4438 = vunpack.c.l.b16 %v4147
  %v4439 = vunpack.c.h.b16 %v4147
  %v4440 = vunpack.c.l.b16 %v4148
  %v4441 = vunpack.c.h.b16 %v4148
  %v4442 = vunpack.c.l.b16 %v4149
  %v4443 = vunpack.c.h.b16 %v4149
  %v4444 = vunpack.c.l.b16 %v4150
  %v4445 = vunpack.c.h.b16 %v4150
  %v4446 = vunpack.c.l.b16 %v4151
  %v4447 = vunpack.c.h.b16 %v4151
  %v4448 = vunpack.c.l.b16 %v4152
  %v4449 = vunpack.c.h.b16 %v4152
  %v4450 = vunpack.c.l.b16 %v4153
  %v4451 = vunpack.c.h.b16 %v4153
  %v4452 = vunpack.c.l.b16 %v4154
  %v4453 = vunpack.c.h.b16 %v4154
  %v4454 = vunpack.c.l.b16 %v4155
  %v4455 = vunpack.c.h.b16 %v4155
  %v4456 = vunpack.c.l.b16 %v4156
  %v4457 = vunpack.c.h.b16 %v4156
  %v4458 = vunpack.c.l.b16 %v4157
  %v4459 = vunpack.c.h.b16 %v4157
  %v4460 = vunpack.c.l.b16 %v4158
  %v4461 = vunpack.c.h.b16 %v4158
  %v4462 = vunpack.c.l.b16 %v4159
  %v4463 = vunpack.c.h.b16 %v4159
  %v4464 = vunpack.c.l.b16 %v4160
  %v4465 = vunpack.c.h.b16 %v4160
  %v4466 = vunpack.c.l.b16 %v4161
  %v4467 = vunpack.c.h.b16 %v4161
  %v4468 = vunpack.c.l.b16 %v4162
  %v4469 = vunpack.c.h.b16 %v4162
  %v4470 = vunpack.c.l.b16 %v4163
  %v4471 = vunpack.c.h.b16 %v4163
  %v4472 = vunpack.c.l.b16 %v4164
  %v4473 = vunpack.c.h.b16 %v4164
  %v4474 = vunpack.c.l.b16 %v4165
  %v4475 = vunpack.c.h.b16 %v4165
  %v4476 = vunpack.c.l.b16 %v4166
  %v4477 = vunpack.c.h.b16 %v4166
  %v4478 = vunpack.c.l.b16 %v4167
  %v4479 = vunpack.c.h.b16 %v4167
  %v4480 = vunpack.c.l.b16 %v4168
  %v4481 = vunpack.c.h.b16 %v4168
  %v4482 = vunpack.c.l.b16 %v4169
  %v4483 = vunpack.c.h.b16 %v4169
  %v4484 = vunpack.c.l.b16 %v4170
  %v4485 = vunpack.c.h.b16 %v4170
  %v4486 = vunpack.c.l.b16 %v4171
  %v4487 = vunpack.c.h.b16 %v4171
  %v4488 = vunpack.c.l.b16 %v4172
  %v4489 = vunpack.c.h.b16 %v4172
  %v4490 = vunpack.c.l.b16 %v4173
  %v4491 = vunpack.c.h.b16 %v4173
  %v4492 = vunpack.c.l.b16 %v4174
  %v4493 = vunpack.c.h.b16 %v4174
  %v4494 = vunpack.c.l.b16 %v4175
  %v4495 = vunpack.c.h.b16 %v4175
  %v4496 = vunpack.c.l.b16 %v4176
  %v4497 = vunpack.c.h.b16 %v4176
  %v4498 = vunpack.c.l.b16 %v4177
  %v4499 = vunpack.c.h.b16 %v4177
  %v4500 = vunpack.c.l.b16 %v4178
  %v4501 = vunpack.c.h.b16 %v4178
  %v4502 = vunpack.c.l.b16 %v4179
  %v4503 = vunpack.c.h.b16 %v4179
  %v4504 = vunpack.c.l.b16 %v4180
  %v4505 = vunpack.c.h.b16 %v4180
  %v4506 = vunpack.c.l.b16 %v4181
  %v4507 = vunpack.c.h.b16 %v4181
  %v4508 = vunpack.c.l.b16 %v4182
  %v4509 = vunpack.c.h.b16 %v4182
  %v4510 = vunpack.c.l.b16 %v4183
  %v4511 = vunpack.c.h.b16 %v4183
  %v4512 = vunpack.c.l.b16 %v4184
  %v4513 = vunpack.c.h.b16 %v4184
  %v4514 = vunpack.c.l.b16 %v4185
  %v4515 = vunpack.c.h.b16 %v4185
  %v4516 = vunpack.c.l.b16 %v4186
  %v4517 = vunpack.c.h.b16 %v4186
  %v4518 = vunpack.c.l.b16 %v4187
  %v4519 = vunpack.c.h.b16 %v4187
  %v4520 = vunpack.c.l.b16 %v4188
  %v4521 = vunpack.c.h.b16 %v4188
  %v4522 = vunpack.c.l.b16 %v4189
  %v4523 = vunpack.c.h.b16 %v4189
  %v4524 = vunpack.c.l.b16 %v4190
  %v4525 = vunpack.c.h.b16 %v4190
  %v4526 = vunpack.c.l.b16 %v4191
  %v4527 = vunpack.c.h.b16 %v4191
  %v4528 = vunpack.c.l.b16 %v4192
  %v4529 = vunpack.c.h.b16 %v4192
  %v4530 = vunpack.c.l.b16 %v4193
  %v4531 = vunpack.c.h.b16 %v4193
  %v4532 = vunpack.c.l.b16 %v4194
  %v4533 = vunpack.c.h.b16 %v4194
  %v4534 = vunpack.c.l.b16 %v4195
  %v4535 = vunpack.c.h.b16 %v4195
  %v4536 = vunpack.c.l.b16 %v4196
  %v4537 = vunpack.c.h.b16 %v4196
  %v4538 = vunpack.c.l.b16 %v4197
  %v4539 = vunpack.c.h.b16 %v4197
  %v4540 = vunpack.c.l.b16 %v4198
  %v4541 = vunpack.c.h.b16 %v4198
  %v4542 = vunpack.c.l.b16 %v4199
  %v4543 = vunpack.c.h.b16 %v4199
  %v4544 = vunpack.c.l.b16 %v4200
  %v4545 = vunpack.c.h.b16 %v4200
  %v4546 = vunpack.c.l.b16 %v4201
  %v4547 = vunpack.c.h.b16 %v4201
  %v4548 = vunpack.c.l.b16 %v4202
  %v4549 = vunpack.c.h.b16 %v4202
  %v4550 = vunpack.c.l.b16 %v4203
  %v4551 = vunpack.c.h.b16 %v4203
  %v4552 = vunpack.c.l.b16 %v4204
  %v4553 = vunpack.c.h.b16 %v4204
  %v4554 = vunpack.c.l.b16 %v4205
  %v4555 = vunpack.c.h.b16 %v4205
  %v4556 = vunpack.c.l.b16 %v4206
  %v4557 = vunpack.c.h.b16 %v4206
  %v4558 = vunpack.c.l.b16 %v4207
  %v4559 = vunpack.c.h.b16 %v4207
  %v4560 = vunpack.c.l.b16 %v4208
  %v4561 = vunpack.c.h.b16 %v4208
  %v4562 = vunpack.c.l.b16 %v4209
  %v4563 = vunpack.c.h.b16 %v4209
  %v4564 = vunpack.c.l.b16 %v4210
  %v4565 = vunpack.c.h.b16 %v4210
  %v4566 = vunpack.c.l.b16 %v4211
  %v4567 = vunpack.c.h.b16 %v4211
  %v4568 = vunpack.c.l.b16 %v4212
  %v4569 = vunpack.c.h.b16 %v4212
  %v4570 = vunpack.c.l.b16 %v4213
  %v4571 = vunpack.c.h.b16 %v4213
  %v4572 = vunpack.c.l.b16 %v4214
  %v4573 = vunpack.c.h.b16 %v4214
  %v4574 = vunpack.c.l.b16 %v4215
  %v4575 = vunpack.c.h.b16 %v4215
  %v4576 = vunpack.c.l.b16 %v4216
  %v4577 = vunpack.c.h.b16 %v4216
  %v4578 = vunpack.c.l.b16 %v4217
  %v4579 = vunpack.c.h.b16 %v4217
  %v4580 = vunpack.c.l.b16 %v4218
  %v4581 = vunpack.c.h.b16 %v4218
  %v4582 = vunpack.c.l.b16 %v4219
  %v4583 = vunpack.c.h.b16 %v4219
  %v4584 = vunpack.c.l.b16 %v4220
  %v4585 = vunpack.c.h.b16 %v4220
  %v4586 = vunpack.c.l.b16 %v4221
  %v4587 = vunpack.c.h.b16 %v4221
  %v4588 = vunpack.c.l.b16 %v4222
  %v4589 = vunpack.c.h.b16 %v4222
  %v4590 = vunpack.c.l.b16 %v4223
  %v4591 = vunpack.c.h.b16 %v4223
  %v4592 = vunpack.c.l.b16 %v4224
  %v4593 = vunpack.c.h.b16 %v4224
  %v4594 = vunpack.c.l.b16 %v4225
  %v4595 = vunpack.c.h.b16 %v4225
  %v4596 = vunpack.c.l.b16 %v4226
  %v4597 = vunpack.c.h.b16 %v4226
  %v4598 = vunpack.c.l.b16 %v4227
  %v4599 = vunpack.c.h.b16 %v4227
  %v4600 = vunpack.c.l.b16 %v4228
  %v4601 = vunpack.c.h.b16 %v4228
  %v4602 = vunpack.c.l.b16 %v4229
  %v4603 = vunpack.c.h.b16 %v4229
  %v4604 = vunpack.c.l.b16 %v4230
  %v4605 = vunpack.c.h.b16 %v4230
  %v4606 = vunpack.c.l.b16 %v4231
  %v4607 = vunpack.c.h.b16 %v4231
  %v4608 = vunpack.c.l.b16 %v4232
  %v4609 = vunpack.c.h.b16 %v4232
  %v4610 = vunpack.c.l.b16 %v4233
  %v4611 = vunpack.c.h.b16 %v4233
  %v4612 = vunpack.c.l.b16 %v4234
  %v4613 = vunpack.c.h.b16 %v4234
  %v4614 = vunpack.c.l.b16 %v4235
  %v4615 = vunpack.c.h.b16 %v4235
  %v4616 = vunpack.c.l.b16 %v4236
  %v4617 = vunpack.c.h.b16 %v4236
  %v4618 = vunpack.c.l.b16 %v4237
  %v4619 = vunpack.c.h.b16 %v4237
  %v4620 = vunpack.c.l.b16 %v4238
  %v4621 = vunpack.c.h.b16 %v4238
  %v4622 = vunpack.c.l.b16 %v4239
  %v4623 = vunpack.c.h.b16 %v4239
  %v4624 = vunpack.c.l.b16 %v4240
  %v4625 = vunpack.c.h.b16 %v4240
  %v4626 = vunpack.c.l.b16 %v4241
  %v4627 = vunpack.c.h.b16 %v4241
  %v4628 = vunpack.c.l.b16 %v4242
  %v4629 = vunpack.c.h.b16 %v4242
  %v4630 = vunpack.c.l.b16 %v4243
  %v4631 = vunpack.c.h.b16 %v4243
  %v4632 = vunpack.c.l.b16 %v4244
  %v4633 = vunpack.c.h.b16 %v4244
  %v4634 = vunpack.c.l.b16 %v4245
  %v4635 = vunpack.c.h.b16 %v4245
  %v4636 = vunpack.c.l.b16 %v4246
  %v4637 = vunpack.c.h.b16 %v4246
  %v4638 = vunpack.c.l.b16 %v4247
  %v4639 = vunpack.c.h.b16 %v4247
  %v4640 = vunpack.c.l.b16 %v4248
  %v4641 = vunpack.c.h.b16 %v4248
  %v4642 = vunpack.c.l.b16 %v4249
  %v4643 = vunpack.c.h.b16 %v4249
  %v4644 = vpack.c.b16 %v4392, %v4388
  %v4645 = vpack.c.b16 %v4393, %v4389
  %v4646 = vpack.c.b16 %v4394, %v4390
  %v4647 = vpack.c.b16 %v4395, %v4391
  %v4648 = vpack.c.b16 %v4400, %v4396
  %v4649 = vpack.c.b16 %v4401, %v4397
  %v4650 = vpack.c.b16 %v4402, %v4398
  %v4651 = vpack.c.b16 %v4403, %v4399
  %v4652 = vpack.c.b16 %v4408, %v4404
  %v4653 = vpack.c.b16 %v4409, %v4405
  %v4654 = vpack.c.b16 %v4410, %v4406
  %v4655 = vpack.c.b16 %v4411, %v4407
  %v4656 = vpack.c.b16 %v4416, %v4412
  %v4657 = vpack.c.b16 %v4417, %v4413
  %v4658 = vpack.c.b16 %v4418, %v4414
  %v4659 = vpack.c.b16 %v4419, %v4415
  %v4660 = vpack.c.b16 %v4424, %v4420
  %v4661 = vpack.c.b16 %v4425, %v4421
  %v4662 = vpack.c.b16 %v4426, %v4422
  %v4663 = vpack.c.b16 %v4427, %v4423
  %v4664 = vpack.c.b16 %v4432, %v4428
  %v4665 = vpack.c.b16 %v4433, %v4429
  %v4666 = vpack.c.b16 %v4434, %v4430
  %v4667 = vpack.c.b16 %v4435, %v4431
  %v4668 = vpack.c.b16 %v4440, %v4436
  %v4669 = vpack.c.b16 %v4441, %v4437
  %v4670 = vpack.c.b16 %v4442, %v4438
  %v4671 = vpack.c.b16 %v4443, %v4439
  %v4672 = vpack.c.b16 %v4448, %v4444
  %v4673 = vpack.c.b16 %v4449, %v4445
  %v4674 = vpack.c.b16 %v4450, %v4446
  %v4675 = vpack.c.b16 %v4451, %v4447
  %v4676 = vpack.c.b16 %v4456, %v4452
  %v4677 = vpack.c.b16 %v4457, %v4453
  %v4678 = vpack.c.b16 %v4458, %v4454
  %v4679 = vpack.c.b16 %v4459, %v4455
  %v4680 = vpack.c.b16 %v4464, %v4460
  %v4681 = vpack.c.b16 %v4465, %v4461
  %v4682 = vpack.c.b16 %v4466, %v4462
  %v4683 = vpack.c.b16 %v4467, %v4463
  %v4684 = vpack.c.b16 %v4472, %v4468
  %v4685 = vpack.c.b16 %v4473, %v4469
  %v4686 = vpack.c.b16 %v4474, %v4470
  %v4687 = vpack.c.b16 %v4475, %v4471
  %v4688 = vpack.c.b16 %v4480, %v4476
  %v4689 = vpack.c.b16 %v4481, %v4477
  %v4690 = vpack.c.b16 %v4482, %v4478
  %v4691 = vpack.c.b16 %v4483, %v4479
  %v4692 = vpack.c.b16 %v4488, %v4484
  %v4693 = vpack.c.b16 %v4489, %v4485
  %v4694 = vpack.c.b16 %v4490, %v4486
  %v4695 = vpack.c.b16 %v4491, %v4487
  %v4696 = vpack.c.b16 %v4496, %v4492
  %v4697 = vpack.c.b16 %v4497, %v4493
  %v4698 = vpack.c.b16 %v4498, %v4494
  %v4699 = vpack.c.b16 %v4499, %v4495
  %v4700 = vpack.c.b16 %v4504, %v4500
  %v4701 = vpack.c.b16 %v4505, %v4501
  %v4702 = vpack.c.b16 %v4506, %v4502
  %v4703 = vpack.c.b16 %v4507, %v4503
  %v4704 = vpack.c.b16 %v4512, %v4508
  %v4705 = vpack.c.b16 %v4513, %v4509
  %v4706 = vpack.c.b16 %v4514, %v4510
  %v4707 = vpack.c.b16 %v4515, %v4511
  %v4708 = vpack.c.b16 %v4520, %v4516
  %v4709 = vpack.c.b16 %v4521, %v4517
  %v4710 = vpack.c.b16 %v4522, %v4518
  %v4711 = vpack.c.b16 %v4523, %v4519
  %v4712 = vpack.c.b16 %v4528, %v4524
  %v4713 = vpack.c.b16 %v4529, %v4525
  %v4714 = vpack.c.b16 %v4530, %v4526
  %v4715 = vpack.c.b16 %v4531, %v4527
  %v4716 = vpack.c.b16 %v4536, %v4532
  %v4717 = vpack.c.b16 %v4537, %v4533
  %v4718 = vpack.c.b16 %v4538, %v4534
  %v4719 = vpack.c.b16 %v4539, %v4535
  %v4720 = vpack.c.b16 %v4544, %v4540
  %v4721 = vpack.c.b16 %v4545, %v4541
  %v4722 = vpack.c.b16 %v4546, %v4542
  %v4723 = vpack.c.b16 %v4547, %v4543
  %v4724 = vpack.c.b16 %v4552, %v4548
  %v4725 = vpack.c.b16 %v4553, %v4549
  %v4726 = vpack.c.b16 %v4554, %v4550
  %v4727 = vpack.c.b16 %v4555, %v4551
  %v4728 = vpack.c.b16 %v4560, %v4556
  %v4729 = vpack.c.b16 %v4561, %v4557
  %v4730 = vpack.c.b16 %v4562, %v4558
  %v4731 = vpack.c.b16 %v4563, %v4559
  %v4732 = vpack.c.b16 %v4568, %v4564
  %v4733 = vpack.c.b16 %v4569, %v4565
  %v4734 = vpack.c.b16 %v4570, %v4566
  %v4735 = vpack.c.b16 %v4571, %v4567
  %v4736 = vpack.c.b16 %v4576, %v4572
  %v4737 = vpack.c.b16 %v4577, %v4573
  %v4738 = vpack.c.b16 %v4578, %v4574
  %v4739 = vpack.c.b16 %v4579, %v4575
  %v4740 = vpack.c.b16 %v4584, %v4580
  %v4741 = vpack.c.b16 %v4585, %v4581
  %v4742 = vpack.c.b16 %v4586, %v4582
  %v4743 = vpack.c.b16 %v4587, %v4583
  %v4744 = vpack.c.b16 %v4592, %v4588
  %v4745 = vpack.c.b16 %v4593, %v4589
  %v4746 = vpack.c.b16 %v4594, %v4590
  %v4747 = vpack.c.b16 %v4595, %v4591
  %v4748 = vpack.c.b16 %v4600, %v4596
  %v4749 = vpack.c.b16 %v4601, %v4597
  %v4750 = vpack.c.b16 %v4602, %v4598
  %v4751 = vpack.c.b16 %v4603, %v4599
  %v4752 = vpack.c.b16 %v4608, %v4604
  %v4753 = vpack.c.b16 %v4609, %v4605
  %v4754 = vpack.c.b16 %v4610, %v4606
  %v4755 = vpack.c.b16 %v4611, %v4607
  %v4756 = vpack.c.b16 %v4616, %v4612
  %v4757 = vpack.c.b16 %v4617, %v4613
  %v4758 = vpack.c.b16 %v4618, %v4614
  %v4759 = vpack.c.b16 %v4619, %v4615
  %v4760 = vpack.c.b16 %v4624, %v4620
  %v4761 = vpack.c.b16 %v4625, %v4621
  %v4762 = vpack.c.b16 %v4626, %v4622
  %v4763 = vpack.c.b16 %v4627, %v4623
  %v4764 = vpack.c.b16 %v4632, %v4628
  %v4765 = vpack.c.b16 %v4633, %v4629
  %v4766 = vpack.c.b16 %v4634, %v4630
  %v4767 = vpack.c.b16 %v4635, %v4631
  %v4768 = vpack.c.b16 %v4640, %v4636
  %v4769 = vpack.c.b16 %v4641, %v4637
  %v4770 = vpack.c.b16 %v4642, %v4638
  %v4771 = vpack.c.b16 %v4643, %v4639
  %4900 = vmatpush.bf16.msra.mxu0 %v4672
  %4901 = vmatpush.bf16.msra.mxu0 %v4668
  %4902 = vmatpush.bf16.msra.mxu0 %v4664
  %4903 = vmatpush.bf16.msra.mxu0 %v4660
  %4904 = vmatpush.bf16.msra.mxu0 %v4656
  %4905 = vmatpush.bf16.msra.mxu0 %v4652
  %4906 = vmatpush.bf16.msra.mxu0 %v4648
  %4907 = vmatpush.bf16.msra.mxu0 %v4644
  %4908 = vmatmul.bf16.gmra.mxu0 %v4118
  %v4909 = vpop.f32.mrf.mxu0
  %v4910 = vadd.f32 %v4252, %v4909
  %v4911 = vpop.f32.mrf.mxu0
  %v4912 = vadd.f32 %v4252, %v4911
  %4913 = vdwg.mxu0
  %4914 = vmatpush.bf16.msra.mxu0 %v4704
  %4915 = vmatpush.bf16.msra.mxu0 %v4700
  %4916 = vmatpush.bf16.msra.mxu0 %v4696
  %4917 = vmatpush.bf16.msra.mxu0 %v4692
  %4918 = vmatpush.bf16.msra.mxu0 %v4688
  %4919 = vmatpush.bf16.msra.mxu0 %v4684
  %4920 = vmatpush.bf16.msra.mxu0 %v4680
  %4921 = vmatpush.bf16.msra.mxu0 %v4676
  %4922 = vmatmul.bf16.gmra.mxu0 %v4119
  %v4923 = vpop.f32.mrf.mxu0
  %v4924 = vadd.f32 %v4910, %v4923
  %v4925 = vpop.f32.mrf.mxu0
  %v4926 = vadd.f32 %v4912, %v4925
  %4927 = vdwg.mxu0
  %4928 = vmatpush.bf16.msra.mxu0 %v4736
  %4929 = vmatpush.bf16.msra.mxu0 %v4732
  %4930 = vmatpush.bf16.msra.mxu0 %v4728
  %4931 = vmatpush.bf16.msra.mxu0 %v4724
  %4932 = vmatpush.bf16.msra.mxu0 %v4720
  %4933 = vmatpush.bf16.msra.mxu0 %v4716
  %4934 = vmatpush.bf16.msra.mxu0 %v4712
  %4935 = vmatpush.bf16.msra.mxu0 %v4708
  %4936 = vmatmul.bf16.gmra.mxu0 %v4120
  %v4937 = vpop.f32.mrf.mxu0
  %v4938 = vadd.f32 %v4924, %v4937
  %v4939 = vpop.f32.mrf.mxu0
  %v4940 = vadd.f32 %v4926, %v4939
  %4941 = vdwg.mxu0
  %4942 = vmatpush.bf16.msra.mxu0 %v4768
  %4943 = vmatpush.bf16.msra.mxu0 %v4764
  %4944 = vmatpush.bf16.msra.mxu0 %v4760
  %4945 = vmatpush.bf16.msra.mxu0 %v4756
  %4946 = vmatpush.bf16.msra.mxu0 %v4752
  %4947 = vmatpush.bf16.msra.mxu0 %v4748
  %4948 = vmatpush.bf16.msra.mxu0 %v4744
  %4949 = vmatpush.bf16.msra.mxu0 %v4740
  %4950 = vmatmul.bf16.gmra.mxu0 %v4121
  %v4951 = vpop.f32.mrf.mxu0
  %v4952 = vadd.f32 %v4938, %v4951
  %v4953 = vpop.f32.mrf.mxu0
  %v4954 = vadd.f32 %v4940, %v4953
  %4955 = vdwg.mxu0
  %4956 = vmatpush.bf16.msra.mxu0 %v4673
  %4957 = vmatpush.bf16.msra.mxu0 %v4669
  %4958 = vmatpush.bf16.msra.mxu0 %v4665
  %4959 = vmatpush.bf16.msra.mxu0 %v4661
  %4960 = vmatpush.bf16.msra.mxu0 %v4657
  %4961 = vmatpush.bf16.msra.mxu0 %v4653
  %4962 = vmatpush.bf16.msra.mxu0 %v4649
  %4963 = vmatpush.bf16.msra.mxu0 %v4645
  %4964 = vmatmul.bf16.gmra.mxu0 %v4118
  %v4965 = vpop.f32.mrf.mxu0
  %v4966 = vadd.f32 %v4253, %v4965
  %v4967 = vpop.f32.mrf.mxu0
  %v4968 = vadd.f32 %v4253, %v4967
  %4969 = vdwg.mxu0
  %4970 = vmatpush.bf16.msra.mxu0 %v4705
  %4971 = vmatpush.bf16.msra.mxu0 %v4701
  %4972 = vmatpush.bf16.msra.mxu0 %v4697
  %4973 = vmatpush.bf16.msra.mxu0 %v4693
  %4974 = vmatpush.bf16.msra.mxu0 %v4689
  %4975 = vmatpush.bf16.msra.mxu0 %v4685
  %4976 = vmatpush.bf16.msra.mxu0 %v4681
  %4977 = vmatpush.bf16.msra.mxu0 %v4677
  %4978 = vmatmul.bf16.gmra.mxu0 %v4119
  %v4979 = vpop.f32.mrf.mxu0
  %v4980 = vadd.f32 %v4966, %v4979
  %v4981 = vpop.f32.mrf.mxu0
  %v4982 = vadd.f32 %v4968, %v4981
  %4983 = vdwg.mxu0
  %4984 = vmatpush.bf16.msra.mxu0 %v4737
  %4985 = vmatpush.bf16.msra.mxu0 %v4733
  %4986 = vmatpush.bf16.msra.mxu0 %v4729
  %4987 = vmatpush.bf16.msra.mxu0 %v4725
  %4988 = vmatpush.bf16.msra.mxu0 %v4721
  %4989 = vmatpush.bf16.msra.mxu0 %v4717
  %4990 = vmatpush.bf16.msra.mxu0 %v4713
  %4991 = vmatpush.bf16.msra.mxu0 %v4709
  %4992 = vmatmul.bf16.gmra.mxu0 %v4120
  %v4993 = vpop.f32.mrf.mxu0
  %v4994 = vadd.f32 %v4980, %v4993
  %v4995 = vpop.f32.mrf.mxu0
  %v4996 = vadd.f32 %v4982, %v4995
  %4997 = vdwg.mxu0
  %4998 = vmatpush.bf16.msra.mxu0 %v4769
  %4999 = vmatpush.bf16.msra.mxu0 %v4765
  %5000 = vmatpush.bf16.msra.mxu0 %v4761
  %5001 = vmatpush.bf16.msra.mxu0 %v4757
  %5002 = vmatpush.bf16.msra.mxu0 %v4753
  %5003 = vmatpush.bf16.msra.mxu0 %v4749
  %5004 = vmatpush.bf16.msra.mxu0 %v4745
  %5005 = vmatpush.bf16.msra.mxu0 %v4741
  %5006 = vmatmul.bf16.gmra.mxu0 %v4121
  %v5007 = vpop.f32.mrf.mxu0
  %v5008 = vadd.f32 %v4994, %v5007
  %v5009 = vpop.f32.mrf.mxu0
  %v5010 = vadd.f32 %v4996, %v5009
  %5011 = vdwg.mxu0
  %5012 = vmatpush.bf16.msra.mxu0 %v4674
  %5013 = vmatpush.bf16.msra.mxu0 %v4670
  %5014 = vmatpush.bf16.msra.mxu0 %v4666
  %5015 = vmatpush.bf16.msra.mxu0 %v4662
  %5016 = vmatpush.bf16.msra.mxu0 %v4658
  %5017 = vmatpush.bf16.msra.mxu0 %v4654
  %5018 = vmatpush.bf16.msra.mxu0 %v4650
  %5019 = vmatpush.bf16.msra.mxu0 %v4646
  %5020 = vmatmul.bf16.gmra.mxu0 %v4118
  %v5021 = vpop.f32.mrf.mxu0
  %v5022 = vadd.f32 %v4254, %v5021
  %v5023 = vpop.f32.mrf.mxu0
  %v5024 = vadd.f32 %v4254, %v5023
  %5025 = vdwg.mxu0
  %5026 = vmatpush.bf16.msra.mxu0 %v4706
  %5027 = vmatpush.bf16.msra.mxu0 %v4702
  %5028 = vmatpush.bf16.msra.mxu0 %v4698
  %5029 = vmatpush.bf16.msra.mxu0 %v4694
  %5030 = vmatpush.bf16.msra.mxu0 %v4690
  %5031 = vmatpush.bf16.msra.mxu0 %v4686
  %5032 = vmatpush.bf16.msra.mxu0 %v4682
  %5033 = vmatpush.bf16.msra.mxu0 %v4678
  %5034 = vmatmul.bf16.gmra.mxu0 %v4119
  %v5035 = vpop.f32.mrf.mxu0
  %v5036 = vadd.f32 %v5022, %v5035
  %v5037 = vpop.f32.mrf.mxu0
  %v5038 = vadd.f32 %v5024, %v5037
  %5039 = vdwg.mxu0
  %5040 = vmatpush.bf16.msra.mxu0 %v4738
  %5041 = vmatpush.bf16.msra.mxu0 %v4734
  %5042 = vmatpush.bf16.msra.mxu0 %v4730
  %5043 = vmatpush.bf16.msra.mxu0 %v4726
  %5044 = vmatpush.bf16.msra.mxu0 %v4722
  %5045 = vmatpush.bf16.msra.mxu0 %v4718
  %5046 = vmatpush.bf16.msra.mxu0 %v4714
  %5047 = vmatpush.bf16.msra.mxu0 %v4710
  %5048 = vmatmul.bf16.gmra.mxu0 %v4120
  %v5049 = vpop.f32.mrf.mxu0
  %v5050 = vadd.f32 %v5036, %v5049
  %v5051 = vpop.f32.mrf.mxu0
  %v5052 = vadd.f32 %v5038, %v5051
  %5053 = vdwg.mxu0
  %5054 = vmatpush.bf16.msra.mxu0 %v4770
  %5055 = vmatpush.bf16.msra.mxu0 %v4766
  %5056 = vmatpush.bf16.msra.mxu0 %v4762
  %5057 = vmatpush.bf16.msra.mxu0 %v4758
  %5058 = vmatpush.bf16.msra.mxu0 %v4754
  %5059 = vmatpush.bf16.msra.mxu0 %v4750
  %5060 = vmatpush.bf16.msra.mxu0 %v4746
  %5061 = vmatpush.bf16.msra.mxu0 %v4742
  %5062 = vmatmul.bf16.gmra.mxu0 %v4121
  %v5063 = vpop.f32.mrf.mxu0
  %v5064 = vadd.f32 %v5050, %v5063
  %v5065 = vpop.f32.mrf.mxu0
  %v5066 = vadd.f32 %v5052, %v5065
  %5067 = vdwg.mxu0
  %5068 = vmatpush.bf16.msra.mxu0 %v4675
  %5069 = vmatpush.bf16.msra.mxu0 %v4671
  %5070 = vmatpush.bf16.msra.mxu0 %v4667
  %5071 = vmatpush.bf16.msra.mxu0 %v4663
  %5072 = vmatpush.bf16.msra.mxu0 %v4659
  %5073 = vmatpush.bf16.msra.mxu0 %v4655
  %5074 = vmatpush.bf16.msra.mxu0 %v4651
  %5075 = vmatpush.bf16.msra.mxu0 %v4647
  %5076 = vmatmul.bf16.gmra.mxu0 %v4118
  %v5077 = vpop.f32.mrf.mxu0
  %v5078 = vadd.f32 %v4255, %v5077
  %v5079 = vpop.f32.mrf.mxu0
  %v5080 = vadd.f32 %v4255, %v5079
  %5081 = vdwg.mxu0
  %5082 = vmatpush.bf16.msra.mxu0 %v4707
  %5083 = vmatpush.bf16.msra.mxu0 %v4703
  %5084 = vmatpush.bf16.msra.mxu0 %v4699
  %5085 = vmatpush.bf16.msra.mxu0 %v4695
  %5086 = vmatpush.bf16.msra.mxu0 %v4691
  %5087 = vmatpush.bf16.msra.mxu0 %v4687
  %5088 = vmatpush.bf16.msra.mxu0 %v4683
  %5089 = vmatpush.bf16.msra.mxu0 %v4679
  %5090 = vmatmul.bf16.gmra.mxu0 %v4119
  %v5091 = vpop.f32.mrf.mxu0
  %v5092 = vadd.f32 %v5078, %v5091
  %v5093 = vpop.f32.mrf.mxu0
  %v5094 = vadd.f32 %v5080, %v5093
  %5095 = vdwg.mxu0
  %5096 = vmatpush.bf16.msra.mxu0 %v4739
  %5097 = vmatpush.bf16.msra.mxu0 %v4735
  %5098 = vmatpush.bf16.msra.mxu0 %v4731
  %5099 = vmatpush.bf16.msra.mxu0 %v4727
  %5100 = vmatpush.bf16.msra.mxu0 %v4723
  %5101 = vmatpush.bf16.msra.mxu0 %v4719
  %5102 = vmatpush.bf16.msra.mxu0 %v4715
  %5103 = vmatpush.bf16.msra.mxu0 %v4711
  %5104 = vmatmul.bf16.gmra.mxu0 %v4120
  %v5105 = vpop.f32.mrf.mxu0
  %v5106 = vadd.f32 %v5092, %v5105
  %v5107 = vpop.f32.mrf.mxu0
  %v5108 = vadd.f32 %v5094, %v5107
  %5109 = vdwg.mxu0
  %5110 = vmatpush.bf16.msra.mxu0 %v4771
  %5111 = vmatpush.bf16.msra.mxu0 %v4767
  %5112 = vmatpush.bf16.msra.mxu0 %v4763
  %5113 = vmatpush.bf16.msra.mxu0 %v4759
  %5114 = vmatpush.bf16.msra.mxu0 %v4755
  %5115 = vmatpush.bf16.msra.mxu0 %v4751
  %5116 = vmatpush.bf16.msra.mxu0 %v4747
  %5117 = vmatpush.bf16.msra.mxu0 %v4743
  %5118 = vmatmul.bf16.gmra.mxu0 %v4121
  %v5119 = vpop.f32.mrf.mxu0
  %v5120 = vadd.f32 %v5106, %v5119
  %v5121 = vpop.f32.mrf.mxu0
  %v5122 = vadd.f32 %v5108, %v5121
  %5123 = vdwg.mxu0
  %v5124 = vmax.f32 %v4952, 0.0
  %v5125 = vmax.f32 %v5008, 0.0
  %v5126 = vmax.f32 %v5064, 0.0
  %v5127 = vmax.f32 %v5120, 0.0
  %v5128 = vmax.f32 %v4954, 0.0
  %v5129 = vmax.f32 %v5010, 0.0
  %v5130 = vmax.f32 %v5066, 0.0
  %v5131 = vmax.f32 %v5122, 0.0
  %v5132 = vpack.c.bf16 %v5128, %v5124
  %v5133 = vpack.c.bf16 %v5129, %v5125
  %v5134 = vpack.c.bf16 %v5130, %v5126
  %v5135 = vpack.c.bf16 %v5131, %v5127
  %v5136 = vld [vmem:[%s12] sm:$0xff]
  %v5137 = vld [vmem:[%s12 + $0x8] sm:$0xff]
  %v5138 = vld [vmem:[%s12 + $0x10] sm:$0xff]
  %v5139 = vld [vmem:[%s12 + $0x18] sm:$0xff]
  %v5140 = vld [vmem:[%s12 + $0x20] sm:$0xff]
  %v5141 = vld [vmem:[%s12 + $0x28] sm:$0xff]
  %v5142 = vld [vmem:[%s12 + $0x30] sm:$0xff]
  %v5143 = vld [vmem:[%s12 + $0x38] sm:$0xff]
  %v5144 = vld [vmem:[%s12 + $0x40] sm:$0xff]
  %v5145 = vld [vmem:[%s12 + $0x48] sm:$0xff]
  %v5146 = vld [vmem:[%s12 + $0x50] sm:$0xff]
  %v5147 = vld [vmem:[%s12 + $0x58] sm:$0xff]
  %v5148 = vld [vmem:[%s12 + $0x60] sm:$0xff]
  %v5149 = vld [vmem:[%s12 + $0x68] sm:$0xff]
  %v5150 = vld [vmem:[%s12 + $0x70] sm:$0xff]
  %v5151 = vld [vmem:[%s12 + $0x78] sm:$0xff]
  %v5152 = vld [vmem:[%s12 + $0x80] sm:$0xff]
  %v5153 = vld [vmem:[%s12 + $0x88] sm:$0xff]
  %v5154 = vld [vmem:[%s12 + $0x90] sm:$0xff]
  %v5155 = vld [vmem:[%s12 + $0x98] sm:$0xff]
  %v5156 = vld [vmem:[%s12 + $0xa0] sm:$0xff]
  %v5157 = vld [vmem:[%s12 + $0xa8] sm:$0xff]
  %v5158 = vld [vmem:[%s12 + $0xb0] sm:$0xff]
  %v5159 = vld [vmem:[%s12 + $0xb8] sm:$0xff]
  %v5160 = vld [vmem:[%s12 + $0xc0] sm:$0xff]
  %v5161 = vld [vmem:[%s12 + $0xc8] sm:$0xff]
  %v5162 = vld [vmem:[%s12 + $0xd0] sm:$0xff]
  %v5163 = vld [vmem:[%s12 + $0xd8] sm:$0xff]
  %v5164 = vld [vmem:[%s12 + $0xe0] sm:$0xff]
  %v5165 = vld [vmem:[%s12 + $0xe8] sm:$0xff]
  %v5166 = vld [vmem:[%s12 + $0xf0] sm:$0xff]
  %v5167 = vld [vmem:[%s12 + $0xf8] sm:$0xff]
  %v5168 = vld [vmem:[%s12 + $0x100] sm:$0xff]
  %v5169 = vld [vmem:[%s12 + $0x108] sm:$0xff]
  %v5170 = vld [vmem:[%s12 + $0x110] sm:$0xff]
  %v5171 = vld [vmem:[%s12 + $0x118] sm:$0xff]
  %v5172 = vld [vmem:[%s12 + $0x120] sm:$0xff]
  %v5173 = vld [vmem:[%s12 + $0x128] sm:$0xff]
  %v5174 = vld [vmem:[%s12 + $0x130] sm:$0xff]
  %v5175 = vld [vmem:[%s12 + $0x138] sm:$0xff]
  %v5176 = vld [vmem:[%s12 + $0x140] sm:$0xff]
  %v5177 = vld [vmem:[%s12 + $0x148] sm:$0xff]
  %v5178 = vld [vmem:[%s12 + $0x150] sm:$0xff]
  %v5179 = vld [vmem:[%s12 + $0x158] sm:$0xff]
  %v5180 = vld [vmem:[%s12 + $0x160] sm:$0xff]
  %v5181 = vld [vmem:[%s12 + $0x168] sm:$0xff]
  %v5182 = vld [vmem:[%s12 + $0x170] sm:$0xff]
  %v5183 = vld [vmem:[%s12 + $0x178] sm:$0xff]
  %v5184 = vld [vmem:[%s12 + $0x180] sm:$0xff]
  %v5185 = vld [vmem:[%s12 + $0x188] sm:$0xff]
  %v5186 = vld [vmem:[%s12 + $0x190] sm:$0xff]
  %v5187 = vld [vmem:[%s12 + $0x198] sm:$0xff]
  %v5188 = vld [vmem:[%s12 + $0x1a0] sm:$0xff]
  %v5189 = vld [vmem:[%s12 + $0x1a8] sm:$0xff]
  %v5190 = vld [vmem:[%s12 + $0x1b0] sm:$0xff]
  %v5191 = vld [vmem:[%s12 + $0x1b8] sm:$0xff]
  %v5192 = vld [vmem:[%s12 + $0x1c0] sm:$0xff]
  %v5193 = vld [vmem:[%s12 + $0x1c8] sm:$0xff]
  %v5194 = vld [vmem:[%s12 + $0x1d0] sm:$0xff]
  %v5195 = vld [vmem:[%s12 + $0x1d8] sm:$0xff]
  %v5196 = vld [vmem:[%s12 + $0x1e0] sm:$0xff]
  %v5197 = vld [vmem:[%s12 + $0x1e8] sm:$0xff]
  %v5198 = vld [vmem:[%s12 + $0x1f0] sm:$0xff]
  %v5199 = vld [vmem:[%s12 + $0x1f8] sm:$0xff]
  %v5200 = vld [vmem:[%s13] sm:$0x3]
  %v5202 = vperm.slane %v5200, 0
  %v5203 = vperm.slane %v5200, 1
  %v5270 = vunpack.c.l.b16 %v5136
  %v5271 = vunpack.c.h.b16 %v5136
  %v5272 = vunpack.c.l.b16 %v5137
  %v5273 = vunpack.c.h.b16 %v5137
  %v5274 = vunpack.c.l.b16 %v5138
  %v5275 = vunpack.c.h.b16 %v5138
  %v5276 = vunpack.c.l.b16 %v5139
  %v5277 = vunpack.c.h.b16 %v5139
  %v5278 = vunpack.c.l.b16 %v5140
  %v5279 = vunpack.c.h.b16 %v5140
  %v5280 = vunpack.c.l.b16 %v5141
  %v5281 = vunpack.c.h.b16 %v5141
  %v5282 = vunpack.c.l.b16 %v5142
  %v5283 = vunpack.c.h.b16 %v5142
  %v5284 = vunpack.c.l.b16 %v5143
  %v5285 = vunpack.c.h.b16 %v5143
  %v5286 = vunpack.c.l.b16 %v5144
  %v5287 = vunpack.c.h.b16 %v5144
  %v5288 = vunpack.c.l.b16 %v5145
  %v5289 = vunpack.c.h.b16 %v5145
  %v5290 = vunpack.c.l.b16 %v5146
  %v5291 = vunpack.c.h.b16 %v5146
  %v5292 = vunpack.c.l.b16 %v5147
  %v5293 = vunpack.c.h.b16 %v5147
  %v5294 = vunpack.c.l.b16 %v5148
  %v5295 = vunpack.c.h.b16 %v5148
  %v5296 = vunpack.c.l.b16 %v5149
  %v5297 = vunpack.c.h.b16 %v5149
  %v5298 = vunpack.c.l.b16 %v5150
  %v5299 = vunpack.c.h.b16 %v5150
  %v5300 = vunpack.c.l.b16 %v5151
  %v5301 = vunpack.c.h.b16 %v5151
  %v5302 = vunpack.c.l.b16 %v5152
  %v5303 = vunpack.c.h.b16 %v5152
  %v5304 = vunpack.c.l.b16 %v5153
  %v5305 = vunpack.c.h.b16 %v5153
  %v5306 = vunpack.c.l.b16 %v5154
  %v5307 = vunpack.c.h.b16 %v5154
  %v5308 = vunpack.c.l.b16 %v5155
  %v5309 = vunpack.c.h.b16 %v5155
  %v5310 = vunpack.c.l.b16 %v5156
  %v5311 = vunpack.c.h.b16 %v5156
  %v5312 = vunpack.c.l.b16 %v5157
  %v5313 = vunpack.c.h.b16 %v5157
  %v5314 = vunpack.c.l.b16 %v5158
  %v5315 = vunpack.c.h.b16 %v5158
  %v5316 = vunpack.c.l.b16 %v5159
  %v5317 = vunpack.c.h.b16 %v5159
  %v5318 = vunpack.c.l.b16 %v5160
  %v5319 = vunpack.c.h.b16 %v5160
  %v5320 = vunpack.c.l.b16 %v5161
  %v5321 = vunpack.c.h.b16 %v5161
  %v5322 = vunpack.c.l.b16 %v5162
  %v5323 = vunpack.c.h.b16 %v5162
  %v5324 = vunpack.c.l.b16 %v5163
  %v5325 = vunpack.c.h.b16 %v5163
  %v5326 = vunpack.c.l.b16 %v5164
  %v5327 = vunpack.c.h.b16 %v5164
  %v5328 = vunpack.c.l.b16 %v5165
  %v5329 = vunpack.c.h.b16 %v5165
  %v5330 = vunpack.c.l.b16 %v5166
  %v5331 = vunpack.c.h.b16 %v5166
  %v5332 = vunpack.c.l.b16 %v5167
  %v5333 = vunpack.c.h.b16 %v5167
  %v5334 = vunpack.c.l.b16 %v5168
  %v5335 = vunpack.c.h.b16 %v5168
  %v5336 = vunpack.c.l.b16 %v5169
  %v5337 = vunpack.c.h.b16 %v5169
  %v5338 = vunpack.c.l.b16 %v5170
  %v5339 = vunpack.c.h.b16 %v5170
  %v5340 = vunpack.c.l.b16 %v5171
  %v5341 = vunpack.c.h.b16 %v5171
  %v5342 = vunpack.c.l.b16 %v5172
  %v5343 = vunpack.c.h.b16 %v5172
  %v5344 = vunpack.c.l.b16 %v5173
  %v5345 = vunpack.c.h.b16 %v5173
  %v5346 = vunpack.c.l.b16 %v5174
  %v5347 = vunpack.c.h.b16 %v5174
  %v5348 = vunpack.c.l.b16 %v5175
  %v5349 = vunpack.c.h.b16 %v5175
  %v5350 = vunpack.c.l.b16 %v5176
  %v5351 = vunpack.c.h.b16 %v5176
  %v5352 = vunpack.c.l.b16 %v5177
  %v5353 = vunpack.c.h.b16 %v5177
  %v5354 = vunpack.c.l.b16 %v5178
  %v5355 = vunpack.c.h.b16 %v5178
  %v5356 = vunpack.c.l.b16 %v5179
  %v5357 = vunpack.c.h.b16 %v5179
  %v5358 = vunpack.c.l.b16 %v5180
  %v5359 = vunpack.c.h.b16 %v5180
  %v5360 = vunpack.c.l.b16 %v5181
  %v5361 = vunpack.c.h.b16 %v5181
  %v5362 = vunpack.c.l.b16 %v5182
  %v5363 = vunpack.c.h.b16 %v5182
  %v5364 = vunpack.c.l.b16 %v5183
  %v5365 = vunpack.c.h.b16 %v5183
  %v5366 = vunpack.c.l.b16 %v5184
  %v5367 = vunpack.c.h.b16 %v5184
  %v5368 = vunpack.c.l.b16 %v5185
  %v5369 = vunpack.c.h.b16 %v5185
  %v5370 = vunpack.c.l.b16 %v5186
  %v5371 = vunpack.c.h.b16 %v5186
  %v5372 = vunpack.c.l.b16 %v5187
  %v5373 = vunpack.c.h.b16 %v5187
  %v5374 = vunpack.c.l.b16 %v5188
  %v5375 = vunpack.c.h.b16 %v5188
  %v5376 = vunpack.c.l.b16 %v5189
  %v5377 = vunpack.c.h.b16 %v5189
  %v5378 = vunpack.c.l.b16 %v5190
  %v5379 = vunpack.c.h.b16 %v5190
  %v5380 = vunpack.c.l.b16 %v5191
  %v5381 = vunpack.c.h.b16 %v5191
  %v5382 = vunpack.c.l.b16 %v5192
  %v5383 = vunpack.c.h.b16 %v5192
  %v5384 = vunpack.c.l.b16 %v5193
  %v5385 = vunpack.c.h.b16 %v5193
  %v5386 = vunpack.c.l.b16 %v5194
  %v5387 = vunpack.c.h.b16 %v5194
  %v5388 = vunpack.c.l.b16 %v5195
  %v5389 = vunpack.c.h.b16 %v5195
  %v5390 = vunpack.c.l.b16 %v5196
  %v5391 = vunpack.c.h.b16 %v5196
  %v5392 = vunpack.c.l.b16 %v5197
  %v5393 = vunpack.c.h.b16 %v5197
  %v5394 = vunpack.c.l.b16 %v5198
  %v5395 = vunpack.c.h.b16 %v5198
  %v5396 = vunpack.c.l.b16 %v5199
  %v5397 = vunpack.c.h.b16 %v5199
  %v5398 = vpack.c.b16 %v5272, %v5270
  %v5399 = vpack.c.b16 %v5273, %v5271
  %v5400 = vpack.c.b16 %v5276, %v5274
  %v5401 = vpack.c.b16 %v5277, %v5275
  %v5402 = vpack.c.b16 %v5280, %v5278
  %v5403 = vpack.c.b16 %v5281, %v5279
  %v5404 = vpack.c.b16 %v5284, %v5282
  %v5405 = vpack.c.b16 %v5285, %v5283
  %v5406 = vpack.c.b16 %v5288, %v5286
  %v5407 = vpack.c.b16 %v5289, %v5287
  %v5408 = vpack.c.b16 %v5292, %v5290
  %v5409 = vpack.c.b16 %v5293, %v5291
  %v5410 = vpack.c.b16 %v5296, %v5294
  %v5411 = vpack.c.b16 %v5297, %v5295
  %v5412 = vpack.c.b16 %v5300, %v5298
  %v5413 = vpack.c.b16 %v5301, %v5299
  %v5414 = vpack.c.b16 %v5304, %v5302
  %v5415 = vpack.c.b16 %v5305, %v5303
  %v5416 = vpack.c.b16 %v5308, %v5306
  %v5417 = vpack.c.b16 %v5309, %v5307
  %v5418 = vpack.c.b16 %v5312, %v5310
  %v5419 = vpack.c.b16 %v5313, %v5311
  %v5420 = vpack.c.b16 %v5316, %v5314
  %v5421 = vpack.c.b16 %v5317, %v5315
  %v5422 = vpack.c.b16 %v5320, %v5318
  %v5423 = vpack.c.b16 %v5321, %v5319
  %v5424 = vpack.c.b16 %v5324, %v5322
  %v5425 = vpack.c.b16 %v5325, %v5323
  %v5426 = vpack.c.b16 %v5328, %v5326
  %v5427 = vpack.c.b16 %v5329, %v5327
  %v5428 = vpack.c.b16 %v5332, %v5330
  %v5429 = vpack.c.b16 %v5333, %v5331
  %v5430 = vpack.c.b16 %v5336, %v5334
  %v5431 = vpack.c.b16 %v5337, %v5335
  %v5432 = vpack.c.b16 %v5340, %v5338
  %v5433 = vpack.c.b16 %v5341, %v5339
  %v5434 = vpack.c.b16 %v5344, %v5342
  %v5435 = vpack.c.b16 %v5345, %v5343
  %v5436 = vpack.c.b16 %v5348, %v5346
  %v5437 = vpack.c.b16 %v5349, %v5347
  %v5438 = vpack.c.b16 %v5352, %v5350
  %v5439 = vpack.c.b16 %v5353, %v5351
  %v5440 = vpack.c.b16 %v5356, %v5354
  %v5441 = vpack.c.b16 %v5357, %v5355
  %v5442 = vpack.c.b16 %v5360, %v5358
  %v5443 = vpack.c.b16 %v5361, %v5359
  %v5444 = vpack.c.b16 %v5364, %v5362
  %v5445 = vpack.c.b16 %v5365, %v5363
  %v5446 = vpack.c.b16 %v5368, %v5366
  %v5447 = vpack.c.b16 %v5369, %v5367
  %v5448 = vpack.c.b16 %v5372, %v5370
  %v5449 = vpack.c.b16 %v5373, %v5371
  %v5450 = vpack.c.b16 %v5376, %v5374
  %v5451 = vpack.c.b16 %v5377, %v5375
  %v5452 = vpack.c.b16 %v5380, %v5378
  %v5453 = vpack.c.b16 %v5381, %v5379
  %v5454 = vpack.c.b16 %v5384, %v5382
  %v5455 = vpack.c.b16 %v5385, %v5383
  %v5456 = vpack.c.b16 %v5388, %v5386
  %v5457 = vpack.c.b16 %v5389, %v5387
  %v5458 = vpack.c.b16 %v5392, %v5390
  %v5459 = vpack.c.b16 %v5393, %v5391
  %v5460 = vpack.c.b16 %v5396, %v5394
  %v5461 = vpack.c.b16 %v5397, %v5395
  %5526 = vmatpush.bf16.msra.mxu0 %v5412
  %5527 = vmatpush.bf16.msra.mxu0 %v5410
  %5528 = vmatpush.bf16.msra.mxu0 %v5408
  %5529 = vmatpush.bf16.msra.mxu0 %v5406
  %5530 = vmatpush.bf16.msra.mxu0 %v5404
  %5531 = vmatpush.bf16.msra.mxu0 %v5402
  %5532 = vmatpush.bf16.msra.mxu0 %v5400
  %5533 = vmatpush.bf16.msra.mxu0 %v5398
  %5534 = vmatmul.bf16.gmra.mxu0 %v5132
  %v5535 = vpop.f32.mrf.mxu0
  %v5536 = vadd.f32 %v5202, %v5535
  %v5537 = vpop.f32.mrf.mxu0
  %v5538 = vadd.f32 %v5202, %v5537
  %5539 = vdwg.mxu0
  %5540 = vmatpush.bf16.msra.mxu0 %v5428
  %5541 = vmatpush.bf16.msra.mxu0 %v5426
  %5542 = vmatpush.bf16.msra.mxu0 %v5424
  %5543 = vmatpush.bf16.msra.mxu0 %v5422
  %5544 = vmatpush.bf16.msra.mxu0 %v5420
  %5545 = vmatpush.bf16.msra.mxu0 %v5418
  %5546 = vmatpush.bf16.msra.mxu0 %v5416
  %5547 = vmatpush.bf16.msra.mxu0 %v5414
  %5548 = vmatmul.bf16.gmra.mxu0 %v5133
  %v5549 = vpop.f32.mrf.mxu0
  %v5550 = vadd.f32 %v5536, %v5549
  %v5551 = vpop.f32.mrf.mxu0
  %v5552 = vadd.f32 %v5538, %v5551
  %5553 = vdwg.mxu0
  %5554 = vmatpush.bf16.msra.mxu0 %v5444
  %5555 = vmatpush.bf16.msra.mxu0 %v5442
  %5556 = vmatpush.bf16.msra.mxu0 %v5440
  %5557 = vmatpush.bf16.msra.mxu0 %v5438
  %5558 = vmatpush.bf16.msra.mxu0 %v5436
  %5559 = vmatpush.bf16.msra.mxu0 %v5434
  %5560 = vmatpush.bf16.msra.mxu0 %v5432
  %5561 = vmatpush.bf16.msra.mxu0 %v5430
  %5562 = vmatmul.bf16.gmra.mxu0 %v5134
  %v5563 = vpop.f32.mrf.mxu0
  %v5564 = vadd.f32 %v5550, %v5563
  %v5565 = vpop.f32.mrf.mxu0
  %v5566 = vadd.f32 %v5552, %v5565
  %5567 = vdwg.mxu0
  %5568 = vmatpush.bf16.msra.mxu0 %v5460
  %5569 = vmatpush.bf16.msra.mxu0 %v5458
  %5570 = vmatpush.bf16.msra.mxu0 %v5456
  %5571 = vmatpush.bf16.msra.mxu0 %v5454
  %5572 = vmatpush.bf16.msra.mxu0 %v5452
  %5573 = vmatpush.bf16.msra.mxu0 %v5450
  %5574 = vmatpush.bf16.msra.mxu0 %v5448
  %5575 = vmatpush.bf16.msra.mxu0 %v5446
  %5576 = vmatmul.bf16.gmra.mxu0 %v5135
  %v5577 = vpop.f32.mrf.mxu0
  %v5578 = vadd.f32 %v5564, %v5577
  %v5579 = vpop.f32.mrf.mxu0
  %v5580 = vadd.f32 %v5566, %v5579
  %5581 = vdwg.mxu0
  %5582 = vmatpush.bf16.msra.mxu0 %v5413
  %5583 = vmatpush.bf16.msra.mxu0 %v5411
  %5584 = vmatpush.bf16.msra.mxu0 %v5409
  %5585 = vmatpush.bf16.msra.mxu0 %v5407
  %5586 = vmatpush.bf16.msra.mxu0 %v5405
  %5587 = vmatpush.bf16.msra.mxu0 %v5403
  %5588 = vmatpush.bf16.msra.mxu0 %v5401
  %5589 = vmatpush.bf16.msra.mxu0 %v5399
  %5590 = vmatmul.bf16.gmra.mxu0 %v5132
  %v5591 = vpop.f32.mrf.mxu0
  %v5592 = vadd.f32 %v5203, %v5591
  %v5593 = vpop.f32.mrf.mxu0
  %v5594 = vadd.f32 %v5203, %v5593
  %5595 = vdwg.mxu0
  %5596 = vmatpush.bf16.msra.mxu0 %v5429
  %5597 = vmatpush.bf16.msra.mxu0 %v5427
  %5598 = vmatpush.bf16.msra.mxu0 %v5425
  %5599 = vmatpush.bf16.msra.mxu0 %v5423
  %5600 = vmatpush.bf16.msra.mxu0 %v5421
  %5601 = vmatpush.bf16.msra.mxu0 %v5419
  %5602 = vmatpush.bf16.msra.mxu0 %v5417
  %5603 = vmatpush.bf16.msra.mxu0 %v5415
  %5604 = vmatmul.bf16.gmra.mxu0 %v5133
  %v5605 = vpop.f32.mrf.mxu0
  %v5606 = vadd.f32 %v5592, %v5605
  %v5607 = vpop.f32.mrf.mxu0
  %v5608 = vadd.f32 %v5594, %v5607
  %5609 = vdwg.mxu0
  %5610 = vmatpush.bf16.msra.mxu0 %v5445
  %5611 = vmatpush.bf16.msra.mxu0 %v5443
  %5612 = vmatpush.bf16.msra.mxu0 %v5441
  %5613 = vmatpush.bf16.msra.mxu0 %v5439
  %5614 = vmatpush.bf16.msra.mxu0 %v5437
  %5615 = vmatpush.bf16.msra.mxu0 %v5435
  %5616 = vmatpush.bf16.msra.mxu0 %v5433
  %5617 = vmatpush.bf16.msra.mxu0 %v5431
  %5618 = vmatmul.bf16.gmra.mxu0 %v5134
  %v5619 = vpop.f32.mrf.mxu0
  %v5620 = vadd.f32 %v5606, %v5619
  %v5621 = vpop.f32.mrf.mxu0
  %v5622 = vadd.f32 %v5608, %v5621
  %5623 = vdwg.mxu0
  %5624 = vmatpush.bf16.msra.mxu0 %v5461
  %5625 = vmatpush.bf16.msra.mxu0 %v5459
  %5626 = vmatpush.bf16.msra.mxu0 %v5457
  %5627 = vmatpush.bf16.msra.mxu0 %v5455
  %5628 = vmatpush.bf16.msra.mxu0 %v5453
  %5629 = vmatpush.bf16.msra.mxu0 %v5451
  %5630 = vmatpush.bf16.msra.mxu0 %v5449
  %5631 = vmatpush.bf16.msra.mxu0 %v5447
  %5632 = vmatmul.bf16.gmra.mxu0 %v5135
  %v5633 = vpop.f32.mrf.mxu0
  %v5634 = vadd.f32 %v5620, %v5633
  %v5635 = vpop.f32.mrf.mxu0
  %v5636 = vadd.f32 %v5622, %v5635
  %5637 = vdwg.mxu0
  %v5638 = vxor.u32 %v5578, 2147483648
  %v5639 = vxor.u32 %v5634, 2147483648
  %v5640 = vxor.u32 %v5580, 2147483648
  %v5641 = vxor.u32 %v5636, 2147483648
  %v5642 = vmul.f32 %v5638, 1.442695
  %v5643 = vpow.pop %v5642
  %v5644 = vmul.f32 %v5639, 1.442695
  %v5645 = vpow.pop %v5644
  %v5646 = vmul.f32 %v5640, 1.442695
  %v5647 = vpow.pop %v5646
  %v5648 = vmul.f32 %v5641, 1.442695
  %v5649 = vpow.pop %v5648
  %v5650 = vadd.f32 %v5643, 1.0
  %v5651 = vadd.f32 %v5645, 1.0
  %v5652 = vadd.f32 %v5647, 1.0
  %v5653 = vadd.f32 %v5649, 1.0
  %v5654 = vrcp.pop %v5650
  %v5655 = vmul.f32 %v5650, %v5654
  %v5656 = vsub.f32 1.0, %v5655
  %v5657 = vmul.f32 %v5654, %v5656
  %v5658 = vadd.f32 %v5654, %v5657
  %vm5659 = vweird.f32 %v5650
  %vm5660 = vweird.f32 %v5654
  %vm5661 = vmor %vm5659, %vm5660
  %v5662 = vsel %vm5661, %v5654, %v5658
  %v5663 = vand.u32 2147483647, %v5650
  %vm5664 = vcmp.eq.f32.partialorder %v5663, 8.507059e+37
  %v5665 = vand.u32 %v5650, 2147483648
  %v5666 = vor.u32 1.1754944e-38, %v5665
  %v5667 = vsel %vm5664, %v5666, %v5662
  %v5668 = vmul.f32 1.0, %v5667
  %v5669 = vrcp.pop %v5651
  %v5670 = vmul.f32 %v5651, %v5669
  %v5671 = vsub.f32 1.0, %v5670
  %v5672 = vmul.f32 %v5669, %v5671
  %v5673 = vadd.f32 %v5669, %v5672
  %vm5674 = vweird.f32 %v5651
  %vm5675 = vweird.f32 %v5669
  %vm5676 = vmor %vm5674, %vm5675
  %v5677 = vsel %vm5676, %v5669, %v5673
  %v5678 = vand.u32 2147483647, %v5651
  %vm5679 = vcmp.eq.f32.partialorder %v5678, 8.507059e+37
  %v5680 = vand.u32 %v5651, 2147483648
  %v5681 = vor.u32 1.1754944e-38, %v5680
  %v5682 = vsel %vm5679, %v5681, %v5677
  %v5683 = vmul.f32 1.0, %v5682
  %v5684 = vrcp.pop %v5652
  %v5685 = vmul.f32 %v5652, %v5684
  %v5686 = vsub.f32 1.0, %v5685
  %v5687 = vmul.f32 %v5684, %v5686
  %v5688 = vadd.f32 %v5684, %v5687
  %vm5689 = vweird.f32 %v5652
  %vm5690 = vweird.f32 %v5684
  %vm5691 = vmor %vm5689, %vm5690
  %v5692 = vsel %vm5691, %v5684, %v5688
  %v5693 = vand.u32 2147483647, %v5652
  %vm5694 = vcmp.eq.f32.partialorder %v5693, 8.507059e+37
  %v5695 = vand.u32 %v5652, 2147483648
  %v5696 = vor.u32 1.1754944e-38, %v5695
  %v5697 = vsel %vm5694, %v5696, %v5692
  %v5698 = vmul.f32 1.0, %v5697
  %v5699 = vrcp.pop %v5653
  %v5700 = vmul.f32 %v5653, %v5699
  %v5701 = vsub.f32 1.0, %v5700
  %v5702 = vmul.f32 %v5699, %v5701
  %v5703 = vadd.f32 %v5699, %v5702
  %vm5704 = vweird.f32 %v5653
  %vm5705 = vweird.f32 %v5699
  %vm5706 = vmor %vm5704, %vm5705
  %v5707 = vsel %vm5706, %v5699, %v5703
  %v5708 = vand.u32 2147483647, %v5653
  %vm5709 = vcmp.eq.f32.partialorder %v5708, 8.507059e+37
  %v5710 = vand.u32 %v5653, 2147483648
  %v5711 = vor.u32 1.1754944e-38, %v5710
  %v5712 = vsel %vm5709, %v5711, %v5707
  %v5713 = vmul.f32 1.0, %v5712
  %5714 = vst [vmem:[%s14] sm:$0xff] %v5668
  %5715 = vst [vmem:[%s14 + $0x8] sm:$0xff] %v5683
  %5716 = vst [vmem:[%s14 + $0x10] sm:$0xff] %v5698
  %5717 = vst [vmem:[%s14 + $0x18] sm:$0xff] %v5713
  // Predicated region
  $region58: #{gnn_scent_classifier.1} parent=0 // pred_check
    _
  $region59: #{gnn_scent_classifier.1} parent=0 // pred_check_branch
    %5719 = sbr.rel (0) target = $region61
  $region60: #{gnn_scent_classifier.1} parent=0 // pred_region
    _
  $region61: #{gnn_scent_classifier.1} parent=0 // pred_fallthru
    _
  // Predicated region
  $region62: #{gnn_scent_classifier.1} parent=0 // pred_check
    _
  $region63: #{gnn_scent_classifier.1} parent=0 // pred_check_branch
    %5721 = sbr.rel (0) target = $region65
  $region64: #{gnn_scent_classifier.1} parent=0 // pred_region
    _
  $region65: #{gnn_scent_classifier.1} parent=0 // pred_fallthru
    _

</llo_original>
